<compile_context>
chip_gen: v7x
topology: tpu7x:2x2x1
jax: 0.10.0
libtpu: 0.0.40
codegen_flags: <defaults>
</compile_context>

<pallas_src>
import functools

import numpy as np
import jax
import jax.numpy as jnp
from jax import lax
from jax.experimental import pallas as pl
from jax.experimental.pallas import tpu as pltpu


def _silu(v):
    return v * jax.nn.sigmoid(v)


def _round_up(n, m):
    return (n + m - 1) // m * m


def _make_kernel(H, W, C, Cout, G, eps, Wpa, NPf, NA):
    """NPf = (H+2)*Wpa rows of the flattened zero-padded image; NA = H*Wpa output rows."""
    OFF = Wpa + 1                       # flat offset of interior pixel (0,0)
    cnt_in = float((C // G) * H * W)
    cnt_out = float((Cout // G) * H * W)
    f32 = jnp.float32
    bf16 = jnp.bfloat16

    def kernel(x_ref, eo_ref, mp_ref, ma_ref,
               g1_ref, bn1_ref, w1_ref, b1_ref,
               g2_ref, bn2_ref, w2_ref, b2_ref,
               agg_in_ref, bc_in_ref, agg_out_ref, bc_out_ref,
               out_ref, p1_ref, p2_ref):
        # ---------------- GroupNorm(C) + SiLU on the zero-padded input ----------------
        # halo / alignment rows of x are exactly zero, so whole-buffer sums == interior sums.
        # Row reductions routed through the MXU (ones-row matmul) to relieve VALU/XLU.
        x = x_ref[0].astype(f32)                                        # (NPf, C)
        ones_p = jnp.ones((1, NPf), f32)
        s1 = jnp.dot(ones_p, x, preferred_element_type=f32)             # (1, C)
        q1 = jnp.dot(ones_p, x * x, preferred_element_type=f32)         # (1, C)
        s_g = jnp.dot(s1, agg_in_ref[...], preferred_element_type=f32) / cnt_in    # (1, G)
        q_g = jnp.dot(q1, agg_in_ref[...], preferred_element_type=f32) / cnt_in
        rstd_g = lax.rsqrt(q_g - s_g * s_g + eps)
        mean_c = jnp.dot(s_g, bc_in_ref[...], preferred_element_type=f32)          # (1, C)
        rstd_c = jnp.dot(rstd_g, bc_in_ref[...], preferred_element_type=f32)
        scale1 = rstd_c * g1_ref[...]
        shift1 = bn1_ref[...] - mean_c * scale1
        # mask restores the true zero halo after the affine; single bf16 pass.
        act1 = (mp_ref[...] * _silu(x * scale1 + shift1)).astype(bf16)  # (NPf, C)

        # -------- conv1 operand: im2col over dx -> p1[p, dx*C:(dx+1)*C] = act1[p + dx] --------
        # zero the last 8 rows first so the shifted column blocks have a clean tail.
        p1_ref[pl.ds(NPf - 8, 8), :] = jnp.zeros((8, 3 * C), bf16)
        p1_ref[pl.ds(0, NPf), pl.ds(0, C)] = act1
        p1_ref[pl.ds(0, NPf - 1), pl.ds(C, C)] = act1[1:]
        p1_ref[pl.ds(0, NPf - 2), pl.ds(2 * C, C)] = act1[2:]

        # -------- conv1: 3 bf16 MXU matmuls with K=3C; accumulator seeded by the first dot ----
        h = jnp.dot(p1_ref[pl.ds(0, NA), :], w1_ref[0], preferred_element_type=f32)
        h = h + jnp.dot(p1_ref[pl.ds(Wpa, NA), :], w1_ref[1], preferred_element_type=f32)
        h = h + jnp.dot(p1_ref[pl.ds(2 * Wpa, NA), :], w1_ref[2], preferred_element_type=f32)
        # bias + hoisted timestep-embedding bias; mask the wrap/alignment columns of each row.
        h = (h + b1_ref[...] + eo_ref[0]) * ma_ref[...]                 # (NA, Cout)

        # ---------------- GroupNorm(Cout) + SiLU (stats via MXU, single pass) ----------------
        ones_a = jnp.ones((1, NA), f32)
        s2 = jnp.dot(ones_a, h, preferred_element_type=f32)
        q2 = jnp.dot(ones_a, h * h, preferred_element_type=f32)
        s2g = jnp.dot(s2, agg_out_ref[...], preferred_element_type=f32) / cnt_out
        q2g = jnp.dot(q2, agg_out_ref[...], preferred_element_type=f32) / cnt_out
        rstd2g = lax.rsqrt(q2g - s2g * s2g + eps)
        mean2c = jnp.dot(s2g, bc_out_ref[...], preferred_element_type=f32)
        rstd2c = jnp.dot(rstd2g, bc_out_ref[...], preferred_element_type=f32)
        scale2 = rstd2c * g2_ref[...]
        shift2 = bn2_ref[...] - mean2c * scale2
        act2 = (ma_ref[...] * _silu(h * scale2 + shift2)).astype(bf16)  # (NA, Cout)

        # -------- conv2 operand: zero head/tail rows once, then 3 column-shifted offset stores.
        # The masked wrap columns of act2 provide the left/right halo automatically.
        p2_ref[pl.ds(0, OFF), :] = jnp.zeros((OFF, 3 * Cout), bf16)
        tail = (H + 1) * Wpa - 1
        p2_ref[pl.ds(tail, NPf - tail), :] = jnp.zeros((NPf - tail, 3 * Cout), bf16)
        p2_ref[pl.ds(OFF, NA), pl.ds(0, Cout)] = act2
        p2_ref[pl.ds(OFF - 1, NA), pl.ds(Cout, Cout)] = act2
        p2_ref[pl.ds(OFF - 2, NA), pl.ds(2 * Cout, Cout)] = act2

        # ---------------- conv2: 3 bf16 MXU matmuls ----------------
        a2 = jnp.dot(p2_ref[pl.ds(0, NA), :], w2_ref[0], preferred_element_type=f32)
        a2 = a2 + jnp.dot(p2_ref[pl.ds(Wpa, NA), :], w2_ref[1], preferred_element_type=f32)
        a2 = a2 + jnp.dot(p2_ref[pl.ds(2 * Wpa, NA), :], w2_ref[2], preferred_element_type=f32)

        # -------- residual add (Identity skip) + interior extraction (W-wide NHWC rows) -------
        x_rows = x_ref[0, pl.ds(OFF, NA), :].astype(f32)                # x at the same positions
        out_rows = (x_rows + a2 + b2_ref[...]).astype(out_ref.dtype)    # (NA, Cout)
        for y in range(H):      # aligned row copies (y*Wpa and y*W are multiples of 8 when W%8==0)
            out_ref[0, pl.ds(y * W, W), :] = out_rows[y * Wpa:y * Wpa + W, :]

    return kernel


@functools.partial(jax.jit, static_argnames=("G", "eps"))
def resblock_forward_nhwc(x_nhwc, emb, params, G=32, eps=1e-5):
    """Channels-last (NHWC) ResBlock forward.  Preferred entry point."""
    B, H, W, C = x_nhwc.shape
    Cout = params["b1"].shape[-1]
    assert Cout == C, "this kernel implements the Identity skip_connection path"
    assert C % G == 0 and Cout % G == 0

    Wpa = _round_up(W + 2, 8)           # aligned row stride (left halo 1, right halo + align)
    NPf = (H + 2) * Wpa                 # flattened zero-padded rows (multiple of 8)
    NA = H * Wpa                        # output row space

    # The single remaining wrapper-side layout pass: spatial zero-pad (+ alignment columns),
    # followed by a free contiguous-dim merge to flat (row, channel) form.
    x_p = jnp.pad(x_nhwc.astype(jnp.float32),
                  ((0, 0), (1, 1), (1, Wpa - W - 1), (0, 0)))            # (B, H+2, Wpa, C)
    x_pf = x_p.reshape(B, NPf, C)

    # hoisted timestep-embedding projection (tiny GEMM, once per call in XLA)
    eo = _silu(emb.astype(jnp.float32)) @ params["we"] + params["be"]    # (B, Cout)
    eo3 = eo.reshape(B, 1, Cout)

    # constant masks (interior of the padded image / valid columns of the output row space)
    mp = np.zeros((H + 2, Wpa, 1), np.float32)
    mp[1:H + 1, 1:W + 1, :] = 1.0
    mp = jnp.asarray(mp.reshape(NPf, 1))
    ma = np.zeros((H, Wpa, 1), np.float32)
    ma[:, :W, :] = 1.0
    ma = jnp.asarray(ma.reshape(NA, 1))

    # one-hot channel->group aggregation matrices (group count fully general)
    def group_mats(Cc):
        grp = np.arange(Cc) // (Cc // G)
        agg = (grp[:, None] == np.arange(G)[None, :]).astype(np.float32)
        return jnp.asarray(agg), jnp.asarray(agg.T)
    agg_in, bc_in = group_mats(C)
    agg_out, bc_out = group_mats(Cout)

    # conv weights: (9, Cin, Cout) tap-major -> (3, 3*Cin, Cout): dx folded into K; bf16 operands
    w1r = params["w1"].reshape(3, 3 * C, Cout).astype(jnp.bfloat16)
    w2r = params["w2"].reshape(3, 3 * Cout, Cout).astype(jnp.bfloat16)

    kernel = _make_kernel(H, W, C, Cout, G, eps, Wpa, NPf, NA)

    def const_spec(shape):
        n = len(shape)
        return pl.BlockSpec(shape, lambda b, n=n: (0,) * n)

    # explicit VMEM budget, generation-gated (v7x: 64 MiB/TC -> cap 48 MB; v5e/v6e: 128 MiB)
    est = 2 * (NPf * C * 4 + Cout * 4 + H * W * Cout * 4)                 # in/out blocks (x2 buf)
    est += 2 * (9 * C * Cout + 9 * Cout * Cout) * 2                       # conv weights (bf16)
    est += 2 * ((NPf + NA) * 4 + (2 * C + 6 * Cout) * 4 + 2 * (C * G + Cout * G) * 4)
    est += NPf * 3 * C * 2 + NPf * 3 * Cout * 2                           # im2col scratches
    est += 6 * NA * max(C, Cout) * 4                                      # f32 temporaries
    try:
        phys = getattr(pltpu.get_tpu_info(), "vmem_capacity_bytes", 128 << 20)
    except Exception:
        phys = 128 << 20
    cap = (48 << 20) if phys <= (64 << 20) else (100 << 20)
    vmem_limit = int(min(max(2 * est + (8 << 20), 24 << 20), cap))

    out_rows = pl.pallas_call(
        kernel,
        out_shape=jax.ShapeDtypeStruct((B, H * W, Cout), jnp.float32),
        grid_spec=pltpu.PrefetchScalarGridSpec(
            num_scalar_prefetch=0,
            grid=(B,),
            in_specs=[
                pl.BlockSpec((1, NPf, C), lambda b: (b, 0, 0)),          # zero-padded x (flat rows)
                pl.BlockSpec((1, 1, Cout), lambda b: (b, 0, 0)),         # per-image emb bias
                const_spec((NPf, 1)), const_spec((NA, 1)),               # halo / wrap-column masks
                const_spec((1, C)), const_spec((1, C)),                  # GN1 gamma / beta
                const_spec((3, 3 * C, Cout)), const_spec((1, Cout)),     # conv1 w (bf16, K=3C) / b
                const_spec((1, Cout)), const_spec((1, Cout)),            # GN2 gamma / beta
                const_spec((3, 3 * Cout, Cout)), const_spec((1, Cout)),  # conv2 w (bf16) / b
                const_spec((C, G)), const_spec((G, C)),                  # group agg / bcast (in)
                const_spec((Cout, G)), const_spec((G, Cout)),            # group agg / bcast (out)
            ],
            out_specs=pl.BlockSpec((1, H * W, Cout), lambda b: (b, 0, 0)),
            scratch_shapes=[
                pltpu.VMEM((NPf, 3 * C), jnp.bfloat16),                  # conv1 im2col operand
                pltpu.VMEM((NPf, 3 * Cout), jnp.bfloat16),               # conv2 im2col operand
            ],
        ),
        compiler_params=pltpu.CompilerParams(
            dimension_semantics=("parallel",),
            vmem_limit_bytes=vmem_limit,
        ),
    )(x_pf, eo3, mp, ma,
      params["g1"], params["bn1"], w1r, params["b1"],
      params["g2"], params["bn2"], w2r, params["b2"],
      agg_in, bc_in, agg_out, bc_out)

    return out_rows.reshape(B, H, W, Cout)


def resblock_forward(x_nchw, emb, params, G=32, eps=1e-5):
    """PyTorch-layout (NCHW) adapter around the channels-last kernel wrapper."""
    x = jnp.transpose(x_nchw, (0, 2, 3, 1))
    y = resblock_forward_nhwc(x, emb, params, G=G, eps=eps)
    return jnp.transpose(y, (0, 3, 1, 2))


# ----------------------------- pure-JAX reference -----------------------------
def ref_forward(x_nchw, emb, params, G=32, eps=1e-5):
    x = jnp.transpose(x_nchw, (0, 2, 3, 1)).astype(jnp.float32)

    def gn(h, gamma, beta):
        Bc, Hc, Wc, Cc = h.shape
        cg = Cc // G
        hr = h.reshape(Bc, Hc, Wc, G, cg)
        mean = hr.mean(axis=(1, 2, 4), keepdims=True)
        var = hr.var(axis=(1, 2, 4), keepdims=True)
        hn = (hr - mean) * lax.rsqrt(var + eps)
        return hn.reshape(Bc, Hc, Wc, Cc) * gamma.reshape(1, 1, 1, Cc) + beta.reshape(1, 1, 1, Cc)

    def conv3(h, w9, b):
        w = w9.reshape(3, 3, h.shape[-1], -1)
        y = lax.conv_general_dilated(h, w, (1, 1), ((1, 1), (1, 1)),
                                     dimension_numbers=("NHWC", "HWIO", "NHWC"))
        return y + b.reshape(1, 1, 1, -1)

    h = conv3(_silu(gn(x, params["g1"], params["bn1"])), params["w1"], params["b1"])
    eo = _silu(emb.astype(jnp.float32)) @ params["we"] + params["be"]
    h = h + eo[:, None, None, :]
    h = conv3(_silu(gn(h, params["g2"], params["bn2"])), params["w2"], params["b2"])
    return jnp.transpose(x + h, (0, 3, 1, 2))


if __name__ == "__main__":
    B, C, H, W, E, G = 2, 32, 8, 8, 16, 32   # normalization() uses 32 groups -> C multiple of 32
    Cout = C
    key = jax.random.PRNGKey(0)
    ks = jax.random.split(key, 12)
    params = {
        "g1": 1.0 + 0.1 * jax.random.normal(ks[0], (1, C), jnp.float32),
        "bn1": 0.1 * jax.random.normal(ks[1], (1, C), jnp.float32),
        "w1": 0.1 * jax.random.normal(ks[2], (9, C, Cout), jnp.float32),   # (3,3,Cin,Cout) tap-major
        "b1": 0.1 * jax.random.normal(ks[3], (1, Cout), jnp.float32),
        "we": 0.1 * jax.random.normal(ks[4], (E, Cout), jnp.float32),
        "be": 0.1 * jax.random.normal(ks[5], (1, Cout), jnp.float32),
        "g2": 1.0 + 0.1 * jax.random.normal(ks[6], (1, Cout), jnp.float32),
        "bn2": 0.1 * jax.random.normal(ks[7], (1, Cout), jnp.float32),
        # NOTE: the original module zero-inits this conv (zero_module); random here to exercise it.
        "w2": 0.1 * jax.random.normal(ks[8], (9, Cout, Cout), jnp.float32),
        "b2": 0.1 * jax.random.normal(ks[9], (1, Cout), jnp.float32),
    }
    x = jax.random.normal(ks[10], (B, C, H, W), jnp.float32)       # NCHW, as in PyTorch
    emb = jax.random.normal(ks[11], (B, E), jnp.float32)

    out = jax.block_until_ready(resblock_forward(x, emb, params, G=G))
    ref = ref_forward(x, emb, params, G=G)
    # bf16 MXU operands (f32 accumulation) -> compare against the f32 reference at bf16 tolerance
    np.testing.assert_allclose(np.asarray(out), np.asarray(ref), rtol=2e-2, atol=2e-2)
    print("KERNEL_OK")
</pallas_src>

<mosaic_0001>
module attributes {stable_mosaic.version = 11 : i64} {
  func.func @kernel(%arg0: i32, %arg1: memref<1x160x32xf32, #tpu.memory_space<vmem>>, %arg2: memref<1x1x32xf32, #tpu.memory_space<vmem>>, %arg3: memref<160x1xf32, #tpu.memory_space<vmem>>, %arg4: memref<128x1xf32, #tpu.memory_space<vmem>>, %arg5: memref<1x32xf32, #tpu.memory_space<vmem>>, %arg6: memref<1x32xf32, #tpu.memory_space<vmem>>, %arg7: memref<3x96x32xbf16, #tpu.memory_space<vmem>>, %arg8: memref<1x32xf32, #tpu.memory_space<vmem>>, %arg9: memref<1x32xf32, #tpu.memory_space<vmem>>, %arg10: memref<1x32xf32, #tpu.memory_space<vmem>>, %arg11: memref<3x96x32xbf16, #tpu.memory_space<vmem>>, %arg12: memref<1x32xf32, #tpu.memory_space<vmem>>, %arg13: memref<32x32xf32, #tpu.memory_space<vmem>>, %arg14: memref<32x32xf32, #tpu.memory_space<vmem>>, %arg15: memref<32x32xf32, #tpu.memory_space<vmem>>, %arg16: memref<32x32xf32, #tpu.memory_space<vmem>>, %arg17: memref<1x64x32xf32, #tpu.memory_space<vmem>>, %arg18: memref<160x96xbf16, #tpu.memory_space<vmem>>, %arg19: memref<160x96xbf16, #tpu.memory_space<vmem>>) attributes {dimension_semantics = [#tpu.dimension_semantics<parallel>], iteration_bounds = array<i64: 2>, scalar_prefetch = 0 : i64, scratch_operands = 2 : i64, tpu.core_type = #tpu.core_type<tc>, window_params = [{transform_indices = @transform_0, window_bounds = array<i64: 1, 160, 32>}, {transform_indices = @transform_1, window_bounds = array<i64: 1, 1, 32>}, {pipeline_mode = #tpu.pipeline_mode<synchronous>, transform_indices = @transform_2, window_bounds = array<i64: 160, 1>}, {pipeline_mode = #tpu.pipeline_mode<synchronous>, transform_indices = @transform_3, window_bounds = array<i64: 128, 1>}, {pipeline_mode = #tpu.pipeline_mode<synchronous>, transform_indices = @transform_4, window_bounds = array<i64: 1, 32>}, {pipeline_mode = #tpu.pipeline_mode<synchronous>, transform_indices = @transform_5, window_bounds = array<i64: 1, 32>}, {pipeline_mode = #tpu.pipeline_mode<synchronous>, transform_indices = @transform_6, window_bounds = array<i64: 3, 96, 32>}, {pipeline_mode = #tpu.pipeline_mode<synchronous>, transform_indices = @transform_7, window_bounds = array<i64: 1, 32>}, {pipeline_mode = #tpu.pipeline_mode<synchronous>, transform_indices = @transform_8, window_bounds = array<i64: 1, 32>}, {pipeline_mode = #tpu.pipeline_mode<synchronous>, transform_indices = @transform_9, window_bounds = array<i64: 1, 32>}, {pipeline_mode = #tpu.pipeline_mode<synchronous>, transform_indices = @transform_10, window_bounds = array<i64: 3, 96, 32>}, {pipeline_mode = #tpu.pipeline_mode<synchronous>, transform_indices = @transform_11, window_bounds = array<i64: 1, 32>}, {pipeline_mode = #tpu.pipeline_mode<synchronous>, transform_indices = @transform_12, window_bounds = array<i64: 32, 32>}, {pipeline_mode = #tpu.pipeline_mode<synchronous>, transform_indices = @transform_13, window_bounds = array<i64: 32, 32>}, {pipeline_mode = #tpu.pipeline_mode<synchronous>, transform_indices = @transform_14, window_bounds = array<i64: 32, 32>}, {pipeline_mode = #tpu.pipeline_mode<synchronous>, transform_indices = @transform_15, window_bounds = array<i64: 32, 32>}, {transform_indices = @transform_16, window_bounds = array<i64: 1, 64, 32>}]} {
    %c0 = arith.constant 0 : index
    %c0_0 = arith.constant 0 : index
    %c0_1 = arith.constant 0 : index
    %0 = vector.load %arg1[%c0, %c0_0, %c0_1] : memref<1x160x32xf32, #tpu.memory_space<vmem>>, vector<1x160x32xf32>
    %1 = vector.shape_cast %0 : vector<1x160x32xf32> to vector<160x32xf32>
    %cst = arith.constant 1.000000e+00 : f32
    %2 = vector.broadcast %cst : f32 to vector<1x160xf32>
    %cst_2 = arith.constant dense<0.000000e+00> : vector<1x32xf32>
    %3 = tpu.matmul %2, %1, %cst_2 {dimension_numbers = #tpu.dot_dimension_numbers<[1], [0], [0], [1], [0, 0, 1, 1], [], []>} : vector<1x160xf32>, vector<160x32xf32>, vector<1x32xf32> -> vector<1x32xf32>
    %4 = arith.mulf %1, %1 : vector<160x32xf32>
    %cst_3 = arith.constant dense<0.000000e+00> : vector<1x32xf32>
    %5 = tpu.matmul %2, %4, %cst_3 {dimension_numbers = #tpu.dot_dimension_numbers<[1], [0], [0], [1], [0, 0, 1, 1], [], []>} : vector<1x160xf32>, vector<160x32xf32>, vector<1x32xf32> -> vector<1x32xf32>
    %c0_4 = arith.constant 0 : index
    %c0_5 = arith.constant 0 : index
    %6 = vector.load %arg13[%c0_4, %c0_5] : memref<32x32xf32, #tpu.memory_space<vmem>>, vector<32x32xf32>
    %cst_6 = arith.constant dense<0.000000e+00> : vector<1x32xf32>
    %7 = tpu.matmul %3, %6, %cst_6 {dimension_numbers = #tpu.dot_dimension_numbers<[1], [0], [0], [1], [0, 0, 1, 1], [], []>} : vector<1x32xf32>, vector<32x32xf32>, vector<1x32xf32> -> vector<1x32xf32>
    %cst_7 = arith.constant 6.400000e+01 : f32
    %8 = vector.broadcast %cst_7 : f32 to vector<1x32xf32>
    %9 = arith.divf %7, %8 : vector<1x32xf32>
    %c0_8 = arith.constant 0 : index
    %c0_9 = arith.constant 0 : index
    %10 = vector.load %arg13[%c0_8, %c0_9] : memref<32x32xf32, #tpu.memory_space<vmem>>, vector<32x32xf32>
    %cst_10 = arith.constant dense<0.000000e+00> : vector<1x32xf32>
    %11 = tpu.matmul %5, %10, %cst_10 {dimension_numbers = #tpu.dot_dimension_numbers<[1], [0], [0], [1], [0, 0, 1, 1], [], []>} : vector<1x32xf32>, vector<32x32xf32>, vector<1x32xf32> -> vector<1x32xf32>
    %cst_11 = arith.constant 6.400000e+01 : f32
    %12 = vector.broadcast %cst_11 : f32 to vector<1x32xf32>
    %13 = arith.divf %11, %12 : vector<1x32xf32>
    %14 = arith.mulf %9, %9 : vector<1x32xf32>
    %15 = arith.subf %13, %14 : vector<1x32xf32>
    %cst_12 = arith.constant 9.99999974E-6 : f32
    %16 = vector.broadcast %cst_12 : f32 to vector<1x32xf32>
    %17 = arith.addf %15, %16 : vector<1x32xf32>
    %18 = math.rsqrt %17 : vector<1x32xf32>
    %c0_13 = arith.constant 0 : index
    %c0_14 = arith.constant 0 : index
    %19 = vector.load %arg14[%c0_13, %c0_14] : memref<32x32xf32, #tpu.memory_space<vmem>>, vector<32x32xf32>
    %cst_15 = arith.constant dense<0.000000e+00> : vector<1x32xf32>
    %20 = tpu.matmul %9, %19, %cst_15 {dimension_numbers = #tpu.dot_dimension_numbers<[1], [0], [0], [1], [0, 0, 1, 1], [], []>} : vector<1x32xf32>, vector<32x32xf32>, vector<1x32xf32> -> vector<1x32xf32>
    %c0_16 = arith.constant 0 : index
    %c0_17 = arith.constant 0 : index
    %21 = vector.load %arg14[%c0_16, %c0_17] : memref<32x32xf32, #tpu.memory_space<vmem>>, vector<32x32xf32>
    %cst_18 = arith.constant dense<0.000000e+00> : vector<1x32xf32>
    %22 = tpu.matmul %18, %21, %cst_18 {dimension_numbers = #tpu.dot_dimension_numbers<[1], [0], [0], [1], [0, 0, 1, 1], [], []>} : vector<1x32xf32>, vector<32x32xf32>, vector<1x32xf32> -> vector<1x32xf32>
    %c0_19 = arith.constant 0 : index
    %c0_20 = arith.constant 0 : index
    %23 = vector.load %arg5[%c0_19, %c0_20] : memref<1x32xf32, #tpu.memory_space<vmem>>, vector<1x32xf32>
    %24 = arith.mulf %22, %23 : vector<1x32xf32>
    %c0_21 = arith.constant 0 : index
    %c0_22 = arith.constant 0 : index
    %25 = vector.load %arg6[%c0_21, %c0_22] : memref<1x32xf32, #tpu.memory_space<vmem>>, vector<1x32xf32>
    %26 = arith.mulf %20, %24 : vector<1x32xf32>
    %27 = arith.subf %25, %26 : vector<1x32xf32>
    %c0_23 = arith.constant 0 : index
    %c0_24 = arith.constant 0 : index
    %28 = vector.load %arg3[%c0_23, %c0_24] : memref<160x1xf32, #tpu.memory_space<vmem>>, vector<160x1xf32>
    %29 = vector.broadcast %24 : vector<1x32xf32> to vector<160x32xf32>
    %30 = arith.mulf %1, %29 : vector<160x32xf32>
    %31 = vector.broadcast %27 : vector<1x32xf32> to vector<160x32xf32>
    %32 = arith.addf %30, %31 : vector<160x32xf32>
    %33 = arith.negf %32 : vector<160x32xf32>
    %34 = math.exp %33 : vector<160x32xf32>
    %cst_25 = arith.constant 1.000000e+00 : f32
    %35 = vector.broadcast %cst_25 : f32 to vector<160x32xf32>
    %36 = arith.addf %35, %34 : vector<160x32xf32>
    %37 = arith.divf %35, %36 : vector<160x32xf32>
    %38 = arith.mulf %32, %37 : vector<160x32xf32>
    %39 = vector.broadcast %28 : vector<160x1xf32> to vector<160x32xf32>
    %40 = arith.mulf %39, %38 : vector<160x32xf32>
    %41 = arith.truncf %40 : vector<160x32xf32> to vector<160x32xbf16>
    %cst_26 = arith.constant 0.000000e+00 : bf16
    %42 = vector.broadcast %cst_26 : bf16 to vector<8x96xbf16>
    %c152 = arith.constant 152 : index
    %c0_27 = arith.constant 0 : index
    %43 = vector.load %arg18[%c152, %c0_27] : memref<160x96xbf16, #tpu.memory_space<vmem>>, vector<8x96xbf16>
    tpu.vector_store %arg18[%c152, %c0_27], %42 {strides = array<i32>} : memref<160x96xbf16, #tpu.memory_space<vmem>>, vector<8x96xbf16>,
    %c0_28 = arith.constant 0 : index
    %c0_29 = arith.constant 0 : index
    %44 = vector.load %arg18[%c0_28, %c0_29] : memref<160x96xbf16, #tpu.memory_space<vmem>>, vector<160x32xbf16>
    tpu.vector_store %arg18[%c0_28, %c0_29], %41 {strides = array<i32>} : memref<160x96xbf16, #tpu.memory_space<vmem>>, vector<160x32xbf16>,
    %45 = vector.extract_strided_slice %41 {offsets = [1, 0], sizes = [159, 32], strides = [1, 1]} : vector<160x32xbf16> to vector<159x32xbf16>
    %c0_30 = arith.constant 0 : index
    %c32 = arith.constant 32 : index
    %46 = vector.load %arg18[%c0_30, %c32] : memref<160x96xbf16, #tpu.memory_space<vmem>>, vector<159x32xbf16>
    tpu.vector_store %arg18[%c0_30, %c32], %45 {strides = array<i32>} : memref<160x96xbf16, #tpu.memory_space<vmem>>, vector<159x32xbf16>,
    %47 = vector.extract_strided_slice %41 {offsets = [2, 0], sizes = [158, 32], strides = [1, 1]} : vector<160x32xbf16> to vector<158x32xbf16>
    %c0_31 = arith.constant 0 : index
    %c64 = arith.constant 64 : index
    %48 = vector.load %arg18[%c0_31, %c64] : memref<160x96xbf16, #tpu.memory_space<vmem>>, vector<158x32xbf16>
    tpu.vector_store %arg18[%c0_31, %c64], %47 {strides = array<i32>} : memref<160x96xbf16, #tpu.memory_space<vmem>>, vector<158x32xbf16>,
    %c0_32 = arith.constant 0 : index
    %c0_33 = arith.constant 0 : index
    %49 = vector.load %arg18[%c0_32, %c0_33] : memref<160x96xbf16, #tpu.memory_space<vmem>>, vector<128x96xbf16>
    %c0_34 = arith.constant 0 : index
    %c0_35 = arith.constant 0 : index
    %c0_36 = arith.constant 0 : index
    %50 = vector.load %arg7[%c0_34, %c0_35, %c0_36] : memref<3x96x32xbf16, #tpu.memory_space<vmem>>, vector<1x96x32xbf16>
    %51 = vector.shape_cast %50 : vector<1x96x32xbf16> to vector<96x32xbf16>
    %cst_37 = arith.constant dense<0.000000e+00> : vector<128x32xf32>
    %52 = tpu.matmul %49, %51, %cst_37 {dimension_numbers = #tpu.dot_dimension_numbers<[1], [0], [0], [1], [0, 0, 1, 1], [], []>} : vector<128x96xbf16>, vector<96x32xbf16>, vector<128x32xf32> -> vector<128x32xf32>
    %c16 = arith.constant 16 : index
    %c0_38 = arith.constant 0 : index
    %53 = vector.load %arg18[%c16, %c0_38] : memref<160x96xbf16, #tpu.memory_space<vmem>>, vector<128x96xbf16>
    %c1 = arith.constant 1 : index
    %c0_39 = arith.constant 0 : index
    %c0_40 = arith.constant 0 : index
    %54 = vector.load %arg7[%c1, %c0_39, %c0_40] : memref<3x96x32xbf16, #tpu.memory_space<vmem>>, vector<1x96x32xbf16>
    %55 = vector.shape_cast %54 : vector<1x96x32xbf16> to vector<96x32xbf16>
    %cst_41 = arith.constant dense<0.000000e+00> : vector<128x32xf32>
    %56 = tpu.matmul %53, %55, %cst_41 {dimension_numbers = #tpu.dot_dimension_numbers<[1], [0], [0], [1], [0, 0, 1, 1], [], []>} : vector<128x96xbf16>, vector<96x32xbf16>, vector<128x32xf32> -> vector<128x32xf32>
    %57 = arith.addf %52, %56 : vector<128x32xf32>
    %c32_42 = arith.constant 32 : index
    %c0_43 = arith.constant 0 : index
    %58 = vector.load %arg18[%c32_42, %c0_43] : memref<160x96xbf16, #tpu.memory_space<vmem>>, vector<128x96xbf16>
    %c2 = arith.constant 2 : index
    %c0_44 = arith.constant 0 : index
    %c0_45 = arith.constant 0 : index
    %59 = vector.load %arg7[%c2, %c0_44, %c0_45] : memref<3x96x32xbf16, #tpu.memory_space<vmem>>, vector<1x96x32xbf16>
    %60 = vector.shape_cast %59 : vector<1x96x32xbf16> to vector<96x32xbf16>
    %cst_46 = arith.constant dense<0.000000e+00> : vector<128x32xf32>
    %61 = tpu.matmul %58, %60, %cst_46 {dimension_numbers = #tpu.dot_dimension_numbers<[1], [0], [0], [1], [0, 0, 1, 1], [], []>} : vector<128x96xbf16>, vector<96x32xbf16>, vector<128x32xf32> -> vector<128x32xf32>
    %62 = arith.addf %57, %61 : vector<128x32xf32>
    %c0_47 = arith.constant 0 : index
    %c0_48 = arith.constant 0 : index
    %63 = vector.load %arg8[%c0_47, %c0_48] : memref<1x32xf32, #tpu.memory_space<vmem>>, vector<1x32xf32>
    %64 = vector.broadcast %63 : vector<1x32xf32> to vector<128x32xf32>
    %65 = arith.addf %62, %64 : vector<128x32xf32>
    %c0_49 = arith.constant 0 : index
    %c0_50 = arith.constant 0 : index
    %c0_51 = arith.constant 0 : index
    %66 = vector.load %arg2[%c0_49, %c0_50, %c0_51] : memref<1x1x32xf32, #tpu.memory_space<vmem>>, vector<1x1x32xf32>
    %67 = vector.shape_cast %66 : vector<1x1x32xf32> to vector<1x32xf32>
    %68 = vector.broadcast %67 : vector<1x32xf32> to vector<128x32xf32>
    %69 = arith.addf %65, %68 : vector<128x32xf32>
    %c0_52 = arith.constant 0 : index
    %c0_53 = arith.constant 0 : index
    %70 = vector.load %arg4[%c0_52, %c0_53] : memref<128x1xf32, #tpu.memory_space<vmem>>, vector<128x1xf32>
    %71 = vector.broadcast %70 : vector<128x1xf32> to vector<128x32xf32>
    %72 = arith.mulf %69, %71 : vector<128x32xf32>
    %cst_54 = arith.constant 1.000000e+00 : f32
    %73 = vector.broadcast %cst_54 : f32 to vector<1x128xf32>
    %cst_55 = arith.constant dense<0.000000e+00> : vector<1x32xf32>
    %74 = tpu.matmul %73, %72, %cst_55 {dimension_numbers = #tpu.dot_dimension_numbers<[1], [0], [0], [1], [0, 0, 1, 1], [], []>} : vector<1x128xf32>, vector<128x32xf32>, vector<1x32xf32> -> vector<1x32xf32>
    %75 = arith.mulf %72, %72 : vector<128x32xf32>
    %cst_56 = arith.constant dense<0.000000e+00> : vector<1x32xf32>
    %76 = tpu.matmul %73, %75, %cst_56 {dimension_numbers = #tpu.dot_dimension_numbers<[1], [0], [0], [1], [0, 0, 1, 1], [], []>} : vector<1x128xf32>, vector<128x32xf32>, vector<1x32xf32> -> vector<1x32xf32>
    %c0_57 = arith.constant 0 : index
    %c0_58 = arith.constant 0 : index
    %77 = vector.load %arg15[%c0_57, %c0_58] : memref<32x32xf32, #tpu.memory_space<vmem>>, vector<32x32xf32>
    %cst_59 = arith.constant dense<0.000000e+00> : vector<1x32xf32>
    %78 = tpu.matmul %74, %77, %cst_59 {dimension_numbers = #tpu.dot_dimension_numbers<[1], [0], [0], [1], [0, 0, 1, 1], [], []>} : vector<1x32xf32>, vector<32x32xf32>, vector<1x32xf32> -> vector<1x32xf32>
    %cst_60 = arith.constant 6.400000e+01 : f32
    %79 = vector.broadcast %cst_60 : f32 to vector<1x32xf32>
    %80 = arith.divf %78, %79 : vector<1x32xf32>
    %c0_61 = arith.constant 0 : index
    %c0_62 = arith.constant 0 : index
    %81 = vector.load %arg15[%c0_61, %c0_62] : memref<32x32xf32, #tpu.memory_space<vmem>>, vector<32x32xf32>
    %cst_63 = arith.constant dense<0.000000e+00> : vector<1x32xf32>
    %82 = tpu.matmul %76, %81, %cst_63 {dimension_numbers = #tpu.dot_dimension_numbers<[1], [0], [0], [1], [0, 0, 1, 1], [], []>} : vector<1x32xf32>, vector<32x32xf32>, vector<1x32xf32> -> vector<1x32xf32>
    %cst_64 = arith.constant 6.400000e+01 : f32
    %83 = vector.broadcast %cst_64 : f32 to vector<1x32xf32>
    %84 = arith.divf %82, %83 : vector<1x32xf32>
    %85 = arith.mulf %80, %80 : vector<1x32xf32>
    %86 = arith.subf %84, %85 : vector<1x32xf32>
    %cst_65 = arith.constant 9.99999974E-6 : f32
    %87 = vector.broadcast %cst_65 : f32 to vector<1x32xf32>
    %88 = arith.addf %86, %87 : vector<1x32xf32>
    %89 = math.rsqrt %88 : vector<1x32xf32>
    %c0_66 = arith.constant 0 : index
    %c0_67 = arith.constant 0 : index
    %90 = vector.load %arg16[%c0_66, %c0_67] : memref<32x32xf32, #tpu.memory_space<vmem>>, vector<32x32xf32>
    %cst_68 = arith.constant dense<0.000000e+00> : vector<1x32xf32>
    %91 = tpu.matmul %80, %90, %cst_68 {dimension_numbers = #tpu.dot_dimension_numbers<[1], [0], [0], [1], [0, 0, 1, 1], [], []>} : vector<1x32xf32>, vector<32x32xf32>, vector<1x32xf32> -> vector<1x32xf32>
    %c0_69 = arith.constant 0 : index
    %c0_70 = arith.constant 0 : index
    %92 = vector.load %arg16[%c0_69, %c0_70] : memref<32x32xf32, #tpu.memory_space<vmem>>, vector<32x32xf32>
    %cst_71 = arith.constant dense<0.000000e+00> : vector<1x32xf32>
    %93 = tpu.matmul %89, %92, %cst_71 {dimension_numbers = #tpu.dot_dimension_numbers<[1], [0], [0], [1], [0, 0, 1, 1], [], []>} : vector<1x32xf32>, vector<32x32xf32>, vector<1x32xf32> -> vector<1x32xf32>
    %c0_72 = arith.constant 0 : index
    %c0_73 = arith.constant 0 : index
    %94 = vector.load %arg9[%c0_72, %c0_73] : memref<1x32xf32, #tpu.memory_space<vmem>>, vector<1x32xf32>
    %95 = arith.mulf %93, %94 : vector<1x32xf32>
    %c0_74 = arith.constant 0 : index
    %c0_75 = arith.constant 0 : index
    %96 = vector.load %arg10[%c0_74, %c0_75] : memref<1x32xf32, #tpu.memory_space<vmem>>, vector<1x32xf32>
    %97 = arith.mulf %91, %95 : vector<1x32xf32>
    %98 = arith.subf %96, %97 : vector<1x32xf32>
    %c0_76 = arith.constant 0 : index
    %c0_77 = arith.constant 0 : index
    %99 = vector.load %arg4[%c0_76, %c0_77] : memref<128x1xf32, #tpu.memory_space<vmem>>, vector<128x1xf32>
    %100 = vector.broadcast %95 : vector<1x32xf32> to vector<128x32xf32>
    %101 = arith.mulf %72, %100 : vector<128x32xf32>
    %102 = vector.broadcast %98 : vector<1x32xf32> to vector<128x32xf32>
    %103 = arith.addf %101, %102 : vector<128x32xf32>
    %104 = arith.negf %103 : vector<128x32xf32>
    %105 = math.exp %104 : vector<128x32xf32>
    %cst_78 = arith.constant 1.000000e+00 : f32
    %106 = vector.broadcast %cst_78 : f32 to vector<128x32xf32>
    %107 = arith.addf %106, %105 : vector<128x32xf32>
    %108 = arith.divf %106, %107 : vector<128x32xf32>
    %109 = arith.mulf %103, %108 : vector<128x32xf32>
    %110 = vector.broadcast %99 : vector<128x1xf32> to vector<128x32xf32>
    %111 = arith.mulf %110, %109 : vector<128x32xf32>
    %112 = arith.truncf %111 : vector<128x32xf32> to vector<128x32xbf16>
    %cst_79 = arith.constant 0.000000e+00 : bf16
    %113 = vector.broadcast %cst_79 : bf16 to vector<17x96xbf16>
    %c0_80 = arith.constant 0 : index
    %c0_81 = arith.constant 0 : index
    %114 = vector.load %arg19[%c0_80, %c0_81] : memref<160x96xbf16, #tpu.memory_space<vmem>>, vector<17x96xbf16>
    tpu.vector_store %arg19[%c0_80, %c0_81], %113 {strides = array<i32>} : memref<160x96xbf16, #tpu.memory_space<vmem>>, vector<17x96xbf16>,
    %cst_82 = arith.constant 0.000000e+00 : bf16
    %115 = vector.broadcast %cst_82 : bf16 to vector<17x96xbf16>
    %c143 = arith.constant 143 : index
    %c0_83 = arith.constant 0 : index
    %116 = vector.load %arg19[%c143, %c0_83] : memref<160x96xbf16, #tpu.memory_space<vmem>>, vector<17x96xbf16>
    tpu.vector_store %arg19[%c143, %c0_83], %115 {strides = array<i32>} : memref<160x96xbf16, #tpu.memory_space<vmem>>, vector<17x96xbf16>,
    %c17 = arith.constant 17 : index
    %c0_84 = arith.constant 0 : index
    %117 = vector.load %arg19[%c17, %c0_84] : memref<160x96xbf16, #tpu.memory_space<vmem>>, vector<128x32xbf16>
    tpu.vector_store %arg19[%c17, %c0_84], %112 {strides = array<i32>} : memref<160x96xbf16, #tpu.memory_space<vmem>>, vector<128x32xbf16>,
    %c16_85 = arith.constant 16 : index
    %c32_86 = arith.constant 32 : index
    %118 = vector.load %arg19[%c16_85, %c32_86] : memref<160x96xbf16, #tpu.memory_space<vmem>>, vector<128x32xbf16>
    tpu.vector_store %arg19[%c16_85, %c32_86], %112 {strides = array<i32>} : memref<160x96xbf16, #tpu.memory_space<vmem>>, vector<128x32xbf16>,
    %c15 = arith.constant 15 : index
    %c64_87 = arith.constant 64 : index
    %119 = vector.load %arg19[%c15, %c64_87] : memref<160x96xbf16, #tpu.memory_space<vmem>>, vector<128x32xbf16>
    tpu.vector_store %arg19[%c15, %c64_87], %112 {strides = array<i32>} : memref<160x96xbf16, #tpu.memory_space<vmem>>, vector<128x32xbf16>,
    %c0_88 = arith.constant 0 : index
    %c0_89 = arith.constant 0 : index
    %120 = vector.load %arg19[%c0_88, %c0_89] : memref<160x96xbf16, #tpu.memory_space<vmem>>, vector<128x96xbf16>
    %c0_90 = arith.constant 0 : index
    %c0_91 = arith.constant 0 : index
    %c0_92 = arith.constant 0 : index
    %121 = vector.load %arg11[%c0_90, %c0_91, %c0_92] : memref<3x96x32xbf16, #tpu.memory_space<vmem>>, vector<1x96x32xbf16>
    %122 = vector.shape_cast %121 : vector<1x96x32xbf16> to vector<96x32xbf16>
    %cst_93 = arith.constant dense<0.000000e+00> : vector<128x32xf32>
    %123 = tpu.matmul %120, %122, %cst_93 {dimension_numbers = #tpu.dot_dimension_numbers<[1], [0], [0], [1], [0, 0, 1, 1], [], []>} : vector<128x96xbf16>, vector<96x32xbf16>, vector<128x32xf32> -> vector<128x32xf32>
    %c16_94 = arith.constant 16 : index
    %c0_95 = arith.constant 0 : index
    %124 = vector.load %arg19[%c16_94, %c0_95] : memref<160x96xbf16, #tpu.memory_space<vmem>>, vector<128x96xbf16>
    %c1_96 = arith.constant 1 : index
    %c0_97 = arith.constant 0 : index
    %c0_98 = arith.constant 0 : index
    %125 = vector.load %arg11[%c1_96, %c0_97, %c0_98] : memref<3x96x32xbf16, #tpu.memory_space<vmem>>, vector<1x96x32xbf16>
    %126 = vector.shape_cast %125 : vector<1x96x32xbf16> to vector<96x32xbf16>
    %cst_99 = arith.constant dense<0.000000e+00> : vector<128x32xf32>
    %127 = tpu.matmul %124, %126, %cst_99 {dimension_numbers = #tpu.dot_dimension_numbers<[1], [0], [0], [1], [0, 0, 1, 1], [], []>} : vector<128x96xbf16>, vector<96x32xbf16>, vector<128x32xf32> -> vector<128x32xf32>
    %128 = arith.addf %123, %127 : vector<128x32xf32>
    %c32_100 = arith.constant 32 : index
    %c0_101 = arith.constant 0 : index
    %129 = vector.load %arg19[%c32_100, %c0_101] : memref<160x96xbf16, #tpu.memory_space<vmem>>, vector<128x96xbf16>
    %c2_102 = arith.constant 2 : index
    %c0_103 = arith.constant 0 : index
    %c0_104 = arith.constant 0 : index
    %130 = vector.load %arg11[%c2_102, %c0_103, %c0_104] : memref<3x96x32xbf16, #tpu.memory_space<vmem>>, vector<1x96x32xbf16>
    %131 = vector.shape_cast %130 : vector<1x96x32xbf16> to vector<96x32xbf16>
    %cst_105 = arith.constant dense<0.000000e+00> : vector<128x32xf32>
    %132 = tpu.matmul %129, %131, %cst_105 {dimension_numbers = #tpu.dot_dimension_numbers<[1], [0], [0], [1], [0, 0, 1, 1], [], []>} : vector<128x96xbf16>, vector<96x32xbf16>, vector<128x32xf32> -> vector<128x32xf32>
    %133 = arith.addf %128, %132 : vector<128x32xf32>
    %c0_106 = arith.constant 0 : index
    %c17_107 = arith.constant 17 : index
    %c0_108 = arith.constant 0 : index
    %134 = vector.load %arg1[%c0_106, %c17_107, %c0_108] : memref<1x160x32xf32, #tpu.memory_space<vmem>>, vector<1x128x32xf32>
    %135 = vector.shape_cast %134 : vector<1x128x32xf32> to vector<128x32xf32>
    %136 = arith.addf %135, %133 : vector<128x32xf32>
    %c0_109 = arith.constant 0 : index
    %c0_110 = arith.constant 0 : index
    %137 = vector.load %arg12[%c0_109, %c0_110] : memref<1x32xf32, #tpu.memory_space<vmem>>, vector<1x32xf32>
    %138 = vector.broadcast %137 : vector<1x32xf32> to vector<128x32xf32>
    %139 = arith.addf %136, %138 : vector<128x32xf32>
    %140 = vector.extract_strided_slice %139 {offsets = [0, 0], sizes = [8, 32], strides = [1, 1]} : vector<128x32xf32> to vector<8x32xf32>
    %c0_111 = arith.constant 0 : index
    %c0_112 = arith.constant 0 : index
    %c0_113 = arith.constant 0 : index
    %141 = vector.load %arg17[%c0_111, %c0_112, %c0_113] : memref<1x64x32xf32, #tpu.memory_space<vmem>>, vector<1x8x32xf32>
    %142 = vector.shape_cast %141 : vector<1x8x32xf32> to vector<8x32xf32>
    %143 = vector.shape_cast %140 : vector<8x32xf32> to vector<1x8x32xf32>
    tpu.vector_store %arg17[%c0_111, %c0_112, %c0_113], %143 {strides = array<i32>} : memref<1x64x32xf32, #tpu.memory_space<vmem>>, vector<1x8x32xf32>,
    %144 = vector.extract_strided_slice %139 {offsets = [16, 0], sizes = [8, 32], strides = [1, 1]} : vector<128x32xf32> to vector<8x32xf32>
    %c0_114 = arith.constant 0 : index
    %c8 = arith.constant 8 : index
    %c0_115 = arith.constant 0 : index
    %145 = vector.load %arg17[%c0_114, %c8, %c0_115] : memref<1x64x32xf32, #tpu.memory_space<vmem>>, vector<1x8x32xf32>
    %146 = vector.shape_cast %145 : vector<1x8x32xf32> to vector<8x32xf32>
    %147 = vector.shape_cast %144 : vector<8x32xf32> to vector<1x8x32xf32>
    tpu.vector_store %arg17[%c0_114, %c8, %c0_115], %147 {strides = array<i32>} : memref<1x64x32xf32, #tpu.memory_space<vmem>>, vector<1x8x32xf32>,
    %148 = vector.extract_strided_slice %139 {offsets = [32, 0], sizes = [8, 32], strides = [1, 1]} : vector<128x32xf32> to vector<8x32xf32>
    %c0_116 = arith.constant 0 : index
    %c16_117 = arith.constant 16 : index
    %c0_118 = arith.constant 0 : index
    %149 = vector.load %arg17[%c0_116, %c16_117, %c0_118] : memref<1x64x32xf32, #tpu.memory_space<vmem>>, vector<1x8x32xf32>
    %150 = vector.shape_cast %149 : vector<1x8x32xf32> to vector<8x32xf32>
    %151 = vector.shape_cast %148 : vector<8x32xf32> to vector<1x8x32xf32>
    tpu.vector_store %arg17[%c0_116, %c16_117, %c0_118], %151 {strides = array<i32>} : memref<1x64x32xf32, #tpu.memory_space<vmem>>, vector<1x8x32xf32>,
    %152 = vector.extract_strided_slice %139 {offsets = [48, 0], sizes = [8, 32], strides = [1, 1]} : vector<128x32xf32> to vector<8x32xf32>
    %c0_119 = arith.constant 0 : index
    %c24 = arith.constant 24 : index
    %c0_120 = arith.constant 0 : index
    %153 = vector.load %arg17[%c0_119, %c24, %c0_120] : memref<1x64x32xf32, #tpu.memory_space<vmem>>, vector<1x8x32xf32>
    %154 = vector.shape_cast %153 : vector<1x8x32xf32> to vector<8x32xf32>
    %155 = vector.shape_cast %152 : vector<8x32xf32> to vector<1x8x32xf32>
    tpu.vector_store %arg17[%c0_119, %c24, %c0_120], %155 {strides = array<i32>} : memref<1x64x32xf32, #tpu.memory_space<vmem>>, vector<1x8x32xf32>,
    %156 = vector.extract_strided_slice %139 {offsets = [64, 0], sizes = [8, 32], strides = [1, 1]} : vector<128x32xf32> to vector<8x32xf32>
    %c0_121 = arith.constant 0 : index
    %c32_122 = arith.constant 32 : index
    %c0_123 = arith.constant 0 : index
    %157 = vector.load %arg17[%c0_121, %c32_122, %c0_123] : memref<1x64x32xf32, #tpu.memory_space<vmem>>, vector<1x8x32xf32>
    %158 = vector.shape_cast %157 : vector<1x8x32xf32> to vector<8x32xf32>
    %159 = vector.shape_cast %156 : vector<8x32xf32> to vector<1x8x32xf32>
    tpu.vector_store %arg17[%c0_121, %c32_122, %c0_123], %159 {strides = array<i32>} : memref<1x64x32xf32, #tpu.memory_space<vmem>>, vector<1x8x32xf32>,
    %160 = vector.extract_strided_slice %139 {offsets = [80, 0], sizes = [8, 32], strides = [1, 1]} : vector<128x32xf32> to vector<8x32xf32>
    %c0_124 = arith.constant 0 : index
    %c40 = arith.constant 40 : index
    %c0_125 = arith.constant 0 : index
    %161 = vector.load %arg17[%c0_124, %c40, %c0_125] : memref<1x64x32xf32, #tpu.memory_space<vmem>>, vector<1x8x32xf32>
    %162 = vector.shape_cast %161 : vector<1x8x32xf32> to vector<8x32xf32>
    %163 = vector.shape_cast %160 : vector<8x32xf32> to vector<1x8x32xf32>
    tpu.vector_store %arg17[%c0_124, %c40, %c0_125], %163 {strides = array<i32>} : memref<1x64x32xf32, #tpu.memory_space<vmem>>, vector<1x8x32xf32>,
    %164 = vector.extract_strided_slice %139 {offsets = [96, 0], sizes = [8, 32], strides = [1, 1]} : vector<128x32xf32> to vector<8x32xf32>
    %c0_126 = arith.constant 0 : index
    %c48 = arith.constant 48 : index
    %c0_127 = arith.constant 0 : index
    %165 = vector.load %arg17[%c0_126, %c48, %c0_127] : memref<1x64x32xf32, #tpu.memory_space<vmem>>, vector<1x8x32xf32>
    %166 = vector.shape_cast %165 : vector<1x8x32xf32> to vector<8x32xf32>
    %167 = vector.shape_cast %164 : vector<8x32xf32> to vector<1x8x32xf32>
    tpu.vector_store %arg17[%c0_126, %c48, %c0_127], %167 {strides = array<i32>} : memref<1x64x32xf32, #tpu.memory_space<vmem>>, vector<1x8x32xf32>,
    %168 = vector.extract_strided_slice %139 {offsets = [112, 0], sizes = [8, 32], strides = [1, 1]} : vector<128x32xf32> to vector<8x32xf32>
    %c0_128 = arith.constant 0 : index
    %c56 = arith.constant 56 : index
    %c0_129 = arith.constant 0 : index
    %169 = vector.load %arg17[%c0_128, %c56, %c0_129] : memref<1x64x32xf32, #tpu.memory_space<vmem>>, vector<1x8x32xf32>
    %170 = vector.shape_cast %169 : vector<1x8x32xf32> to vector<8x32xf32>
    %171 = vector.shape_cast %168 : vector<8x32xf32> to vector<1x8x32xf32>
    tpu.vector_store %arg17[%c0_128, %c56, %c0_129], %171 {strides = array<i32>} : memref<1x64x32xf32, #tpu.memory_space<vmem>>, vector<1x8x32xf32>,
    return
  }
  func.func @transform_0(%arg0: i32) -> (i32, i32, i32) {
    %c0_i32 = arith.constant 0 : i32
    %c0_i32_0 = arith.constant 0 : i32
    %c0_i32_1 = arith.constant 0 : i32
    return %arg0, %c0_i32, %c0_i32_0 : i32, i32, i32
  }
  func.func @transform_1(%arg0: i32) -> (i32, i32, i32) {
    %c0_i32 = arith.constant 0 : i32
    %c0_i32_0 = arith.constant 0 : i32
    %c0_i32_1 = arith.constant 0 : i32
    return %arg0, %c0_i32, %c0_i32_0 : i32, i32, i32
  }
  func.func @transform_2(%arg0: i32) -> (i32, i32) {
    %c0_i32 = arith.constant 0 : i32
    %c0_i32_0 = arith.constant 0 : i32
    %c0_i32_1 = arith.constant 0 : i32
    return %c0_i32, %c0_i32_0 : i32, i32
  }
  func.func @transform_3(%arg0: i32) -> (i32, i32) {
    %c0_i32 = arith.constant 0 : i32
    %c0_i32_0 = arith.constant 0 : i32
    %c0_i32_1 = arith.constant 0 : i32
    return %c0_i32, %c0_i32_0 : i32, i32
  }
  func.func @transform_4(%arg0: i32) -> (i32, i32) {
    %c0_i32 = arith.constant 0 : i32
    %c0_i32_0 = arith.constant 0 : i32
    %c0_i32_1 = arith.constant 0 : i32
    return %c0_i32, %c0_i32_0 : i32, i32
  }
  func.func @transform_5(%arg0: i32) -> (i32, i32) {
    %c0_i32 = arith.constant 0 : i32
    %c0_i32_0 = arith.constant 0 : i32
    %c0_i32_1 = arith.constant 0 : i32
    return %c0_i32, %c0_i32_0 : i32, i32
  }
  func.func @transform_6(%arg0: i32) -> (i32, i32, i32) {
    %c0_i32 = arith.constant 0 : i32
    %c0_i32_0 = arith.constant 0 : i32
    %c0_i32_1 = arith.constant 0 : i32
    %c0_i32_2 = arith.constant 0 : i32
    return %c0_i32, %c0_i32_0, %c0_i32_1 : i32, i32, i32
  }
  func.func @transform_7(%arg0: i32) -> (i32, i32) {
    %c0_i32 = arith.constant 0 : i32
    %c0_i32_0 = arith.constant 0 : i32
    %c0_i32_1 = arith.constant 0 : i32
    return %c0_i32, %c0_i32_0 : i32, i32
  }
  func.func @transform_8(%arg0: i32) -> (i32, i32) {
    %c0_i32 = arith.constant 0 : i32
    %c0_i32_0 = arith.constant 0 : i32
    %c0_i32_1 = arith.constant 0 : i32
    return %c0_i32, %c0_i32_0 : i32, i32
  }
  func.func @transform_9(%arg0: i32) -> (i32, i32) {
    %c0_i32 = arith.constant 0 : i32
    %c0_i32_0 = arith.constant 0 : i32
    %c0_i32_1 = arith.constant 0 : i32
    return %c0_i32, %c0_i32_0 : i32, i32
  }
  func.func @transform_10(%arg0: i32) -> (i32, i32, i32) {
    %c0_i32 = arith.constant 0 : i32
    %c0_i32_0 = arith.constant 0 : i32
    %c0_i32_1 = arith.constant 0 : i32
    %c0_i32_2 = arith.constant 0 : i32
    return %c0_i32, %c0_i32_0, %c0_i32_1 : i32, i32, i32
  }
  func.func @transform_11(%arg0: i32) -> (i32, i32) {
    %c0_i32 = arith.constant 0 : i32
    %c0_i32_0 = arith.constant 0 : i32
    %c0_i32_1 = arith.constant 0 : i32
    return %c0_i32, %c0_i32_0 : i32, i32
  }
  func.func @transform_12(%arg0: i32) -> (i32, i32) {
    %c0_i32 = arith.constant 0 : i32
    %c0_i32_0 = arith.constant 0 : i32
    %c0_i32_1 = arith.constant 0 : i32
    return %c0_i32, %c0_i32_0 : i32, i32
  }
  func.func @transform_13(%arg0: i32) -> (i32, i32) {
    %c0_i32 = arith.constant 0 : i32
    %c0_i32_0 = arith.constant 0 : i32
    %c0_i32_1 = arith.constant 0 : i32
    return %c0_i32, %c0_i32_0 : i32, i32
  }
  func.func @transform_14(%arg0: i32) -> (i32, i32) {
    %c0_i32 = arith.constant 0 : i32
    %c0_i32_0 = arith.constant 0 : i32
    %c0_i32_1 = arith.constant 0 : i32
    return %c0_i32, %c0_i32_0 : i32, i32
  }
  func.func @transform_15(%arg0: i32) -> (i32, i32) {
    %c0_i32 = arith.constant 0 : i32
    %c0_i32_0 = arith.constant 0 : i32
    %c0_i32_1 = arith.constant 0 : i32
    return %c0_i32, %c0_i32_0 : i32, i32
  }
  func.func @transform_16(%arg0: i32) -> (i32, i32, i32) {
    %c0_i32 = arith.constant 0 : i32
    %c0_i32_0 = arith.constant 0 : i32
    %c0_i32_1 = arith.constant 0 : i32
    return %arg0, %c0_i32, %c0_i32_0 : i32, i32, i32
  }
}

</mosaic_0001>

<llo_original>
// kernel: resblock_forward_nhwc.1
$region0: #{resblock_forward_nhwc.1}
  #allocation0 [shape = 'u32[]', space=smem, size = 0x4, offset = 0x4, fixed_abs, tag = 'smem constant byte address 0x4 - core index']
  #allocation1 [shape = 'u32[144,128]{1,0:T(1,128)}', space=vmem, size = 0x12000, scoped, tag = 'internal scratch']
  #allocation2 [shape = 'bf16[160,96]{1,0:T(16,128)(2,1)}', space=vmem, size = 0xa000, scoped, tag = 'scratch operand']
  #allocation3 [shape = 'bf16[160,96]{1,0:T(16,128)(2,1)}', space=vmem, size = 0xa000, scoped, tag = 'scratch operand']
  %s0 = inlined_call_operand.vmem [shape: f32[2,160,32], index: 0, kind: input, shape index: {}]
  %s1 = inlined_call_operand.vmem [shape: f32[2,1,32], index: 1, kind: input, shape index: {}]
  %s2 = inlined_call_operand.vmem [shape: f32[160,1], index: 2, kind: input, shape index: {}]
  %s3 = inlined_call_operand.vmem [shape: f32[128,1], index: 3, kind: input, shape index: {}]
  %s4 = inlined_call_operand.vmem [shape: f32[1,32], index: 4, kind: input, shape index: {}]
  %s5 = inlined_call_operand.vmem [shape: f32[1,32], index: 5, kind: input, shape index: {}]
  %s6 = inlined_call_operand.vmem [shape: bf16[3,96,32], index: 6, kind: input, shape index: {}]
  %s7 = inlined_call_operand.vmem [shape: f32[1,32], index: 7, kind: input, shape index: {}]
  %s8 = inlined_call_operand.vmem [shape: f32[1,32], index: 8, kind: input, shape index: {}]
  %s9 = inlined_call_operand.vmem [shape: f32[1,32], index: 9, kind: input, shape index: {}]
  %s10 = inlined_call_operand.vmem [shape: bf16[3,96,32], index: 10, kind: input, shape index: {}]
  %s11 = inlined_call_operand.vmem [shape: f32[1,32], index: 11, kind: input, shape index: {}]
  %s12 = inlined_call_operand.vmem [shape: f32[32,32], index: 12, kind: input, shape index: {}, may-alias: {12,13,14,15}]
  %s13 = inlined_call_operand.vmem [shape: f32[32,32], index: 13, kind: input, shape index: {}, may-alias: {12,13,14,15}]
  %s14 = inlined_call_operand.vmem [shape: f32[32,32], index: 14, kind: input, shape index: {}, may-alias: {12,13,14,15}]
  %s15 = inlined_call_operand.vmem [shape: f32[32,32], index: 15, kind: input, shape index: {}, may-alias: {12,13,14,15}]
  %s16 = inlined_call_operand.hbm [shape: f32[2,64,32], index: 16, kind: output, shape index: {}]
  %s17 = sld [smem:[#allocation0]]
  $region97: #{resblock_forward_nhwc.1} parent=0
    _
  %s19 = ssub.s32 1, %s17
  %s20 = scalar_select 0, %s19, %s17
  $region1: #{resblock_forward_nhwc.1} parent=0
    #allocation4 [shape = 'u8[65536]{0}', space=vmem, size = 0x10000, scoped, tag = 'output window, operand 0']
    #allocation5 [shape = 's32[2]{0}', space=sflag, size = 0x8, scoped, tag = 'scoped memory for resblock_forward_nhwc.1']
    %21 = vsyncpa [#allocation5], 0
    %s22 = scalar_lea.sflag [#allocation5], 1
    %23 = vsyncpa %s22, 0
    loop: start=0, step=1, limit=4
    $region2: #{resblock_forward_nhwc.1} parent=1 // loop_pre_header
      _
    $region3: #{resblock_forward_nhwc.1} parent=1 // loop_header
      %s25 = sphi 0, %s29
      %p26 = scmp.ge.s32.totalorder %s25, 4
      %s35 = sphi 0, %s37
      %s38 = sphi 0, %s35
      %s39 = sphi 0, %s38
      %s55 = sphi 0, %s39
      %s61 = sphi 0, %s63
      %s64 = sphi 0, %s61
      %s65 = sphi 0, %s64
      %s81 = sphi 0, %s65
      %s85 = sphi 0, %s85
      %s87 = sphi 0, %s85
      %s88 = sphi 0, %s87
      %s102 = sphi 0, %s88
      %s106 = sphi 0, %s106
      %s108 = sphi 0, %s106
      %s109 = sphi 0, %s108
      %s123 = sphi 0, %s109
      %s127 = sphi 0, %s127
      %s129 = sphi 0, %s127
      %s130 = sphi 0, %s129
      %s144 = sphi 0, %s130
      %s148 = sphi 0, %s148
      %s150 = sphi 0, %s148
      %s151 = sphi 0, %s150
      %s165 = sphi 0, %s151
      %s169 = sphi 0, %s169
      %s171 = sphi 0, %s169
      %s172 = sphi 0, %s171
      %s186 = sphi 0, %s172
      %s190 = sphi 0, %s190
      %s192 = sphi 0, %s190
      %s193 = sphi 0, %s192
      %s207 = sphi 0, %s193
      %s211 = sphi 0, %s211
      %s213 = sphi 0, %s211
      %s214 = sphi 0, %s213
      %s228 = sphi 0, %s214
      %s232 = sphi 0, %s232
      %s234 = sphi 0, %s232
      %s235 = sphi 0, %s234
      %s249 = sphi 0, %s235
      %s253 = sphi 0, %s253
      %s255 = sphi 0, %s253
      %s256 = sphi 0, %s255
      %s270 = sphi 0, %s256
      %s274 = sphi 0, %s274
      %s276 = sphi 0, %s274
      %s277 = sphi 0, %s276
      %s291 = sphi 0, %s277
      %s295 = sphi 0, %s295
      %s297 = sphi 0, %s295
      %s298 = sphi 0, %s297
      %s312 = sphi 0, %s298
      %s316 = sphi 0, %s316
      %s318 = sphi 0, %s316
      %s319 = sphi 0, %s318
      %s333 = sphi 0, %s319
      %s337 = sphi 0, %s337
      %s339 = sphi 0, %s337
      %s340 = sphi 0, %s339
      %s354 = sphi 0, %s340
      %s358 = sphi 0, %s358
      %s360 = sphi 0, %s358
      %s361 = sphi 0, %s360
      %s375 = sphi 0, %s361
      %s381 = sphi 0, %s383
      %s384 = sphi 0, %s381
      %s385 = sphi 0, %s384
      %s401 = sphi 0, %s385
    $region4: #{resblock_forward_nhwc.1} parent=1 // loop_header_branch
      %28 = sbr.rel (%p26) target = $region8
    $region5: #{resblock_forward_nhwc.1} parent=1 // loop_body
      %s30 = ssub.s32 %s25, 1
      %s31 = ssub.s32 %s25, 2
      %s32 = sadd.s32 %s25, 1
      %s33 = ssub.s32 %s25, %s32
      %p34 = scmp.eq.s32.totalorder %s33, 0
      %s36 = sadd.s32 %s35, 1
      %s37 = scalar_select %p34, %s35, %s36
      %p40 = pneg %p34
      %p41 = scmp.eq.s32.totalorder %s25, 1
      %p42 = por %p40, %p41
      %p43 = scmp.ne.s32.totalorder %s35, %s38
      %p44 = scmp.eq.s32.totalorder %s25, 0
      %p45 = por %p43, %p44
      %p46 = scmp.ne.s32.totalorder %s35, %s38
      %p47 = scmp.eq.s32.totalorder %s30, 1
      %p48 = por %p46, %p47
      %p49 = scmp.ne.s32.totalorder %s38, %s39
      %p50 = scmp.eq.s32.totalorder %s30, 0
      %p51 = por %p49, %p50
      %p52 = scmp.ne.s32.totalorder %s38, %s39
      %p53 = scmp.eq.s32.totalorder %s31, 1
      %p54 = por %p52, %p53
      %p56 = scmp.ne.s32.totalorder %s39, %s55
      %p57 = scmp.eq.s32.totalorder %s31, 0
      %p58 = por %p56, %p57
      %s59 = ssub.s32 %s25, %s32
      %p60 = scmp.eq.s32.totalorder %s59, 0
      %s62 = sadd.s32 %s61, 1
      %s63 = scalar_select %p60, %s61, %s62
      %p66 = pneg %p60
      %p67 = scmp.eq.s32.totalorder %s25, 1
      %p68 = por %p66, %p67
      %p69 = scmp.ne.s32.totalorder %s61, %s64
      %p70 = scmp.eq.s32.totalorder %s25, 0
      %p71 = por %p69, %p70
      %p72 = scmp.ne.s32.totalorder %s61, %s64
      %p73 = scmp.eq.s32.totalorder %s30, 1
      %p74 = por %p72, %p73
      %p75 = scmp.ne.s32.totalorder %s64, %s65
      %p76 = scmp.eq.s32.totalorder %s30, 0
      %p77 = por %p75, %p76
      %p78 = scmp.ne.s32.totalorder %s64, %s65
      %p79 = scmp.eq.s32.totalorder %s31, 1
      %p80 = por %p78, %p79
      %p82 = scmp.ne.s32.totalorder %s65, %s81
      %p83 = scmp.eq.s32.totalorder %s31, 0
      %p84 = por %p82, %p83
      %s86 = sadd.s32 %s85, 1
      %p89 = scmp.eq.s32.totalorder %s25, 1
      %p90 = scmp.ne.s32.totalorder %s85, %s87
      %p91 = scmp.eq.s32.totalorder %s25, 0
      %p92 = por %p90, %p91
      %p93 = scmp.ne.s32.totalorder %s85, %s87
      %p94 = scmp.eq.s32.totalorder %s30, 1
      %p95 = por %p93, %p94
      %p96 = scmp.ne.s32.totalorder %s87, %s88
      %p97 = scmp.eq.s32.totalorder %s30, 0
      %p98 = por %p96, %p97
      %p99 = scmp.ne.s32.totalorder %s87, %s88
      %p100 = scmp.eq.s32.totalorder %s31, 1
      %p101 = por %p99, %p100
      %p103 = scmp.ne.s32.totalorder %s88, %s102
      %p104 = scmp.eq.s32.totalorder %s31, 0
      %p105 = por %p103, %p104
      %s107 = sadd.s32 %s106, 1
      %p110 = scmp.eq.s32.totalorder %s25, 1
      %p111 = scmp.ne.s32.totalorder %s106, %s108
      %p112 = scmp.eq.s32.totalorder %s25, 0
      %p113 = por %p111, %p112
      %p114 = scmp.ne.s32.totalorder %s106, %s108
      %p115 = scmp.eq.s32.totalorder %s30, 1
      %p116 = por %p114, %p115
      %p117 = scmp.ne.s32.totalorder %s108, %s109
      %p118 = scmp.eq.s32.totalorder %s30, 0
      %p119 = por %p117, %p118
      %p120 = scmp.ne.s32.totalorder %s108, %s109
      %p121 = scmp.eq.s32.totalorder %s31, 1
      %p122 = por %p120, %p121
      %p124 = scmp.ne.s32.totalorder %s109, %s123
      %p125 = scmp.eq.s32.totalorder %s31, 0
      %p126 = por %p124, %p125
      %s128 = sadd.s32 %s127, 1
      %p131 = scmp.eq.s32.totalorder %s25, 1
      %p132 = scmp.ne.s32.totalorder %s127, %s129
      %p133 = scmp.eq.s32.totalorder %s25, 0
      %p134 = por %p132, %p133
      %p135 = scmp.ne.s32.totalorder %s127, %s129
      %p136 = scmp.eq.s32.totalorder %s30, 1
      %p137 = por %p135, %p136
      %p138 = scmp.ne.s32.totalorder %s129, %s130
      %p139 = scmp.eq.s32.totalorder %s30, 0
      %p140 = por %p138, %p139
      %p141 = scmp.ne.s32.totalorder %s129, %s130
      %p142 = scmp.eq.s32.totalorder %s31, 1
      %p143 = por %p141, %p142
      %p145 = scmp.ne.s32.totalorder %s130, %s144
      %p146 = scmp.eq.s32.totalorder %s31, 0
      %p147 = por %p145, %p146
      %s149 = sadd.s32 %s148, 1
      %p152 = scmp.eq.s32.totalorder %s25, 1
      %p153 = scmp.ne.s32.totalorder %s148, %s150
      %p154 = scmp.eq.s32.totalorder %s25, 0
      %p155 = por %p153, %p154
      %p156 = scmp.ne.s32.totalorder %s148, %s150
      %p157 = scmp.eq.s32.totalorder %s30, 1
      %p158 = por %p156, %p157
      %p159 = scmp.ne.s32.totalorder %s150, %s151
      %p160 = scmp.eq.s32.totalorder %s30, 0
      %p161 = por %p159, %p160
      %p162 = scmp.ne.s32.totalorder %s150, %s151
      %p163 = scmp.eq.s32.totalorder %s31, 1
      %p164 = por %p162, %p163
      %p166 = scmp.ne.s32.totalorder %s151, %s165
      %p167 = scmp.eq.s32.totalorder %s31, 0
      %p168 = por %p166, %p167
      %s170 = sadd.s32 %s169, 1
      %p173 = scmp.eq.s32.totalorder %s25, 1
      %p174 = scmp.ne.s32.totalorder %s169, %s171
      %p175 = scmp.eq.s32.totalorder %s25, 0
      %p176 = por %p174, %p175
      %p177 = scmp.ne.s32.totalorder %s169, %s171
      %p178 = scmp.eq.s32.totalorder %s30, 1
      %p179 = por %p177, %p178
      %p180 = scmp.ne.s32.totalorder %s171, %s172
      %p181 = scmp.eq.s32.totalorder %s30, 0
      %p182 = por %p180, %p181
      %p183 = scmp.ne.s32.totalorder %s171, %s172
      %p184 = scmp.eq.s32.totalorder %s31, 1
      %p185 = por %p183, %p184
      %p187 = scmp.ne.s32.totalorder %s172, %s186
      %p188 = scmp.eq.s32.totalorder %s31, 0
      %p189 = por %p187, %p188
      %s191 = sadd.s32 %s190, 1
      %p194 = scmp.eq.s32.totalorder %s25, 1
      %p195 = scmp.ne.s32.totalorder %s190, %s192
      %p196 = scmp.eq.s32.totalorder %s25, 0
      %p197 = por %p195, %p196
      %p198 = scmp.ne.s32.totalorder %s190, %s192
      %p199 = scmp.eq.s32.totalorder %s30, 1
      %p200 = por %p198, %p199
      %p201 = scmp.ne.s32.totalorder %s192, %s193
      %p202 = scmp.eq.s32.totalorder %s30, 0
      %p203 = por %p201, %p202
      %p204 = scmp.ne.s32.totalorder %s192, %s193
      %p205 = scmp.eq.s32.totalorder %s31, 1
      %p206 = por %p204, %p205
      %p208 = scmp.ne.s32.totalorder %s193, %s207
      %p209 = scmp.eq.s32.totalorder %s31, 0
      %p210 = por %p208, %p209
      %s212 = sadd.s32 %s211, 1
      %p215 = scmp.eq.s32.totalorder %s25, 1
      %p216 = scmp.ne.s32.totalorder %s211, %s213
      %p217 = scmp.eq.s32.totalorder %s25, 0
      %p218 = por %p216, %p217
      %p219 = scmp.ne.s32.totalorder %s211, %s213
      %p220 = scmp.eq.s32.totalorder %s30, 1
      %p221 = por %p219, %p220
      %p222 = scmp.ne.s32.totalorder %s213, %s214
      %p223 = scmp.eq.s32.totalorder %s30, 0
      %p224 = por %p222, %p223
      %p225 = scmp.ne.s32.totalorder %s213, %s214
      %p226 = scmp.eq.s32.totalorder %s31, 1
      %p227 = por %p225, %p226
      %p229 = scmp.ne.s32.totalorder %s214, %s228
      %p230 = scmp.eq.s32.totalorder %s31, 0
      %p231 = por %p229, %p230
      %s233 = sadd.s32 %s232, 1
      %p236 = scmp.eq.s32.totalorder %s25, 1
      %p237 = scmp.ne.s32.totalorder %s232, %s234
      %p238 = scmp.eq.s32.totalorder %s25, 0
      %p239 = por %p237, %p238
      %p240 = scmp.ne.s32.totalorder %s232, %s234
      %p241 = scmp.eq.s32.totalorder %s30, 1
      %p242 = por %p240, %p241
      %p243 = scmp.ne.s32.totalorder %s234, %s235
      %p244 = scmp.eq.s32.totalorder %s30, 0
      %p245 = por %p243, %p244
      %p246 = scmp.ne.s32.totalorder %s234, %s235
      %p247 = scmp.eq.s32.totalorder %s31, 1
      %p248 = por %p246, %p247
      %p250 = scmp.ne.s32.totalorder %s235, %s249
      %p251 = scmp.eq.s32.totalorder %s31, 0
      %p252 = por %p250, %p251
      %s254 = sadd.s32 %s253, 1
      %p257 = scmp.eq.s32.totalorder %s25, 1
      %p258 = scmp.ne.s32.totalorder %s253, %s255
      %p259 = scmp.eq.s32.totalorder %s25, 0
      %p260 = por %p258, %p259
      %p261 = scmp.ne.s32.totalorder %s253, %s255
      %p262 = scmp.eq.s32.totalorder %s30, 1
      %p263 = por %p261, %p262
      %p264 = scmp.ne.s32.totalorder %s255, %s256
      %p265 = scmp.eq.s32.totalorder %s30, 0
      %p266 = por %p264, %p265
      %p267 = scmp.ne.s32.totalorder %s255, %s256
      %p268 = scmp.eq.s32.totalorder %s31, 1
      %p269 = por %p267, %p268
      %p271 = scmp.ne.s32.totalorder %s256, %s270
      %p272 = scmp.eq.s32.totalorder %s31, 0
      %p273 = por %p271, %p272
      %s275 = sadd.s32 %s274, 1
      %p278 = scmp.eq.s32.totalorder %s25, 1
      %p279 = scmp.ne.s32.totalorder %s274, %s276
      %p280 = scmp.eq.s32.totalorder %s25, 0
      %p281 = por %p279, %p280
      %p282 = scmp.ne.s32.totalorder %s274, %s276
      %p283 = scmp.eq.s32.totalorder %s30, 1
      %p284 = por %p282, %p283
      %p285 = scmp.ne.s32.totalorder %s276, %s277
      %p286 = scmp.eq.s32.totalorder %s30, 0
      %p287 = por %p285, %p286
      %p288 = scmp.ne.s32.totalorder %s276, %s277
      %p289 = scmp.eq.s32.totalorder %s31, 1
      %p290 = por %p288, %p289
      %p292 = scmp.ne.s32.totalorder %s277, %s291
      %p293 = scmp.eq.s32.totalorder %s31, 0
      %p294 = por %p292, %p293
      %s296 = sadd.s32 %s295, 1
      %p299 = scmp.eq.s32.totalorder %s25, 1
      %p300 = scmp.ne.s32.totalorder %s295, %s297
      %p301 = scmp.eq.s32.totalorder %s25, 0
      %p302 = por %p300, %p301
      %p303 = scmp.ne.s32.totalorder %s295, %s297
      %p304 = scmp.eq.s32.totalorder %s30, 1
      %p305 = por %p303, %p304
      %p306 = scmp.ne.s32.totalorder %s297, %s298
      %p307 = scmp.eq.s32.totalorder %s30, 0
      %p308 = por %p306, %p307
      %p309 = scmp.ne.s32.totalorder %s297, %s298
      %p310 = scmp.eq.s32.totalorder %s31, 1
      %p311 = por %p309, %p310
      %p313 = scmp.ne.s32.totalorder %s298, %s312
      %p314 = scmp.eq.s32.totalorder %s31, 0
      %p315 = por %p313, %p314
      %s317 = sadd.s32 %s316, 1
      %p320 = scmp.eq.s32.totalorder %s25, 1
      %p321 = scmp.ne.s32.totalorder %s316, %s318
      %p322 = scmp.eq.s32.totalorder %s25, 0
      %p323 = por %p321, %p322
      %p324 = scmp.ne.s32.totalorder %s316, %s318
      %p325 = scmp.eq.s32.totalorder %s30, 1
      %p326 = por %p324, %p325
      %p327 = scmp.ne.s32.totalorder %s318, %s319
      %p328 = scmp.eq.s32.totalorder %s30, 0
      %p329 = por %p327, %p328
      %p330 = scmp.ne.s32.totalorder %s318, %s319
      %p331 = scmp.eq.s32.totalorder %s31, 1
      %p332 = por %p330, %p331
      %p334 = scmp.ne.s32.totalorder %s319, %s333
      %p335 = scmp.eq.s32.totalorder %s31, 0
      %p336 = por %p334, %p335
      %s338 = sadd.s32 %s337, 1
      %p341 = scmp.eq.s32.totalorder %s25, 1
      %p342 = scmp.ne.s32.totalorder %s337, %s339
      %p343 = scmp.eq.s32.totalorder %s25, 0
      %p344 = por %p342, %p343
      %p345 = scmp.ne.s32.totalorder %s337, %s339
      %p346 = scmp.eq.s32.totalorder %s30, 1
      %p347 = por %p345, %p346
      %p348 = scmp.ne.s32.totalorder %s339, %s340
      %p349 = scmp.eq.s32.totalorder %s30, 0
      %p350 = por %p348, %p349
      %p351 = scmp.ne.s32.totalorder %s339, %s340
      %p352 = scmp.eq.s32.totalorder %s31, 1
      %p353 = por %p351, %p352
      %p355 = scmp.ne.s32.totalorder %s340, %s354
      %p356 = scmp.eq.s32.totalorder %s31, 0
      %p357 = por %p355, %p356
      %s359 = sadd.s32 %s358, 1
      %p362 = scmp.eq.s32.totalorder %s25, 1
      %p363 = scmp.ne.s32.totalorder %s358, %s360
      %p364 = scmp.eq.s32.totalorder %s25, 0
      %p365 = por %p363, %p364
      %p366 = scmp.ne.s32.totalorder %s358, %s360
      %p367 = scmp.eq.s32.totalorder %s30, 1
      %p368 = por %p366, %p367
      %p369 = scmp.ne.s32.totalorder %s360, %s361
      %p370 = scmp.eq.s32.totalorder %s30, 0
      %p371 = por %p369, %p370
      %p372 = scmp.ne.s32.totalorder %s360, %s361
      %p373 = scmp.eq.s32.totalorder %s31, 1
      %p374 = por %p372, %p373
      %p376 = scmp.ne.s32.totalorder %s361, %s375
      %p377 = scmp.eq.s32.totalorder %s31, 0
      %p378 = por %p376, %p377
      %s379 = ssub.s32 %s25, %s32
      %p380 = scmp.eq.s32.totalorder %s379, 0
      %s382 = sadd.s32 %s381, 1
      %s383 = scalar_select %p380, %s381, %s382
      %p386 = pneg %p380
      %p387 = scmp.eq.s32.totalorder %s25, 1
      %p388 = por %p386, %p387
      %p389 = scmp.ne.s32.totalorder %s381, %s384
      %p390 = scmp.eq.s32.totalorder %s25, 0
      %p391 = por %p389, %p390
      %p392 = scmp.ne.s32.totalorder %s381, %s384
      %p393 = scmp.eq.s32.totalorder %s30, 1
      %p394 = por %p392, %p393
      %p395 = scmp.ne.s32.totalorder %s384, %s385
      %p396 = scmp.eq.s32.totalorder %s30, 0
      %p397 = por %p395, %p396
      %p398 = scmp.ne.s32.totalorder %s384, %s385
      %p399 = scmp.eq.s32.totalorder %s31, 1
      %p400 = por %p398, %p399
      %p402 = scmp.ne.s32.totalorder %s385, %s401
      %p403 = scmp.eq.s32.totalorder %s31, 0
      %p404 = por %p402, %p403
      %p405 = scmp.le.s32.totalorder 1, %s25
      %p406 = scmp.lt.s32.totalorder %s25, 3
      %p407 = pnand %p405, %p406
      %p408 = pneg %p407
      // Predicated region
      $region9: #{resblock_forward_nhwc.1} parent=5 // pred_check
        _
      $region10: #{resblock_forward_nhwc.1} parent=5 // pred_check_branch
        %410 = sbr.rel (%p407) target = $region12
      $region11: #{resblock_forward_nhwc.1} parent=5 // pred_region
        %s411 = ssub.s32 %s25, 1
        // Predicated region
        $region13: #{resblock_forward_nhwc.1} parent=11 // pred_check
          %p412 = pneg %p98
        $region14: #{resblock_forward_nhwc.1} parent=11 // pred_check_branch
          %414 = sbr.rel (%p412) target = $region16
        $region15: #{resblock_forward_nhwc.1} parent=11 // pred_region
          _
        $region16: #{resblock_forward_nhwc.1} parent=11 // pred_fallthru
          _
        // Predicated region
        $region17: #{resblock_forward_nhwc.1} parent=11 // pred_check
          %p415 = pneg %p119
        $region18: #{resblock_forward_nhwc.1} parent=11 // pred_check_branch
          %417 = sbr.rel (%p415) target = $region20
        $region19: #{resblock_forward_nhwc.1} parent=11 // pred_region
          _
        $region20: #{resblock_forward_nhwc.1} parent=11 // pred_fallthru
          _
        // Predicated region
        $region21: #{resblock_forward_nhwc.1} parent=11 // pred_check
          %p418 = pneg %p140
        $region22: #{resblock_forward_nhwc.1} parent=11 // pred_check_branch
          %420 = sbr.rel (%p418) target = $region24
        $region23: #{resblock_forward_nhwc.1} parent=11 // pred_region
          _
        $region24: #{resblock_forward_nhwc.1} parent=11 // pred_fallthru
          _
        // Predicated region
        $region25: #{resblock_forward_nhwc.1} parent=11 // pred_check
          %p421 = pneg %p161
        $region26: #{resblock_forward_nhwc.1} parent=11 // pred_check_branch
          %423 = sbr.rel (%p421) target = $region28
        $region27: #{resblock_forward_nhwc.1} parent=11 // pred_region
          _
        $region28: #{resblock_forward_nhwc.1} parent=11 // pred_fallthru
          _
        // Predicated region
        $region29: #{resblock_forward_nhwc.1} parent=11 // pred_check
          %p424 = pneg %p182
        $region30: #{resblock_forward_nhwc.1} parent=11 // pred_check_branch
          %426 = sbr.rel (%p424) target = $region32
        $region31: #{resblock_forward_nhwc.1} parent=11 // pred_region
          _
        $region32: #{resblock_forward_nhwc.1} parent=11 // pred_fallthru
          _
        // Predicated region
        $region33: #{resblock_forward_nhwc.1} parent=11 // pred_check
          %p427 = pneg %p203
        $region34: #{resblock_forward_nhwc.1} parent=11 // pred_check_branch
          %429 = sbr.rel (%p427) target = $region36
        $region35: #{resblock_forward_nhwc.1} parent=11 // pred_region
          _
        $region36: #{resblock_forward_nhwc.1} parent=11 // pred_fallthru
          _
        // Predicated region
        $region37: #{resblock_forward_nhwc.1} parent=11 // pred_check
          %p430 = pneg %p224
        $region38: #{resblock_forward_nhwc.1} parent=11 // pred_check_branch
          %432 = sbr.rel (%p430) target = $region40
        $region39: #{resblock_forward_nhwc.1} parent=11 // pred_region
          _
        $region40: #{resblock_forward_nhwc.1} parent=11 // pred_fallthru
          _
        // Predicated region
        $region41: #{resblock_forward_nhwc.1} parent=11 // pred_check
          %p433 = pneg %p245
        $region42: #{resblock_forward_nhwc.1} parent=11 // pred_check_branch
          %435 = sbr.rel (%p433) target = $region44
        $region43: #{resblock_forward_nhwc.1} parent=11 // pred_region
          _
        $region44: #{resblock_forward_nhwc.1} parent=11 // pred_fallthru
          _
        // Predicated region
        $region45: #{resblock_forward_nhwc.1} parent=11 // pred_check
          %p436 = pneg %p266
        $region46: #{resblock_forward_nhwc.1} parent=11 // pred_check_branch
          %438 = sbr.rel (%p436) target = $region48
        $region47: #{resblock_forward_nhwc.1} parent=11 // pred_region
          _
        $region48: #{resblock_forward_nhwc.1} parent=11 // pred_fallthru
          _
        // Predicated region
        $region49: #{resblock_forward_nhwc.1} parent=11 // pred_check
          %p439 = pneg %p287
        $region50: #{resblock_forward_nhwc.1} parent=11 // pred_check_branch
          %441 = sbr.rel (%p439) target = $region52
        $region51: #{resblock_forward_nhwc.1} parent=11 // pred_region
          _
        $region52: #{resblock_forward_nhwc.1} parent=11 // pred_fallthru
          _
        // Predicated region
        $region53: #{resblock_forward_nhwc.1} parent=11 // pred_check
          %p442 = pneg %p308
        $region54: #{resblock_forward_nhwc.1} parent=11 // pred_check_branch
          %444 = sbr.rel (%p442) target = $region56
        $region55: #{resblock_forward_nhwc.1} parent=11 // pred_region
          _
        $region56: #{resblock_forward_nhwc.1} parent=11 // pred_fallthru
          _
        // Predicated region
        $region57: #{resblock_forward_nhwc.1} parent=11 // pred_check
          %p445 = pneg %p329
        $region58: #{resblock_forward_nhwc.1} parent=11 // pred_check_branch
          %447 = sbr.rel (%p445) target = $region60
        $region59: #{resblock_forward_nhwc.1} parent=11 // pred_region
          _
        $region60: #{resblock_forward_nhwc.1} parent=11 // pred_fallthru
          _
        // Predicated region
        $region61: #{resblock_forward_nhwc.1} parent=11 // pred_check
          %p448 = pneg %p350
        $region62: #{resblock_forward_nhwc.1} parent=11 // pred_check_branch
          %450 = sbr.rel (%p448) target = $region64
        $region63: #{resblock_forward_nhwc.1} parent=11 // pred_region
          _
        $region64: #{resblock_forward_nhwc.1} parent=11 // pred_fallthru
          _
        // Predicated region
        $region65: #{resblock_forward_nhwc.1} parent=11 // pred_check
          %p451 = pneg %p371
        $region66: #{resblock_forward_nhwc.1} parent=11 // pred_check_branch
          %453 = sbr.rel (%p451) target = $region68
        $region67: #{resblock_forward_nhwc.1} parent=11 // pred_region
          _
        $region68: #{resblock_forward_nhwc.1} parent=11 // pred_fallthru
          _
      $region12: #{resblock_forward_nhwc.1} parent=5 // pred_fallthru
        _
      %p454 = scmp.lt.s32.totalorder %s25, 2
      // Predicated region
      $region69: #{resblock_forward_nhwc.1} parent=5 // pred_check
        %p455 = pneg %p454
      $region70: #{resblock_forward_nhwc.1} parent=5 // pred_check_branch
        %457 = sbr.rel (%p455) target = $region72
      $region71: #{resblock_forward_nhwc.1} parent=5 // pred_region
        // Predicated region
        $region73: #{resblock_forward_nhwc.1} parent=71 // pred_check
          %p458 = pneg %p45
        $region74: #{resblock_forward_nhwc.1} parent=71 // pred_check_branch
          %460 = sbr.rel (%p458) target = $region76
        $region75: #{resblock_forward_nhwc.1} parent=71 // pred_region
          %p461 = scmp.lt.s32.totalorder %s25, 1
          %s462 = scalar_select %p461, %s25, 1
          %s463 = smul.addr %s462, 20
          %s464 = smul.addr %s463, 8
          %s465 = scalar_lea.vmem %s0, %s464
        $region76: #{resblock_forward_nhwc.1} parent=71 // pred_fallthru
          _
        // Predicated region
        $region77: #{resblock_forward_nhwc.1} parent=71 // pred_check
          %p466 = pneg %p71
        $region78: #{resblock_forward_nhwc.1} parent=71 // pred_check_branch
          %468 = sbr.rel (%p466) target = $region80
        $region79: #{resblock_forward_nhwc.1} parent=71 // pred_region
          %p469 = scmp.lt.s32.totalorder %s25, 1
          %s470 = scalar_select %p469, %s25, 1
          %s471 = scalar_lea.vmem %s1, %s470
        $region80: #{resblock_forward_nhwc.1} parent=71 // pred_fallthru
          _
      $region72: #{resblock_forward_nhwc.1} parent=5 // pred_fallthru
        _
      %p472 = scmp.le.s32.totalorder 1, %s25
      %p473 = scmp.lt.s32.totalorder %s25, 3
      %p474 = pnand %p472, %p473
      %p475 = pneg %p474
      // Predicated region
      $region81: #{resblock_forward_nhwc.1} parent=5 // pred_check
        _
      $region82: #{resblock_forward_nhwc.1} parent=5 // pred_check_branch
        %477 = sbr.rel (%p474) target = $region84
      $region83: #{resblock_forward_nhwc.1} parent=5 // pred_region
        %s478 = ssub.s32 %s25, 1
        %p479 = scmp.lt.s32.totalorder %s30, 1
        %s480 = scalar_select %p479, %s30, 1
        %s481 = smul.addr %s480, 20
        %s482 = smul.addr %s481, 8
        %s483 = scalar_lea.vmem %s0, %s482
        %p484 = pneg %p51
        %p485 = pneg %p48
        %p486 = scmp.lt.s32.totalorder %s30, 1
        %s487 = scalar_select %p486, %s30, 1
        %s488 = scalar_lea.vmem %s1, %s487
        %p489 = pneg %p77
        %p490 = pneg %p74
        %p491 = pneg %p98
        %p492 = pneg %p95
        %p493 = pneg %p119
        %p494 = pneg %p116
        %p495 = pneg %p140
        %p496 = pneg %p137
        %p497 = pneg %p161
        %p498 = pneg %p158
        %p499 = pneg %p182
        %p500 = pneg %p179
        %p501 = pneg %p203
        %p502 = pneg %p200
        %p503 = pneg %p224
        %p504 = pneg %p221
        %p505 = pneg %p245
        %p506 = pneg %p242
        %p507 = pneg %p266
        %p508 = pneg %p263
        %p509 = pneg %p287
        %p510 = pneg %p284
        %p511 = pneg %p308
        %p512 = pneg %p305
        %p513 = pneg %p329
        %p514 = pneg %p326
        %p515 = pneg %p350
        %p516 = pneg %p347
        %p517 = pneg %p371
        %p518 = pneg %p368
        %p519 = pneg %p397
        %p520 = pneg %p394
        %s521 = sand.u32 %s384, 1
        %s522 = scalar_lea.sflag [#allocation5], %s521
        %s523 = sand.u32 %s384, 1
        %s524 = smul.addr %s523, 64
        %s525 = scalar_lea.vmem [#allocation4], %s524
        %p526 = scmp.lt.s32.totalorder %s30, 1
        %s527 = scalar_select %p526, %s30, 1
        %s528 = smul.addr %s527, 20
        %s529 = smul.addr %s528, 8
        %s530 = scalar_lea.vmem %s0, %s529
        %p531 = scmp.lt.s32.totalorder %s30, 1
        %s532 = scalar_select %p531, %s30, 1
        %s533 = scalar_lea.vmem %s1, %s532
        %v535 = vld [vmem:[%s530] sm:$0xff]
        %v536 = vld [vmem:[%s530 + $0x8] sm:$0xff]
        %v537 = vld [vmem:[%s530 + $0x10] sm:$0xff]
        %v538 = vld [vmem:[%s530 + $0x18] sm:$0xff]
        %v539 = vld [vmem:[%s530 + $0x20] sm:$0xff]
        %v540 = vld [vmem:[%s530 + $0x28] sm:$0xff]
        %v541 = vld [vmem:[%s530 + $0x30] sm:$0xff]
        %v542 = vld [vmem:[%s530 + $0x38] sm:$0xff]
        %v543 = vld [vmem:[%s530 + $0x40] sm:$0xff]
        %v544 = vld [vmem:[%s530 + $0x48] sm:$0xff]
        %v545 = vld [vmem:[%s530 + $0x50] sm:$0xff]
        %v546 = vld [vmem:[%s530 + $0x58] sm:$0xff]
        %v547 = vld [vmem:[%s530 + $0x60] sm:$0xff]
        %v548 = vld [vmem:[%s530 + $0x68] sm:$0xff]
        %v549 = vld [vmem:[%s530 + $0x70] sm:$0xff]
        %v550 = vld [vmem:[%s530 + $0x78] sm:$0xff]
        %v551 = vld [vmem:[%s530 + $0x80] sm:$0xff]
        %v552 = vld [vmem:[%s530 + $0x88] sm:$0xff]
        %v553 = vld [vmem:[%s530 + $0x90] sm:$0xff]
        %v554 = vld [vmem:[%s530 + $0x98] sm:$0xff]
        %vm555 = vcmask 261120
        %v557 = vsel %vm555, 1.0, 0
        %559 = vmatprep.subr.mxu0 0.0
        %560 = vmatpush1.msra.mxu0 %v535
        %561 = vmatprep.subr.mxu0 0.0
        %562 = vmatpush1.msra.mxu0 %v536
        %563 = vmatprep.subr.mxu0 0.0
        %564 = vmatpush1.msra.mxu0 %v537
        %565 = vmatprep.subr.mxu0 0.0
        %566 = vmatpush1.msra.mxu0 %v538
        %567 = vmatprep.subr.mxu0 0.0
        %568 = vmatpush1.msra.mxu0 %v539
        %569 = vmatprep.subr.mxu0 0.0
        %570 = vmatpush1.msra.mxu0 %v540
        %571 = vmatprep.subr.mxu0 0.0
        %572 = vmatpush1.msra.mxu0 %v541
        %573 = vmatprep.subr.mxu0 0.0
        %574 = vmatpush1.msra.mxu0 %v542
        %575 = vmatprep.subr.mxu0 0.0
        %576 = vmatpush1.msra.mxu0 %v543
        %577 = vmatprep.subr.mxu0 0.0
        %578 = vmatpush1.msra.mxu0 %v544
        %579 = vmatprep.subr.mxu0 0.0
        %580 = vmatpush1.msra.mxu0 %v545
        %581 = vmatprep.subr.mxu0 0.0
        %582 = vmatpush1.msra.mxu0 %v546
        %583 = vmatprep.subr.mxu0 0.0
        %584 = vmatpush1.msra.mxu0 %v547
        %585 = vmatprep.subr.mxu0 0.0
        %586 = vmatpush1.msra.mxu0 %v548
        %587 = vmatprep.subr.mxu0 0.0
        %588 = vmatpush1.msra.mxu0 %v549
        %589 = vmatprep.subr.mxu0 0.0
        %590 = vmatpush1.msra.mxu0 %v550
        %591 = vmatprep.subr.mxu0 0.0
        %592 = vmatpush1.msra.mxu0 %v551
        %593 = vmatprep.subr.mxu0 0.0
        %594 = vmatpush1.msra.mxu0 %v552
        %595 = vmatprep.subr.mxu0 0.0
        %596 = vmatpush1.msra.mxu0 %v553
        %597 = vmatprep.subr.mxu0 0.0
        %598 = vmatpush1.msra.mxu0 %v554
        %599 = vmatprep.subr.mxu0 0.0
        %600 = vmatpush1.msra.mxu0 0.0
        %601 = vmatprep.subr.mxu0 0.0
        %602 = vmatpush1.msra.mxu0 0.0
        %603 = vmatprep.subr.mxu0 0.0
        %604 = vmatpush1.msra.mxu0 0.0
        %605 = vmatprep.subr.mxu0 0.0
        %606 = vmatpush1.msra.mxu0 0.0
        %607 = vmatprep.subr.mxu0 0.0
        %608 = vmatpush1.msra.mxu0 0.0
        %609 = vmatprep.subr.mxu0 0.0
        %610 = vmatpush1.msra.mxu0 0.0
        %611 = vmatprep.subr.mxu0 0.0
        %612 = vmatpush1.msra.mxu0 0.0
        %613 = vmatprep.subr.mxu0 0.0
        %614 = vmatpush1.msra.mxu0 0.0
        %615 = vmatprep.subr.mxu0 0.0
        %616 = vmatpush1.msra.mxu0 0.0
        %617 = vmatprep.subr.mxu0 0.0
        %618 = vmatpush1.msra.mxu0 0.0
        %619 = vmatprep.subr.mxu0 0.0
        %620 = vmatpush1.msra.mxu0 0.0
        %621 = vmatprep.subr.mxu0 0.0
        %622 = vmatpush1.msra.mxu0 0.0
        %623 = vmatprep.mubr.f32.mxu0 %v557
        %624 = vmatmul.mubr.f32.gmra.mrb[0].mxu0 1.0
        %v625 = vpop.f32.mrb[0].mxu0
        %v626 = vadd.f32 0.0, %v625
        %v627 = vpop.f32.mrb[0].mxu0
        %628 = vdwg.mxu0
        %v629 = vmul.f32 %v535, %v535
        %v630 = vmul.f32 %v536, %v536
        %v631 = vmul.f32 %v537, %v537
        %v632 = vmul.f32 %v538, %v538
        %v633 = vmul.f32 %v539, %v539
        %v634 = vmul.f32 %v540, %v540
        %v635 = vmul.f32 %v541, %v541
        %v636 = vmul.f32 %v542, %v542
        %v637 = vmul.f32 %v543, %v543
        %v638 = vmul.f32 %v544, %v544
        %v639 = vmul.f32 %v545, %v545
        %v640 = vmul.f32 %v546, %v546
        %v641 = vmul.f32 %v547, %v547
        %v642 = vmul.f32 %v548, %v548
        %v643 = vmul.f32 %v549, %v549
        %v644 = vmul.f32 %v550, %v550
        %v645 = vmul.f32 %v551, %v551
        %v646 = vmul.f32 %v552, %v552
        %v647 = vmul.f32 %v553, %v553
        %v648 = vmul.f32 %v554, %v554
        %649 = vmatprep.subr.mxu0 0.0
        %650 = vmatpush1.msra.mxu0 %v629
        %651 = vmatprep.subr.mxu0 0.0
        %652 = vmatpush1.msra.mxu0 %v630
        %653 = vmatprep.subr.mxu0 0.0
        %654 = vmatpush1.msra.mxu0 %v631
        %655 = vmatprep.subr.mxu0 0.0
        %656 = vmatpush1.msra.mxu0 %v632
        %657 = vmatprep.subr.mxu0 0.0
        %658 = vmatpush1.msra.mxu0 %v633
        %659 = vmatprep.subr.mxu0 0.0
        %660 = vmatpush1.msra.mxu0 %v634
        %661 = vmatprep.subr.mxu0 0.0
        %662 = vmatpush1.msra.mxu0 %v635
        %663 = vmatprep.subr.mxu0 0.0
        %664 = vmatpush1.msra.mxu0 %v636
        %665 = vmatprep.subr.mxu0 0.0
        %666 = vmatpush1.msra.mxu0 %v637
        %667 = vmatprep.subr.mxu0 0.0
        %668 = vmatpush1.msra.mxu0 %v638
        %669 = vmatprep.subr.mxu0 0.0
        %670 = vmatpush1.msra.mxu0 %v639
        %671 = vmatprep.subr.mxu0 0.0
        %672 = vmatpush1.msra.mxu0 %v640
        %673 = vmatprep.subr.mxu0 0.0
        %674 = vmatpush1.msra.mxu0 %v641
        %675 = vmatprep.subr.mxu0 0.0
        %676 = vmatpush1.msra.mxu0 %v642
        %677 = vmatprep.subr.mxu0 0.0
        %678 = vmatpush1.msra.mxu0 %v643
        %679 = vmatprep.subr.mxu0 0.0
        %680 = vmatpush1.msra.mxu0 %v644
        %681 = vmatprep.subr.mxu0 0.0
        %682 = vmatpush1.msra.mxu0 %v645
        %683 = vmatprep.subr.mxu0 0.0
        %684 = vmatpush1.msra.mxu0 %v646
        %685 = vmatprep.subr.mxu0 0.0
        %686 = vmatpush1.msra.mxu0 %v647
        %687 = vmatprep.subr.mxu0 0.0
        %688 = vmatpush1.msra.mxu0 %v648
        %689 = vmatprep.subr.mxu0 0.0
        %690 = vmatpush1.msra.mxu0 0.0
        %691 = vmatprep.subr.mxu0 0.0
        %692 = vmatpush1.msra.mxu0 0.0
        %693 = vmatprep.subr.mxu0 0.0
        %694 = vmatpush1.msra.mxu0 0.0
        %695 = vmatprep.subr.mxu0 0.0
        %696 = vmatpush1.msra.mxu0 0.0
        %697 = vmatprep.subr.mxu0 0.0
        %698 = vmatpush1.msra.mxu0 0.0
        %699 = vmatprep.subr.mxu0 0.0
        %700 = vmatpush1.msra.mxu0 0.0
        %701 = vmatprep.subr.mxu0 0.0
        %702 = vmatpush1.msra.mxu0 0.0
        %703 = vmatprep.subr.mxu0 0.0
        %704 = vmatpush1.msra.mxu0 0.0
        %705 = vmatprep.subr.mxu0 0.0
        %706 = vmatpush1.msra.mxu0 0.0
        %707 = vmatprep.subr.mxu0 0.0
        %708 = vmatpush1.msra.mxu0 0.0
        %709 = vmatprep.subr.mxu0 0.0
        %710 = vmatpush1.msra.mxu0 0.0
        %711 = vmatprep.subr.mxu0 0.0
        %712 = vmatpush1.msra.mxu0 0.0
        %713 = vmatprep.mubr.f32.mxu0 %v557
        %714 = vmatmul.mubr.f32.gmra.mrb[0].mxu0 1.0
        %v715 = vpop.f32.mrb[0].mxu0
        %v716 = vadd.f32 0.0, %v715
        %v717 = vpop.f32.mrb[0].mxu0
        %718 = vdwg.mxu0
        %v719 = vld [vmem:[%s12] sm:$0xff]
        %v720 = vld [vmem:[%s12 + $0x8] sm:$0xff]
        %v721 = vld [vmem:[%s12 + $0x10] sm:$0xff]
        %v722 = vld [vmem:[%s12 + $0x18] sm:$0xff]
        %v724 = vsel %vm555, %v626, 0
        %726 = vmatprep.subr.mxu0 0.0
        %727 = vmatpush1.msra.mxu0 %v719
        %728 = vmatprep.subr.mxu0 0.0
        %729 = vmatpush1.msra.mxu0 %v720
        %730 = vmatprep.subr.mxu0 0.0
        %731 = vmatpush1.msra.mxu0 %v721
        %732 = vmatprep.subr.mxu0 0.0
        %733 = vmatpush1.msra.mxu0 %v722
        %734 = vmatprep.subr.mxu0 0.0
        %735 = vmatpush1.msra.mxu0 0.0
        %736 = vmatprep.subr.mxu0 0.0
        %737 = vmatpush1.msra.mxu0 0.0
        %738 = vmatprep.subr.mxu0 0.0
        %739 = vmatpush1.msra.mxu0 0.0
        %740 = vmatprep.subr.mxu0 0.0
        %741 = vmatpush1.msra.mxu0 0.0
        %742 = vmatprep.subr.mxu0 0.0
        %743 = vmatpush1.msra.mxu0 0.0
        %744 = vmatprep.subr.mxu0 0.0
        %745 = vmatpush1.msra.mxu0 0.0
        %746 = vmatprep.subr.mxu0 0.0
        %747 = vmatpush1.msra.mxu0 0.0
        %748 = vmatprep.subr.mxu0 0.0
        %749 = vmatpush1.msra.mxu0 0.0
        %750 = vmatprep.subr.mxu0 0.0
        %751 = vmatpush1.msra.mxu0 0.0
        %752 = vmatprep.subr.mxu0 0.0
        %753 = vmatpush1.msra.mxu0 0.0
        %754 = vmatprep.subr.mxu0 0.0
        %755 = vmatpush1.msra.mxu0 0.0
        %756 = vmatprep.subr.mxu0 0.0
        %757 = vmatpush1.msra.mxu0 0.0
        %758 = vmatprep.subr.mxu0 0.0
        %759 = vmatpush1.msra.mxu0 0.0
        %760 = vmatprep.subr.mxu0 0.0
        %761 = vmatpush1.msra.mxu0 0.0
        %762 = vmatprep.subr.mxu0 0.0
        %763 = vmatpush1.msra.mxu0 0.0
        %764 = vmatprep.subr.mxu0 0.0
        %765 = vmatpush1.msra.mxu0 0.0
        %766 = vmatprep.subr.mxu0 0.0
        %767 = vmatpush1.msra.mxu0 0.0
        %768 = vmatprep.subr.mxu0 0.0
        %769 = vmatpush1.msra.mxu0 0.0
        %770 = vmatprep.subr.mxu0 0.0
        %771 = vmatpush1.msra.mxu0 0.0
        %772 = vmatprep.subr.mxu0 0.0
        %773 = vmatpush1.msra.mxu0 0.0
        %774 = vmatprep.subr.mxu0 0.0
        %775 = vmatpush1.msra.mxu0 0.0
        %776 = vmatprep.subr.mxu0 0.0
        %777 = vmatpush1.msra.mxu0 0.0
        %778 = vmatprep.subr.mxu0 0.0
        %779 = vmatpush1.msra.mxu0 0.0
        %780 = vmatprep.subr.mxu0 0.0
        %781 = vmatpush1.msra.mxu0 0.0
        %782 = vmatprep.subr.mxu0 0.0
        %783 = vmatpush1.msra.mxu0 0.0
        %784 = vmatprep.subr.mxu0 0.0
        %785 = vmatpush1.msra.mxu0 0.0
        %786 = vmatprep.subr.mxu0 0.0
        %787 = vmatpush1.msra.mxu0 0.0
        %788 = vmatprep.subr.mxu0 0.0
        %789 = vmatpush1.msra.mxu0 0.0
        %790 = vmatprep.mubr.f32.mxu0 0.0
        %791 = vmatmul.mubr.f32.gmra.mrb[0].mxu0 %v724
        %v792 = vpop.f32.mrb[0].mxu0
        %v793 = vadd.f32 0.0, %v792
        %v794 = vpop.f32.mrb[0].mxu0
        %795 = vdwg.mxu0
        %v796 = vrcp.pop 64.0
        %v797 = vmul.f32 %v793, %v796
        %v799 = vsel %vm555, %v716, 0
        %801 = vmatprep.subr.mxu0 0.0
        %802 = vmatpush1.msra.mxu0 %v719
        %803 = vmatprep.subr.mxu0 0.0
        %804 = vmatpush1.msra.mxu0 %v720
        %805 = vmatprep.subr.mxu0 0.0
        %806 = vmatpush1.msra.mxu0 %v721
        %807 = vmatprep.subr.mxu0 0.0
        %808 = vmatpush1.msra.mxu0 %v722
        %809 = vmatprep.subr.mxu0 0.0
        %810 = vmatpush1.msra.mxu0 0.0
        %811 = vmatprep.subr.mxu0 0.0
        %812 = vmatpush1.msra.mxu0 0.0
        %813 = vmatprep.subr.mxu0 0.0
        %814 = vmatpush1.msra.mxu0 0.0
        %815 = vmatprep.subr.mxu0 0.0
        %816 = vmatpush1.msra.mxu0 0.0
        %817 = vmatprep.subr.mxu0 0.0
        %818 = vmatpush1.msra.mxu0 0.0
        %819 = vmatprep.subr.mxu0 0.0
        %820 = vmatpush1.msra.mxu0 0.0
        %821 = vmatprep.subr.mxu0 0.0
        %822 = vmatpush1.msra.mxu0 0.0
        %823 = vmatprep.subr.mxu0 0.0
        %824 = vmatpush1.msra.mxu0 0.0
        %825 = vmatprep.subr.mxu0 0.0
        %826 = vmatpush1.msra.mxu0 0.0
        %827 = vmatprep.subr.mxu0 0.0
        %828 = vmatpush1.msra.mxu0 0.0
        %829 = vmatprep.subr.mxu0 0.0
        %830 = vmatpush1.msra.mxu0 0.0
        %831 = vmatprep.subr.mxu0 0.0
        %832 = vmatpush1.msra.mxu0 0.0
        %833 = vmatprep.subr.mxu0 0.0
        %834 = vmatpush1.msra.mxu0 0.0
        %835 = vmatprep.subr.mxu0 0.0
        %836 = vmatpush1.msra.mxu0 0.0
        %837 = vmatprep.subr.mxu0 0.0
        %838 = vmatpush1.msra.mxu0 0.0
        %839 = vmatprep.subr.mxu0 0.0
        %840 = vmatpush1.msra.mxu0 0.0
        %841 = vmatprep.subr.mxu0 0.0
        %842 = vmatpush1.msra.mxu0 0.0
        %843 = vmatprep.subr.mxu0 0.0
        %844 = vmatpush1.msra.mxu0 0.0
        %845 = vmatprep.subr.mxu0 0.0
        %846 = vmatpush1.msra.mxu0 0.0
        %847 = vmatprep.subr.mxu0 0.0
        %848 = vmatpush1.msra.mxu0 0.0
        %849 = vmatprep.subr.mxu0 0.0
        %850 = vmatpush1.msra.mxu0 0.0
        %851 = vmatprep.subr.mxu0 0.0
        %852 = vmatpush1.msra.mxu0 0.0
        %853 = vmatprep.subr.mxu0 0.0
        %854 = vmatpush1.msra.mxu0 0.0
        %855 = vmatprep.subr.mxu0 0.0
        %856 = vmatpush1.msra.mxu0 0.0
        %857 = vmatprep.subr.mxu0 0.0
        %858 = vmatpush1.msra.mxu0 0.0
        %859 = vmatprep.subr.mxu0 0.0
        %860 = vmatpush1.msra.mxu0 0.0
        %861 = vmatprep.subr.mxu0 0.0
        %862 = vmatpush1.msra.mxu0 0.0
        %863 = vmatprep.subr.mxu0 0.0
        %864 = vmatpush1.msra.mxu0 0.0
        %865 = vmatprep.mubr.f32.mxu0 0.0
        %866 = vmatmul.mubr.f32.gmra.mrb[0].mxu0 %v799
        %v867 = vpop.f32.mrb[0].mxu0
        %v868 = vadd.f32 0.0, %v867
        %v869 = vpop.f32.mrb[0].mxu0
        %870 = vdwg.mxu0
        %v871 = vmul.f32 %v868, %v796
        %v872 = vmul.f32 %v797, %v797
        %v873 = vsub.f32 %v871, %v872
        %v874 = vadd.f32 %v873, 1e-05
        %v875 = vrsqrt.pop %v874
        %v876 = vld [vmem:[%s13] sm:$0xff]
        %v877 = vld [vmem:[%s13 + $0x8] sm:$0xff]
        %v878 = vld [vmem:[%s13 + $0x10] sm:$0xff]
        %v879 = vld [vmem:[%s13 + $0x18] sm:$0xff]
        %v881 = vsel %vm555, %v797, 0
        %883 = vmatprep.subr.mxu0 0.0
        %884 = vmatpush1.msra.mxu0 %v876
        %885 = vmatprep.subr.mxu0 0.0
        %886 = vmatpush1.msra.mxu0 %v877
        %887 = vmatprep.subr.mxu0 0.0
        %888 = vmatpush1.msra.mxu0 %v878
        %889 = vmatprep.subr.mxu0 0.0
        %890 = vmatpush1.msra.mxu0 %v879
        %891 = vmatprep.subr.mxu0 0.0
        %892 = vmatpush1.msra.mxu0 0.0
        %893 = vmatprep.subr.mxu0 0.0
        %894 = vmatpush1.msra.mxu0 0.0
        %895 = vmatprep.subr.mxu0 0.0
        %896 = vmatpush1.msra.mxu0 0.0
        %897 = vmatprep.subr.mxu0 0.0
        %898 = vmatpush1.msra.mxu0 0.0
        %899 = vmatprep.subr.mxu0 0.0
        %900 = vmatpush1.msra.mxu0 0.0
        %901 = vmatprep.subr.mxu0 0.0
        %902 = vmatpush1.msra.mxu0 0.0
        %903 = vmatprep.subr.mxu0 0.0
        %904 = vmatpush1.msra.mxu0 0.0
        %905 = vmatprep.subr.mxu0 0.0
        %906 = vmatpush1.msra.mxu0 0.0
        %907 = vmatprep.subr.mxu0 0.0
        %908 = vmatpush1.msra.mxu0 0.0
        %909 = vmatprep.subr.mxu0 0.0
        %910 = vmatpush1.msra.mxu0 0.0
        %911 = vmatprep.subr.mxu0 0.0
        %912 = vmatpush1.msra.mxu0 0.0
        %913 = vmatprep.subr.mxu0 0.0
        %914 = vmatpush1.msra.mxu0 0.0
        %915 = vmatprep.subr.mxu0 0.0
        %916 = vmatpush1.msra.mxu0 0.0
        %917 = vmatprep.subr.mxu0 0.0
        %918 = vmatpush1.msra.mxu0 0.0
        %919 = vmatprep.subr.mxu0 0.0
        %920 = vmatpush1.msra.mxu0 0.0
        %921 = vmatprep.subr.mxu0 0.0
        %922 = vmatpush1.msra.mxu0 0.0
        %923 = vmatprep.subr.mxu0 0.0
        %924 = vmatpush1.msra.mxu0 0.0
        %925 = vmatprep.subr.mxu0 0.0
        %926 = vmatpush1.msra.mxu0 0.0
        %927 = vmatprep.subr.mxu0 0.0
        %928 = vmatpush1.msra.mxu0 0.0
        %929 = vmatprep.subr.mxu0 0.0
        %930 = vmatpush1.msra.mxu0 0.0
        %931 = vmatprep.subr.mxu0 0.0
        %932 = vmatpush1.msra.mxu0 0.0
        %933 = vmatprep.subr.mxu0 0.0
        %934 = vmatpush1.msra.mxu0 0.0
        %935 = vmatprep.subr.mxu0 0.0
        %936 = vmatpush1.msra.mxu0 0.0
        %937 = vmatprep.subr.mxu0 0.0
        %938 = vmatpush1.msra.mxu0 0.0
        %939 = vmatprep.subr.mxu0 0.0
        %940 = vmatpush1.msra.mxu0 0.0
        %941 = vmatprep.subr.mxu0 0.0
        %942 = vmatpush1.msra.mxu0 0.0
        %943 = vmatprep.subr.mxu0 0.0
        %944 = vmatpush1.msra.mxu0 0.0
        %945 = vmatprep.subr.mxu0 0.0
        %946 = vmatpush1.msra.mxu0 0.0
        %947 = vmatprep.mubr.f32.mxu0 0.0
        %948 = vmatmul.mubr.f32.gmra.mrb[0].mxu0 %v881
        %v949 = vpop.f32.mrb[0].mxu0
        %v950 = vadd.f32 0.0, %v949
        %v951 = vpop.f32.mrb[0].mxu0
        %952 = vdwg.mxu0
        %v954 = vsel %vm555, %v875, 0
        %956 = vmatprep.subr.mxu0 0.0
        %957 = vmatpush1.msra.mxu0 %v876
        %958 = vmatprep.subr.mxu0 0.0
        %959 = vmatpush1.msra.mxu0 %v877
        %960 = vmatprep.subr.mxu0 0.0
        %961 = vmatpush1.msra.mxu0 %v878
        %962 = vmatprep.subr.mxu0 0.0
        %963 = vmatpush1.msra.mxu0 %v879
        %964 = vmatprep.subr.mxu0 0.0
        %965 = vmatpush1.msra.mxu0 0.0
        %966 = vmatprep.subr.mxu0 0.0
        %967 = vmatpush1.msra.mxu0 0.0
        %968 = vmatprep.subr.mxu0 0.0
        %969 = vmatpush1.msra.mxu0 0.0
        %970 = vmatprep.subr.mxu0 0.0
        %971 = vmatpush1.msra.mxu0 0.0
        %972 = vmatprep.subr.mxu0 0.0
        %973 = vmatpush1.msra.mxu0 0.0
        %974 = vmatprep.subr.mxu0 0.0
        %975 = vmatpush1.msra.mxu0 0.0
        %976 = vmatprep.subr.mxu0 0.0
        %977 = vmatpush1.msra.mxu0 0.0
        %978 = vmatprep.subr.mxu0 0.0
        %979 = vmatpush1.msra.mxu0 0.0
        %980 = vmatprep.subr.mxu0 0.0
        %981 = vmatpush1.msra.mxu0 0.0
        %982 = vmatprep.subr.mxu0 0.0
        %983 = vmatpush1.msra.mxu0 0.0
        %984 = vmatprep.subr.mxu0 0.0
        %985 = vmatpush1.msra.mxu0 0.0
        %986 = vmatprep.subr.mxu0 0.0
        %987 = vmatpush1.msra.mxu0 0.0
        %988 = vmatprep.subr.mxu0 0.0
        %989 = vmatpush1.msra.mxu0 0.0
        %990 = vmatprep.subr.mxu0 0.0
        %991 = vmatpush1.msra.mxu0 0.0
        %992 = vmatprep.subr.mxu0 0.0
        %993 = vmatpush1.msra.mxu0 0.0
        %994 = vmatprep.subr.mxu0 0.0
        %995 = vmatpush1.msra.mxu0 0.0
        %996 = vmatprep.subr.mxu0 0.0
        %997 = vmatpush1.msra.mxu0 0.0
        %998 = vmatprep.subr.mxu0 0.0
        %999 = vmatpush1.msra.mxu0 0.0
        %1000 = vmatprep.subr.mxu0 0.0
        %1001 = vmatpush1.msra.mxu0 0.0
        %1002 = vmatprep.subr.mxu0 0.0
        %1003 = vmatpush1.msra.mxu0 0.0
        %1004 = vmatprep.subr.mxu0 0.0
        %1005 = vmatpush1.msra.mxu0 0.0
        %1006 = vmatprep.subr.mxu0 0.0
        %1007 = vmatpush1.msra.mxu0 0.0
        %1008 = vmatprep.subr.mxu0 0.0
        %1009 = vmatpush1.msra.mxu0 0.0
        %1010 = vmatprep.subr.mxu0 0.0
        %1011 = vmatpush1.msra.mxu0 0.0
        %1012 = vmatprep.subr.mxu0 0.0
        %1013 = vmatpush1.msra.mxu0 0.0
        %1014 = vmatprep.subr.mxu0 0.0
        %1015 = vmatpush1.msra.mxu0 0.0
        %1016 = vmatprep.subr.mxu0 0.0
        %1017 = vmatpush1.msra.mxu0 0.0
        %1018 = vmatprep.subr.mxu0 0.0
        %1019 = vmatpush1.msra.mxu0 0.0
        %1020 = vmatprep.mubr.f32.mxu0 0.0
        %1021 = vmatmul.mubr.f32.gmra.mrb[0].mxu0 %v954
        %v1022 = vpop.f32.mrb[0].mxu0
        %v1023 = vadd.f32 0.0, %v1022
        %v1024 = vpop.f32.mrb[0].mxu0
        %1025 = vdwg.mxu0
        %v1026 = vld [vmem:[%s4] sm:$0x1]
        %v1027 = vmul.f32 %v1023, %v1026
        %v1028 = vld [vmem:[%s5] sm:$0x1]
        %v1029 = vmul.f32 %v950, %v1027
        %v1030 = vsub.f32 %v1028, %v1029
        %v1031 = vld [vmem:[%s2] sm:$0xff]
        %v1032 = vld [vmem:[%s2 + $0x8] sm:$0xff]
        %v1033 = vld [vmem:[%s2 + $0x10] sm:$0xff]
        %v1034 = vld [vmem:[%s2 + $0x18] sm:$0xff]
        %v1035 = vld [vmem:[%s2 + $0x20] sm:$0xff]
        %v1036 = vld [vmem:[%s2 + $0x28] sm:$0xff]
        %v1037 = vld [vmem:[%s2 + $0x30] sm:$0xff]
        %v1038 = vld [vmem:[%s2 + $0x38] sm:$0xff]
        %v1039 = vld [vmem:[%s2 + $0x40] sm:$0xff]
        %v1040 = vld [vmem:[%s2 + $0x48] sm:$0xff]
        %v1041 = vld [vmem:[%s2 + $0x50] sm:$0xff]
        %v1042 = vld [vmem:[%s2 + $0x58] sm:$0xff]
        %v1043 = vld [vmem:[%s2 + $0x60] sm:$0xff]
        %v1044 = vld [vmem:[%s2 + $0x68] sm:$0xff]
        %v1045 = vld [vmem:[%s2 + $0x70] sm:$0xff]
        %v1046 = vld [vmem:[%s2 + $0x78] sm:$0xff]
        %v1047 = vld [vmem:[%s2 + $0x80] sm:$0xff]
        %v1048 = vld [vmem:[%s2 + $0x88] sm:$0xff]
        %v1049 = vld [vmem:[%s2 + $0x90] sm:$0xff]
        %v1050 = vld [vmem:[%s2 + $0x98] sm:$0xff]
        %v1051 = vlaneseq
        %v1052 = vshrl.u32 %v1051, 7
        %v1053 = vsub.s32 0, %v1052
        %v1054 = vrot.slane %v1027, %v1053
        %v1055 = vmul.f32 %v535, %v1054
        %v1056 = vmul.f32 %v536, %v1054
        %v1057 = vmul.f32 %v537, %v1054
        %v1058 = vmul.f32 %v538, %v1054
        %v1059 = vmul.f32 %v539, %v1054
        %v1060 = vmul.f32 %v540, %v1054
        %v1061 = vmul.f32 %v541, %v1054
        %v1062 = vmul.f32 %v542, %v1054
        %v1063 = vmul.f32 %v543, %v1054
        %v1064 = vmul.f32 %v544, %v1054
        %v1065 = vmul.f32 %v545, %v1054
        %v1066 = vmul.f32 %v546, %v1054
        %v1067 = vmul.f32 %v547, %v1054
        %v1068 = vmul.f32 %v548, %v1054
        %v1069 = vmul.f32 %v549, %v1054
        %v1070 = vmul.f32 %v550, %v1054
        %v1071 = vmul.f32 %v551, %v1054
        %v1072 = vmul.f32 %v552, %v1054
        %v1073 = vmul.f32 %v553, %v1054
        %v1074 = vmul.f32 %v554, %v1054
        %v1076 = vlaneseq
        %v1077 = vshrl.u32 %v1076, 7
        %v1078 = vsub.s32 0, %v1077
        %v1079 = vrot.slane %v1030, %v1078
        %v1081 = vadd.f32 %v1055, %v1079
        %v1082 = vadd.f32 %v1056, %v1079
        %v1083 = vadd.f32 %v1057, %v1079
        %v1084 = vadd.f32 %v1058, %v1079
        %v1085 = vadd.f32 %v1059, %v1079
        %v1086 = vadd.f32 %v1060, %v1079
        %v1087 = vadd.f32 %v1061, %v1079
        %v1088 = vadd.f32 %v1062, %v1079
        %v1089 = vadd.f32 %v1063, %v1079
        %v1090 = vadd.f32 %v1064, %v1079
        %v1091 = vadd.f32 %v1065, %v1079
        %v1092 = vadd.f32 %v1066, %v1079
        %v1093 = vadd.f32 %v1067, %v1079
        %v1094 = vadd.f32 %v1068, %v1079
        %v1095 = vadd.f32 %v1069, %v1079
        %v1096 = vadd.f32 %v1070, %v1079
        %v1097 = vadd.f32 %v1071, %v1079
        %v1098 = vadd.f32 %v1072, %v1079
        %v1099 = vadd.f32 %v1073, %v1079
        %v1100 = vadd.f32 %v1074, %v1079
        %v1101 = vxor.u32 %v1081, 2147483648
        %v1102 = vxor.u32 %v1082, 2147483648
        %v1103 = vxor.u32 %v1083, 2147483648
        %v1104 = vxor.u32 %v1084, 2147483648
        %v1105 = vxor.u32 %v1085, 2147483648
        %v1106 = vxor.u32 %v1086, 2147483648
        %v1107 = vxor.u32 %v1087, 2147483648
        %v1108 = vxor.u32 %v1088, 2147483648
        %v1109 = vxor.u32 %v1089, 2147483648
        %v1110 = vxor.u32 %v1090, 2147483648
        %v1111 = vxor.u32 %v1091, 2147483648
        %v1112 = vxor.u32 %v1092, 2147483648
        %v1113 = vxor.u32 %v1093, 2147483648
        %v1114 = vxor.u32 %v1094, 2147483648
        %v1115 = vxor.u32 %v1095, 2147483648
        %v1116 = vxor.u32 %v1096, 2147483648
        %v1117 = vxor.u32 %v1097, 2147483648
        %v1118 = vxor.u32 %v1098, 2147483648
        %v1119 = vxor.u32 %v1099, 2147483648
        %v1120 = vxor.u32 %v1100, 2147483648
        %v1121 = vmul.f32 %v1101, 1.442695
        %v1122 = vpow.pop %v1121
        %v1123 = vmul.f32 %v1102, 1.442695
        %v1124 = vpow.pop %v1123
        %v1125 = vmul.f32 %v1103, 1.442695
        %v1126 = vpow.pop %v1125
        %v1127 = vmul.f32 %v1104, 1.442695
        %v1128 = vpow.pop %v1127
        %v1129 = vmul.f32 %v1105, 1.442695
        %v1130 = vpow.pop %v1129
        %v1131 = vmul.f32 %v1106, 1.442695
        %v1132 = vpow.pop %v1131
        %v1133 = vmul.f32 %v1107, 1.442695
        %v1134 = vpow.pop %v1133
        %v1135 = vmul.f32 %v1108, 1.442695
        %v1136 = vpow.pop %v1135
        %v1137 = vmul.f32 %v1109, 1.442695
        %v1138 = vpow.pop %v1137
        %v1139 = vmul.f32 %v1110, 1.442695
        %v1140 = vpow.pop %v1139
        %v1141 = vmul.f32 %v1111, 1.442695
        %v1142 = vpow.pop %v1141
        %v1143 = vmul.f32 %v1112, 1.442695
        %v1144 = vpow.pop %v1143
        %v1145 = vmul.f32 %v1113, 1.442695
        %v1146 = vpow.pop %v1145
        %v1147 = vmul.f32 %v1114, 1.442695
        %v1148 = vpow.pop %v1147
        %v1149 = vmul.f32 %v1115, 1.442695
        %v1150 = vpow.pop %v1149
        %v1151 = vmul.f32 %v1116, 1.442695
        %v1152 = vpow.pop %v1151
        %v1153 = vmul.f32 %v1117, 1.442695
        %v1154 = vpow.pop %v1153
        %v1155 = vmul.f32 %v1118, 1.442695
        %v1156 = vpow.pop %v1155
        %v1157 = vmul.f32 %v1119, 1.442695
        %v1158 = vpow.pop %v1157
        %v1159 = vmul.f32 %v1120, 1.442695
        %v1160 = vpow.pop %v1159
        %v1161 = vadd.f32 %v1122, 1.0
        %v1162 = vadd.f32 %v1124, 1.0
        %v1163 = vadd.f32 %v1126, 1.0
        %v1164 = vadd.f32 %v1128, 1.0
        %v1165 = vadd.f32 %v1130, 1.0
        %v1166 = vadd.f32 %v1132, 1.0
        %v1167 = vadd.f32 %v1134, 1.0
        %v1168 = vadd.f32 %v1136, 1.0
        %v1169 = vadd.f32 %v1138, 1.0
        %v1170 = vadd.f32 %v1140, 1.0
        %v1171 = vadd.f32 %v1142, 1.0
        %v1172 = vadd.f32 %v1144, 1.0
        %v1173 = vadd.f32 %v1146, 1.0
        %v1174 = vadd.f32 %v1148, 1.0
        %v1175 = vadd.f32 %v1150, 1.0
        %v1176 = vadd.f32 %v1152, 1.0
        %v1177 = vadd.f32 %v1154, 1.0
        %v1178 = vadd.f32 %v1156, 1.0
        %v1179 = vadd.f32 %v1158, 1.0
        %v1180 = vadd.f32 %v1160, 1.0
        %v1181 = vrcp.pop %v1161
        %v1182 = vmul.f32 1.0, %v1181
        %v1183 = vrcp.pop %v1162
        %v1184 = vmul.f32 1.0, %v1183
        %v1185 = vrcp.pop %v1163
        %v1186 = vmul.f32 1.0, %v1185
        %v1187 = vrcp.pop %v1164
        %v1188 = vmul.f32 1.0, %v1187
        %v1189 = vrcp.pop %v1165
        %v1190 = vmul.f32 1.0, %v1189
        %v1191 = vrcp.pop %v1166
        %v1192 = vmul.f32 1.0, %v1191
        %v1193 = vrcp.pop %v1167
        %v1194 = vmul.f32 1.0, %v1193
        %v1195 = vrcp.pop %v1168
        %v1196 = vmul.f32 1.0, %v1195
        %v1197 = vrcp.pop %v1169
        %v1198 = vmul.f32 1.0, %v1197
        %v1199 = vrcp.pop %v1170
        %v1200 = vmul.f32 1.0, %v1199
        %v1201 = vrcp.pop %v1171
        %v1202 = vmul.f32 1.0, %v1201
        %v1203 = vrcp.pop %v1172
        %v1204 = vmul.f32 1.0, %v1203
        %v1205 = vrcp.pop %v1173
        %v1206 = vmul.f32 1.0, %v1205
        %v1207 = vrcp.pop %v1174
        %v1208 = vmul.f32 1.0, %v1207
        %v1209 = vrcp.pop %v1175
        %v1210 = vmul.f32 1.0, %v1209
        %v1211 = vrcp.pop %v1176
        %v1212 = vmul.f32 1.0, %v1211
        %v1213 = vrcp.pop %v1177
        %v1214 = vmul.f32 1.0, %v1213
        %v1215 = vrcp.pop %v1178
        %v1216 = vmul.f32 1.0, %v1215
        %v1217 = vrcp.pop %v1179
        %v1218 = vmul.f32 1.0, %v1217
        %v1219 = vrcp.pop %v1180
        %v1220 = vmul.f32 1.0, %v1219
        %v1221 = vmul.f32 %v1081, %v1182
        %v1222 = vmul.f32 %v1082, %v1184
        %v1223 = vmul.f32 %v1083, %v1186
        %v1224 = vmul.f32 %v1084, %v1188
        %v1225 = vmul.f32 %v1085, %v1190
        %v1226 = vmul.f32 %v1086, %v1192
        %v1227 = vmul.f32 %v1087, %v1194
        %v1228 = vmul.f32 %v1088, %v1196
        %v1229 = vmul.f32 %v1089, %v1198
        %v1230 = vmul.f32 %v1090, %v1200
        %v1231 = vmul.f32 %v1091, %v1202
        %v1232 = vmul.f32 %v1092, %v1204
        %v1233 = vmul.f32 %v1093, %v1206
        %v1234 = vmul.f32 %v1094, %v1208
        %v1235 = vmul.f32 %v1095, %v1210
        %v1236 = vmul.f32 %v1096, %v1212
        %v1237 = vmul.f32 %v1097, %v1214
        %v1238 = vmul.f32 %v1098, %v1216
        %v1239 = vmul.f32 %v1099, %v1218
        %v1240 = vmul.f32 %v1100, %v1220
        %1242 = vset.pattern.permute.xlu0 0
        %1243 = vperm.xlu0 %1242, %v1031
        %v1244 = vpop.permute.xlu0 %1243
        %1247 = vset.pattern.permute.xlu0 0
        %1248 = vperm.xlu0 %1247, %v1032
        %v1249 = vpop.permute.xlu0 %1248
        %1252 = vset.pattern.permute.xlu0 0
        %1253 = vperm.xlu0 %1252, %v1033
        %v1254 = vpop.permute.xlu0 %1253
        %1257 = vset.pattern.permute.xlu0 0
        %1258 = vperm.xlu0 %1257, %v1034
        %v1259 = vpop.permute.xlu0 %1258
        %1262 = vset.pattern.permute.xlu0 0
        %1263 = vperm.xlu0 %1262, %v1035
        %v1264 = vpop.permute.xlu0 %1263
        %1267 = vset.pattern.permute.xlu0 0
        %1268 = vperm.xlu0 %1267, %v1036
        %v1269 = vpop.permute.xlu0 %1268
        %1272 = vset.pattern.permute.xlu0 0
        %1273 = vperm.xlu0 %1272, %v1037
        %v1274 = vpop.permute.xlu0 %1273
        %1277 = vset.pattern.permute.xlu0 0
        %1278 = vperm.xlu0 %1277, %v1038
        %v1279 = vpop.permute.xlu0 %1278
        %1282 = vset.pattern.permute.xlu0 0
        %1283 = vperm.xlu0 %1282, %v1039
        %v1284 = vpop.permute.xlu0 %1283
        %1287 = vset.pattern.permute.xlu0 0
        %1288 = vperm.xlu0 %1287, %v1040
        %v1289 = vpop.permute.xlu0 %1288
        %1292 = vset.pattern.permute.xlu0 0
        %1293 = vperm.xlu0 %1292, %v1041
        %v1294 = vpop.permute.xlu0 %1293
        %1297 = vset.pattern.permute.xlu0 0
        %1298 = vperm.xlu0 %1297, %v1042
        %v1299 = vpop.permute.xlu0 %1298
        %1302 = vset.pattern.permute.xlu0 0
        %1303 = vperm.xlu0 %1302, %v1043
        %v1304 = vpop.permute.xlu0 %1303
        %1307 = vset.pattern.permute.xlu0 0
        %1308 = vperm.xlu0 %1307, %v1044
        %v1309 = vpop.permute.xlu0 %1308
        %1312 = vset.pattern.permute.xlu0 0
        %1313 = vperm.xlu0 %1312, %v1045
        %v1314 = vpop.permute.xlu0 %1313
        %1317 = vset.pattern.permute.xlu0 0
        %1318 = vperm.xlu0 %1317, %v1046
        %v1319 = vpop.permute.xlu0 %1318
        %1322 = vset.pattern.permute.xlu0 0
        %1323 = vperm.xlu0 %1322, %v1047
        %v1324 = vpop.permute.xlu0 %1323
        %1327 = vset.pattern.permute.xlu0 0
        %1328 = vperm.xlu0 %1327, %v1048
        %v1329 = vpop.permute.xlu0 %1328
        %1332 = vset.pattern.permute.xlu0 0
        %1333 = vperm.xlu0 %1332, %v1049
        %v1334 = vpop.permute.xlu0 %1333
        %1337 = vset.pattern.permute.xlu0 0
        %1338 = vperm.xlu0 %1337, %v1050
        %v1339 = vpop.permute.xlu0 %1338
        %v1341 = vmul.f32 %v1244, %v1221
        %v1342 = vmul.f32 %v1249, %v1222
        %v1343 = vmul.f32 %v1254, %v1223
        %v1344 = vmul.f32 %v1259, %v1224
        %v1345 = vmul.f32 %v1264, %v1225
        %v1346 = vmul.f32 %v1269, %v1226
        %v1347 = vmul.f32 %v1274, %v1227
        %v1348 = vmul.f32 %v1279, %v1228
        %v1349 = vmul.f32 %v1284, %v1229
        %v1350 = vmul.f32 %v1289, %v1230
        %v1351 = vmul.f32 %v1294, %v1231
        %v1352 = vmul.f32 %v1299, %v1232
        %v1353 = vmul.f32 %v1304, %v1233
        %v1354 = vmul.f32 %v1309, %v1234
        %v1355 = vmul.f32 %v1314, %v1235
        %v1356 = vmul.f32 %v1319, %v1236
        %v1357 = vmul.f32 %v1324, %v1237
        %v1358 = vmul.f32 %v1329, %v1238
        %v1359 = vmul.f32 %v1334, %v1239
        %v1360 = vmul.f32 %v1339, %v1240
        %v1361 = vpack.c.bf16 %v1342, %v1341
        %v1362 = vpack.c.bf16 %v1344, %v1343
        %v1363 = vpack.c.bf16 %v1346, %v1345
        %v1364 = vpack.c.bf16 %v1348, %v1347
        %v1365 = vpack.c.bf16 %v1350, %v1349
        %v1366 = vpack.c.bf16 %v1352, %v1351
        %v1367 = vpack.c.bf16 %v1354, %v1353
        %v1368 = vpack.c.bf16 %v1356, %v1355
        %v1369 = vpack.c.bf16 %v1358, %v1357
        %v1370 = vpack.c.bf16 %v1360, %v1359
        %vm1371 = vcmask 785412
        %1372 = vst.msk [vmem:[#allocation2 + $0x48] sm:$0xf0] %vm1371, 0
        %1373 = vst.msk [vmem:[#allocation2] sm:$0xff] %vm555, %v1361
        %1374 = vst.msk [vmem:[#allocation2 + $0x8] sm:$0xff] %vm555, %v1362
        %1375 = vst.msk [vmem:[#allocation2 + $0x10] sm:$0xff] %vm555, %v1363
        %1376 = vst.msk [vmem:[#allocation2 + $0x18] sm:$0xff] %vm555, %v1364
        %1377 = vst.msk [vmem:[#allocation2 + $0x20] sm:$0xff] %vm555, %v1365
        %1378 = vst.msk [vmem:[#allocation2 + $0x28] sm:$0xff] %vm555, %v1366
        %1379 = vst.msk [vmem:[#allocation2 + $0x30] sm:$0xff] %vm555, %v1367
        %1380 = vst.msk [vmem:[#allocation2 + $0x38] sm:$0xff] %vm555, %v1368
        %1381 = vst.msk [vmem:[#allocation2 + $0x40] sm:$0xff] %vm555, %v1369
        %1382 = vst.msk [vmem:[#allocation2 + $0x48] sm:$0xff] %vm555, %v1370
        %vm1383 = vsmask.f32 7424
        %v1385 = vshrl.u32 %v1361, 16
        %v1387 = vshll.u32 %v1361, 16
        %v1389 = vrot.slane %v1387, 1
        %v1390 = vor.u32 %v1385, %v1389
        %v1392 = vshll.u32 %v1362, 16
        %v1394 = vrot.slane %v1392, 1
        %v1395 = vsel %vm1383, %v1390, %v1394
        %v1396 = vshrl.u32 %v1362, 16
        %v1398 = vor.u32 %v1396, %v1394
        %v1400 = vshll.u32 %v1363, 16
        %v1402 = vrot.slane %v1400, 1
        %v1403 = vsel %vm1383, %v1398, %v1402
        %v1404 = vshrl.u32 %v1363, 16
        %v1406 = vor.u32 %v1404, %v1402
        %v1408 = vshll.u32 %v1364, 16
        %v1410 = vrot.slane %v1408, 1
        %v1411 = vsel %vm1383, %v1406, %v1410
        %v1412 = vshrl.u32 %v1364, 16
        %v1414 = vor.u32 %v1412, %v1410
        %v1416 = vshll.u32 %v1365, 16
        %v1418 = vrot.slane %v1416, 1
        %v1419 = vsel %vm1383, %v1414, %v1418
        %v1420 = vshrl.u32 %v1365, 16
        %v1422 = vor.u32 %v1420, %v1418
        %v1424 = vshll.u32 %v1366, 16
        %v1426 = vrot.slane %v1424, 1
        %v1427 = vsel %vm1383, %v1422, %v1426
        %v1428 = vshrl.u32 %v1366, 16
        %v1430 = vor.u32 %v1428, %v1426
        %v1432 = vshll.u32 %v1367, 16
        %v1434 = vrot.slane %v1432, 1
        %v1435 = vsel %vm1383, %v1430, %v1434
        %v1436 = vshrl.u32 %v1367, 16
        %v1438 = vor.u32 %v1436, %v1434
        %v1440 = vshll.u32 %v1368, 16
        %v1442 = vrot.slane %v1440, 1
        %v1443 = vsel %vm1383, %v1438, %v1442
        %v1444 = vshrl.u32 %v1368, 16
        %v1446 = vor.u32 %v1444, %v1442
        %v1448 = vshll.u32 %v1369, 16
        %v1450 = vrot.slane %v1448, 1
        %v1451 = vsel %vm1383, %v1446, %v1450
        %v1452 = vshrl.u32 %v1369, 16
        %v1454 = vor.u32 %v1452, %v1450
        %v1456 = vshll.u32 %v1370, 16
        %v1458 = vrot.slane %v1456, 1
        %v1459 = vsel %vm1383, %v1454, %v1458
        %v1460 = vshrl.u32 %v1370, 16
        %v1462 = vor.u32 %v1460, %v1458
        %1463 = vrot.lane.b32.xlu0 %v1395, 32
        %v1464 = vpop.permute.xlu0 %1463
        %1465 = vrot.lane.b32.xlu0 %v1403, 32
        %v1466 = vpop.permute.xlu0 %1465
        %1467 = vrot.lane.b32.xlu0 %v1411, 32
        %v1468 = vpop.permute.xlu0 %1467
        %1469 = vrot.lane.b32.xlu0 %v1419, 32
        %v1470 = vpop.permute.xlu0 %1469
        %1471 = vrot.lane.b32.xlu0 %v1427, 32
        %v1472 = vpop.permute.xlu0 %1471
        %1473 = vrot.lane.b32.xlu0 %v1435, 32
        %v1474 = vpop.permute.xlu0 %1473
        %1475 = vrot.lane.b32.xlu0 %v1443, 32
        %v1476 = vpop.permute.xlu0 %1475
        %1477 = vrot.lane.b32.xlu0 %v1451, 32
        %v1478 = vpop.permute.xlu0 %1477
        %1479 = vrot.lane.b32.xlu0 %v1459, 32
        %v1480 = vpop.permute.xlu0 %1479
        %1481 = vrot.lane.b32.xlu0 %v1462, 32
        %v1482 = vpop.permute.xlu0 %1481
        %vm1493 = vcmask 523520
        %1494 = vst.msk [vmem:[#allocation2] sm:$0xff] %vm1493, %v1464
        %1495 = vst.msk [vmem:[#allocation2 + $0x8] sm:$0xff] %vm1493, %v1466
        %1496 = vst.msk [vmem:[#allocation2 + $0x10] sm:$0xff] %vm1493, %v1468
        %1497 = vst.msk [vmem:[#allocation2 + $0x18] sm:$0xff] %vm1493, %v1470
        %1498 = vst.msk [vmem:[#allocation2 + $0x20] sm:$0xff] %vm1493, %v1472
        %1499 = vst.msk [vmem:[#allocation2 + $0x28] sm:$0xff] %vm1493, %v1474
        %1500 = vst.msk [vmem:[#allocation2 + $0x30] sm:$0xff] %vm1493, %v1476
        %1501 = vst.msk [vmem:[#allocation2 + $0x38] sm:$0xff] %vm1493, %v1478
        %1502 = vst.msk [vmem:[#allocation2 + $0x40] sm:$0xff] %vm1493, %v1480
        %vm1503 = vcmask 523520
        %vm1504 = vmand %vm1503, %vm1383
        %v1505 = vld [vmem:[#allocation2 + $0x48] sm:$0xff]
        %v1506 = vsel %vm1504, %v1482, %v1505
        %1507 = vst [vmem:[#allocation2 + $0x48] sm:$0xff] %v1506
        %vm1518 = vcmask 1046528
        %v1519 = vrot.slane %v1361, 1
        %v1520 = vrot.slane %v1362, 1
        %v1521 = vsel %vm1518, %v1519, %v1520
        %v1522 = vrot.slane %v1363, 1
        %v1523 = vsel %vm1518, %v1520, %v1522
        %v1524 = vrot.slane %v1364, 1
        %v1525 = vsel %vm1518, %v1522, %v1524
        %v1526 = vrot.slane %v1365, 1
        %v1527 = vsel %vm1518, %v1524, %v1526
        %v1528 = vrot.slane %v1366, 1
        %v1529 = vsel %vm1518, %v1526, %v1528
        %v1530 = vrot.slane %v1367, 1
        %v1531 = vsel %vm1518, %v1528, %v1530
        %v1532 = vrot.slane %v1368, 1
        %v1533 = vsel %vm1518, %v1530, %v1532
        %v1534 = vrot.slane %v1369, 1
        %v1535 = vsel %vm1518, %v1532, %v1534
        %v1536 = vrot.slane %v1370, 1
        %v1537 = vsel %vm1518, %v1534, %v1536
        %1538 = vrot.lane.b32.xlu0 %v1521, 64
        %v1539 = vpop.permute.xlu0 %1538
        %1540 = vrot.lane.b32.xlu0 %v1523, 64
        %v1541 = vpop.permute.xlu0 %1540
        %1542 = vrot.lane.b32.xlu0 %v1525, 64
        %v1543 = vpop.permute.xlu0 %1542
        %1544 = vrot.lane.b32.xlu0 %v1527, 64
        %v1545 = vpop.permute.xlu0 %1544
        %1546 = vrot.lane.b32.xlu0 %v1529, 64
        %v1547 = vpop.permute.xlu0 %1546
        %1548 = vrot.lane.b32.xlu0 %v1531, 64
        %v1549 = vpop.permute.xlu0 %1548
        %1550 = vrot.lane.b32.xlu0 %v1533, 64
        %v1551 = vpop.permute.xlu0 %1550
        %1552 = vrot.lane.b32.xlu0 %v1535, 64
        %v1553 = vpop.permute.xlu0 %1552
        %1554 = vrot.lane.b32.xlu0 %v1537, 64
        %v1555 = vpop.permute.xlu0 %1554
        %1556 = vrot.lane.b32.xlu0 %v1536, 64
        %v1557 = vpop.permute.xlu0 %1556
        %vm1568 = vcmask 785920
        %1569 = vst.msk [vmem:[#allocation2] sm:$0xff] %vm1568, %v1539
        %1570 = vst.msk [vmem:[#allocation2 + $0x8] sm:$0xff] %vm1568, %v1541
        %1571 = vst.msk [vmem:[#allocation2 + $0x10] sm:$0xff] %vm1568, %v1543
        %1572 = vst.msk [vmem:[#allocation2 + $0x18] sm:$0xff] %vm1568, %v1545
        %1573 = vst.msk [vmem:[#allocation2 + $0x20] sm:$0xff] %vm1568, %v1547
        %1574 = vst.msk [vmem:[#allocation2 + $0x28] sm:$0xff] %vm1568, %v1549
        %1575 = vst.msk [vmem:[#allocation2 + $0x30] sm:$0xff] %vm1568, %v1551
        %1576 = vst.msk [vmem:[#allocation2 + $0x38] sm:$0xff] %vm1568, %v1553
        %1577 = vst.msk [vmem:[#allocation2 + $0x40] sm:$0xff] %vm1568, %v1555
        %vm1578 = vcmask 784896
        %1579 = vst.msk [vmem:[#allocation2 + $0x48] sm:$0x7f] %vm1578, %v1557
        %v1580 = vld [vmem:[#allocation2] sm:$0xff]
        %v1581 = vld [vmem:[#allocation2 + $0x8] sm:$0xff]
        %v1582 = vld [vmem:[#allocation2 + $0x10] sm:$0xff]
        %v1583 = vld [vmem:[#allocation2 + $0x18] sm:$0xff]
        %v1584 = vld [vmem:[#allocation2 + $0x20] sm:$0xff]
        %v1585 = vld [vmem:[#allocation2 + $0x28] sm:$0xff]
        %v1586 = vld [vmem:[#allocation2 + $0x30] sm:$0xff]
        %v1587 = vld [vmem:[#allocation2 + $0x38] sm:$0xff]
        %v1588 = vld [vmem:[%s6] sm:$0xf]
        %v1589 = vld [vmem:[%s6 + $0x4] sm:$0xf]
        %v1590 = vld [vmem:[%s6 + $0x8] sm:$0xf]
        %v1591 = vld [vmem:[%s6 + $0xc] sm:$0xf]
        %v1592 = vld [vmem:[%s6 + $0x10] sm:$0xf]
        %v1593 = vld [vmem:[%s6 + $0x14] sm:$0xf]
        %v1594 = vld [vmem:[%s6 + $0x18] sm:$0xf]
        %v1595 = vld [vmem:[%s6 + $0x1c] sm:$0xf]
        %v1596 = vld [vmem:[%s6 + $0x20] sm:$0xf]
        %v1597 = vld [vmem:[%s6 + $0x24] sm:$0xf]
        %v1598 = vld [vmem:[%s6 + $0x28] sm:$0xf]
        %v1599 = vld [vmem:[%s6 + $0x2c] sm:$0xf]
        %v1600 = vld [vmem:[#allocation2 + $0x40] sm:$0xff]
        %s1601 = scalar_lea.vmem %s6, 48
        %v1602 = vld [vmem:[%s1601] sm:$0xf]
        %v1603 = vld [vmem:[%s1601 + $0x4] sm:$0xf]
        %v1604 = vld [vmem:[%s1601 + $0x8] sm:$0xf]
        %v1605 = vld [vmem:[%s1601 + $0xc] sm:$0xf]
        %v1606 = vld [vmem:[%s1601 + $0x10] sm:$0xf]
        %v1607 = vld [vmem:[%s1601 + $0x14] sm:$0xf]
        %v1608 = vld [vmem:[%s1601 + $0x18] sm:$0xf]
        %v1609 = vld [vmem:[%s1601 + $0x1c] sm:$0xf]
        %v1610 = vld [vmem:[%s1601 + $0x20] sm:$0xf]
        %v1611 = vld [vmem:[%s1601 + $0x24] sm:$0xf]
        %v1612 = vld [vmem:[%s1601 + $0x28] sm:$0xf]
        %v1613 = vld [vmem:[%s1601 + $0x2c] sm:$0xf]
        %v1626 = vunpack.c.l.b16 %v1602
        %v1627 = vunpack.c.l.b16 %v1603
        %v1628 = vunpack.c.l.b16 %v1604
        %v1629 = vunpack.c.l.b16 %v1605
        %v1630 = vunpack.c.l.b16 %v1606
        %v1631 = vunpack.c.l.b16 %v1607
        %v1632 = vunpack.c.l.b16 %v1608
        %v1633 = vunpack.c.l.b16 %v1609
        %v1634 = vunpack.c.l.b16 %v1610
        %v1635 = vunpack.c.l.b16 %v1611
        %v1636 = vunpack.c.l.b16 %v1612
        %v1637 = vunpack.c.l.b16 %v1613
        %v1638 = vpack.c.b16 %v1627, %v1626
        %v1639 = vpack.c.b16 %v1629, %v1628
        %v1640 = vpack.c.b16 %v1631, %v1630
        %v1641 = vpack.c.b16 %v1633, %v1632
        %v1642 = vpack.c.b16 %v1635, %v1634
        %v1643 = vpack.c.b16 %v1637, %v1636
        %vm1650 = vcmask 785408
        %v1652 = vsel %vm1650, %v1581, 0
        %v1655 = vsel %vm1650, %v1582, 0
        %v1658 = vsel %vm1650, %v1583, 0
        %v1661 = vsel %vm1650, %v1584, 0
        %v1664 = vsel %vm1650, %v1585, 0
        %v1667 = vsel %vm1650, %v1586, 0
        %v1670 = vsel %vm1650, %v1587, 0
        %v1673 = vsel %vm1650, %v1600, 0
        %1675 = vmatprep.subr.bf16.mxu0 0
        %1676 = vmatpush1.bf16.msra.mxu0 %v1638
        %1677 = vmatprep.subr.bf16.mxu0 0
        %1678 = vmatpush1.bf16.msra.mxu0 %v1639
        %1679 = vmatprep.subr.bf16.mxu0 0
        %1680 = vmatpush1.bf16.msra.mxu0 %v1640
        %1681 = vmatprep.subr.bf16.mxu0 0
        %1682 = vmatpush1.bf16.msra.mxu0 %v1641
        %1683 = vmatprep.subr.bf16.mxu0 0
        %1684 = vmatpush1.bf16.msra.mxu0 %v1642
        %1685 = vmatprep.subr.bf16.mxu0 0
        %1686 = vmatpush1.bf16.msra.mxu0 %v1643
        %1687 = vmatprep.subr.bf16.mxu0 0
        %1688 = vmatpush1.bf16.msra.mxu0 0
        %1689 = vmatprep.subr.bf16.mxu0 0
        %1690 = vmatpush1.bf16.msra.mxu0 0
        %1691 = vmatprep.subr.bf16.mxu0 0
        %1692 = vmatpush1.bf16.msra.mxu0 0
        %1693 = vmatprep.subr.bf16.mxu0 0
        %1694 = vmatpush1.bf16.msra.mxu0 0
        %1695 = vmatprep.subr.bf16.mxu0 0
        %1696 = vmatpush1.bf16.msra.mxu0 0
        %1697 = vmatprep.subr.bf16.mxu0 0
        %1698 = vmatpush1.bf16.msra.mxu0 0
        %1699 = vmatprep.subr.bf16.mxu0 0
        %1700 = vmatpush1.bf16.msra.mxu0 0
        %1701 = vmatprep.subr.bf16.mxu0 0
        %1702 = vmatpush1.bf16.msra.mxu0 0
        %1703 = vmatprep.subr.bf16.mxu0 0
        %1704 = vmatpush1.bf16.msra.mxu0 0
        %1705 = vmatprep.subr.bf16.mxu0 0
        %1706 = vmatpush1.bf16.msra.mxu0 0
        %1707 = vmatprep.mubr.bf16.mxu0 0
        %1708 = vmatmul.mubr.bf16.gmra.mrb[0].mxu0 %v1652
        %v1709 = vpop.f32.mrb[0].mxu0
        %v1710 = vadd.f32 0.0, %v1709
        %v1711 = vpop.f32.mrb[0].mxu0
        %v1712 = vpop.f32.mrb[0].mxu0
        %v1713 = vadd.f32 0.0, %v1712
        %v1714 = vpop.f32.mrb[0].mxu0
        %1715 = vmatprep.mubr.bf16.mxu0 0
        %1716 = vmatmul.mubr.bf16.gmra.mrb[0].mxu0 %v1655
        %v1717 = vpop.f32.mrb[0].mxu0
        %v1718 = vadd.f32 0.0, %v1717
        %v1719 = vpop.f32.mrb[0].mxu0
        %v1720 = vpop.f32.mrb[0].mxu0
        %v1721 = vadd.f32 0.0, %v1720
        %v1722 = vpop.f32.mrb[0].mxu0
        %1723 = vmatprep.mubr.bf16.mxu0 0
        %1724 = vmatmul.mubr.bf16.gmra.mrb[0].mxu0 %v1658
        %v1725 = vpop.f32.mrb[0].mxu0
        %v1726 = vadd.f32 0.0, %v1725
        %v1727 = vpop.f32.mrb[0].mxu0
        %v1728 = vpop.f32.mrb[0].mxu0
        %v1729 = vadd.f32 0.0, %v1728
        %v1730 = vpop.f32.mrb[0].mxu0
        %1731 = vmatprep.mubr.bf16.mxu0 0
        %1732 = vmatmul.mubr.bf16.gmra.mrb[0].mxu0 %v1661
        %v1733 = vpop.f32.mrb[0].mxu0
        %v1734 = vadd.f32 0.0, %v1733
        %v1735 = vpop.f32.mrb[0].mxu0
        %v1736 = vpop.f32.mrb[0].mxu0
        %v1737 = vadd.f32 0.0, %v1736
        %v1738 = vpop.f32.mrb[0].mxu0
        %1739 = vmatprep.mubr.bf16.mxu0 0
        %1740 = vmatmul.mubr.bf16.gmra.mrb[0].mxu0 %v1664
        %v1741 = vpop.f32.mrb[0].mxu0
        %v1742 = vadd.f32 0.0, %v1741
        %v1743 = vpop.f32.mrb[0].mxu0
        %v1744 = vpop.f32.mrb[0].mxu0
        %v1745 = vadd.f32 0.0, %v1744
        %v1746 = vpop.f32.mrb[0].mxu0
        %1747 = vmatprep.mubr.bf16.mxu0 0
        %1748 = vmatmul.mubr.bf16.gmra.mrb[0].mxu0 %v1667
        %v1749 = vpop.f32.mrb[0].mxu0
        %v1750 = vadd.f32 0.0, %v1749
        %v1751 = vpop.f32.mrb[0].mxu0
        %v1752 = vpop.f32.mrb[0].mxu0
        %v1753 = vadd.f32 0.0, %v1752
        %v1754 = vpop.f32.mrb[0].mxu0
        %1755 = vmatprep.mubr.bf16.mxu0 0
        %1756 = vmatmul.mubr.bf16.gmra.mrb[0].mxu0 %v1670
        %v1757 = vpop.f32.mrb[0].mxu0
        %v1758 = vadd.f32 0.0, %v1757
        %v1759 = vpop.f32.mrb[0].mxu0
        %v1760 = vpop.f32.mrb[0].mxu0
        %v1761 = vadd.f32 0.0, %v1760
        %v1762 = vpop.f32.mrb[0].mxu0
        %1763 = vmatprep.mubr.bf16.mxu0 0
        %1764 = vmatmul.mubr.bf16.gmra.mrb[0].mxu0 %v1673
        %v1765 = vpop.f32.mrb[0].mxu0
        %v1766 = vadd.f32 0.0, %v1765
        %v1767 = vpop.f32.mrb[0].mxu0
        %v1768 = vpop.f32.mrb[0].mxu0
        %v1769 = vadd.f32 0.0, %v1768
        %v1770 = vpop.f32.mrb[0].mxu0
        %1771 = vdwg.mxu0
        %v1784 = vunpack.c.l.b16 %v1588
        %v1785 = vunpack.c.l.b16 %v1589
        %v1786 = vunpack.c.l.b16 %v1590
        %v1787 = vunpack.c.l.b16 %v1591
        %v1788 = vunpack.c.l.b16 %v1592
        %v1789 = vunpack.c.l.b16 %v1593
        %v1790 = vunpack.c.l.b16 %v1594
        %v1791 = vunpack.c.l.b16 %v1595
        %v1792 = vunpack.c.l.b16 %v1596
        %v1793 = vunpack.c.l.b16 %v1597
        %v1794 = vunpack.c.l.b16 %v1598
        %v1795 = vunpack.c.l.b16 %v1599
        %v1796 = vpack.c.b16 %v1785, %v1784
        %v1797 = vpack.c.b16 %v1787, %v1786
        %v1798 = vpack.c.b16 %v1789, %v1788
        %v1799 = vpack.c.b16 %v1791, %v1790
        %v1800 = vpack.c.b16 %v1793, %v1792
        %v1801 = vpack.c.b16 %v1795, %v1794
        %v1809 = vsel %vm1650, %v1580, 0
        %1811 = vmatprep.subr.bf16.mxu0 0
        %1812 = vmatpush1.bf16.msra.mxu0 %v1796
        %1813 = vmatprep.subr.bf16.mxu0 0
        %1814 = vmatpush1.bf16.msra.mxu0 %v1797
        %1815 = vmatprep.subr.bf16.mxu0 0
        %1816 = vmatpush1.bf16.msra.mxu0 %v1798
        %1817 = vmatprep.subr.bf16.mxu0 0
        %1818 = vmatpush1.bf16.msra.mxu0 %v1799
        %1819 = vmatprep.subr.bf16.mxu0 0
        %1820 = vmatpush1.bf16.msra.mxu0 %v1800
        %1821 = vmatprep.subr.bf16.mxu0 0
        %1822 = vmatpush1.bf16.msra.mxu0 %v1801
        %1823 = vmatprep.subr.bf16.mxu0 0
        %1824 = vmatpush1.bf16.msra.mxu0 0
        %1825 = vmatprep.subr.bf16.mxu0 0
        %1826 = vmatpush1.bf16.msra.mxu0 0
        %1827 = vmatprep.subr.bf16.mxu0 0
        %1828 = vmatpush1.bf16.msra.mxu0 0
        %1829 = vmatprep.subr.bf16.mxu0 0
        %1830 = vmatpush1.bf16.msra.mxu0 0
        %1831 = vmatprep.subr.bf16.mxu0 0
        %1832 = vmatpush1.bf16.msra.mxu0 0
        %1833 = vmatprep.subr.bf16.mxu0 0
        %1834 = vmatpush1.bf16.msra.mxu0 0
        %1835 = vmatprep.subr.bf16.mxu0 0
        %1836 = vmatpush1.bf16.msra.mxu0 0
        %1837 = vmatprep.subr.bf16.mxu0 0
        %1838 = vmatpush1.bf16.msra.mxu0 0
        %1839 = vmatprep.subr.bf16.mxu0 0
        %1840 = vmatpush1.bf16.msra.mxu0 0
        %1841 = vmatprep.subr.bf16.mxu0 0
        %1842 = vmatpush1.bf16.msra.mxu0 0
        %1843 = vmatprep.mubr.bf16.mxu0 0
        %1844 = vmatmul.mubr.bf16.gmra.mrb[0].mxu0 %v1809
        %v1845 = vpop.f32.mrb[0].mxu0
        %v1846 = vadd.f32 %v1710, %v1845
        %v1847 = vpop.f32.mrb[0].mxu0
        %v1848 = vpop.f32.mrb[0].mxu0
        %v1849 = vadd.f32 %v1713, %v1848
        %v1850 = vpop.f32.mrb[0].mxu0
        %1851 = vmatprep.mubr.bf16.mxu0 0
        %1852 = vmatmul.mubr.bf16.gmra.mrb[0].mxu0 %v1652
        %v1853 = vpop.f32.mrb[0].mxu0
        %v1854 = vadd.f32 %v1718, %v1853
        %v1855 = vpop.f32.mrb[0].mxu0
        %v1856 = vpop.f32.mrb[0].mxu0
        %v1857 = vadd.f32 %v1721, %v1856
        %v1858 = vpop.f32.mrb[0].mxu0
        %1859 = vmatprep.mubr.bf16.mxu0 0
        %1860 = vmatmul.mubr.bf16.gmra.mrb[0].mxu0 %v1655
        %v1861 = vpop.f32.mrb[0].mxu0
        %v1862 = vadd.f32 %v1726, %v1861
        %v1863 = vpop.f32.mrb[0].mxu0
        %v1864 = vpop.f32.mrb[0].mxu0
        %v1865 = vadd.f32 %v1729, %v1864
        %v1866 = vpop.f32.mrb[0].mxu0
        %1867 = vmatprep.mubr.bf16.mxu0 0
        %1868 = vmatmul.mubr.bf16.gmra.mrb[0].mxu0 %v1658
        %v1869 = vpop.f32.mrb[0].mxu0
        %v1870 = vadd.f32 %v1734, %v1869
        %v1871 = vpop.f32.mrb[0].mxu0
        %v1872 = vpop.f32.mrb[0].mxu0
        %v1873 = vadd.f32 %v1737, %v1872
        %v1874 = vpop.f32.mrb[0].mxu0
        %1875 = vmatprep.mubr.bf16.mxu0 0
        %1876 = vmatmul.mubr.bf16.gmra.mrb[0].mxu0 %v1661
        %v1877 = vpop.f32.mrb[0].mxu0
        %v1878 = vadd.f32 %v1742, %v1877
        %v1879 = vpop.f32.mrb[0].mxu0
        %v1880 = vpop.f32.mrb[0].mxu0
        %v1881 = vadd.f32 %v1745, %v1880
        %v1882 = vpop.f32.mrb[0].mxu0
        %1883 = vmatprep.mubr.bf16.mxu0 0
        %1884 = vmatmul.mubr.bf16.gmra.mrb[0].mxu0 %v1664
        %v1885 = vpop.f32.mrb[0].mxu0
        %v1886 = vadd.f32 %v1750, %v1885
        %v1887 = vpop.f32.mrb[0].mxu0
        %v1888 = vpop.f32.mrb[0].mxu0
        %v1889 = vadd.f32 %v1753, %v1888
        %v1890 = vpop.f32.mrb[0].mxu0
        %1891 = vmatprep.mubr.bf16.mxu0 0
        %1892 = vmatmul.mubr.bf16.gmra.mrb[0].mxu0 %v1667
        %v1893 = vpop.f32.mrb[0].mxu0
        %v1894 = vadd.f32 %v1758, %v1893
        %v1895 = vpop.f32.mrb[0].mxu0
        %v1896 = vpop.f32.mrb[0].mxu0
        %v1897 = vadd.f32 %v1761, %v1896
        %v1898 = vpop.f32.mrb[0].mxu0
        %1899 = vmatprep.mubr.bf16.mxu0 0
        %1900 = vmatmul.mubr.bf16.gmra.mrb[0].mxu0 %v1670
        %v1901 = vpop.f32.mrb[0].mxu0
        %v1902 = vadd.f32 %v1766, %v1901
        %v1903 = vpop.f32.mrb[0].mxu0
        %v1904 = vpop.f32.mrb[0].mxu0
        %v1905 = vadd.f32 %v1769, %v1904
        %v1906 = vpop.f32.mrb[0].mxu0
        %1907 = vdwg.mxu0
        %v1908 = vld [vmem:[#allocation2 + $0x10] sm:$0xff]
        %v1909 = vld [vmem:[#allocation2 + $0x18] sm:$0xff]
        %v1910 = vld [vmem:[#allocation2 + $0x20] sm:$0xff]
        %v1911 = vld [vmem:[#allocation2 + $0x28] sm:$0xff]
        %v1912 = vld [vmem:[#allocation2 + $0x30] sm:$0xff]
        %v1913 = vld [vmem:[#allocation2 + $0x38] sm:$0xff]
        %v1914 = vld [vmem:[#allocation2 + $0x40] sm:$0xff]
        %v1915 = vld [vmem:[#allocation2 + $0x48] sm:$0xff]
        %s1916 = scalar_lea.vmem %s6, 96
        %v1917 = vld [vmem:[%s1916] sm:$0xf]
        %v1918 = vld [vmem:[%s1916 + $0x4] sm:$0xf]
        %v1919 = vld [vmem:[%s1916 + $0x8] sm:$0xf]
        %v1920 = vld [vmem:[%s1916 + $0xc] sm:$0xf]
        %v1921 = vld [vmem:[%s1916 + $0x10] sm:$0xf]
        %v1922 = vld [vmem:[%s1916 + $0x14] sm:$0xf]
        %v1923 = vld [vmem:[%s1916 + $0x18] sm:$0xf]
        %v1924 = vld [vmem:[%s1916 + $0x1c] sm:$0xf]
        %v1925 = vld [vmem:[%s1916 + $0x20] sm:$0xf]
        %v1926 = vld [vmem:[%s1916 + $0x24] sm:$0xf]
        %v1927 = vld [vmem:[%s1916 + $0x28] sm:$0xf]
        %v1928 = vld [vmem:[%s1916 + $0x2c] sm:$0xf]
        %v1941 = vunpack.c.l.b16 %v1917
        %v1942 = vunpack.c.l.b16 %v1918
        %v1943 = vunpack.c.l.b16 %v1919
        %v1944 = vunpack.c.l.b16 %v1920
        %v1945 = vunpack.c.l.b16 %v1921
        %v1946 = vunpack.c.l.b16 %v1922
        %v1947 = vunpack.c.l.b16 %v1923
        %v1948 = vunpack.c.l.b16 %v1924
        %v1949 = vunpack.c.l.b16 %v1925
        %v1950 = vunpack.c.l.b16 %v1926
        %v1951 = vunpack.c.l.b16 %v1927
        %v1952 = vunpack.c.l.b16 %v1928
        %v1953 = vpack.c.b16 %v1942, %v1941
        %v1954 = vpack.c.b16 %v1944, %v1943
        %v1955 = vpack.c.b16 %v1946, %v1945
        %v1956 = vpack.c.b16 %v1948, %v1947
        %v1957 = vpack.c.b16 %v1950, %v1949
        %v1958 = vpack.c.b16 %v1952, %v1951
        %v1966 = vsel %vm1650, %v1908, 0
        %v1969 = vsel %vm1650, %v1909, 0
        %v1972 = vsel %vm1650, %v1910, 0
        %v1975 = vsel %vm1650, %v1911, 0
        %v1978 = vsel %vm1650, %v1912, 0
        %v1981 = vsel %vm1650, %v1913, 0
        %v1984 = vsel %vm1650, %v1914, 0
        %v1987 = vsel %vm1650, %v1915, 0
        %1989 = vmatprep.subr.bf16.mxu0 0
        %1990 = vmatpush1.bf16.msra.mxu0 %v1953
        %1991 = vmatprep.subr.bf16.mxu0 0
        %1992 = vmatpush1.bf16.msra.mxu0 %v1954
        %1993 = vmatprep.subr.bf16.mxu0 0
        %1994 = vmatpush1.bf16.msra.mxu0 %v1955
        %1995 = vmatprep.subr.bf16.mxu0 0
        %1996 = vmatpush1.bf16.msra.mxu0 %v1956
        %1997 = vmatprep.subr.bf16.mxu0 0
        %1998 = vmatpush1.bf16.msra.mxu0 %v1957
        %1999 = vmatprep.subr.bf16.mxu0 0
        %2000 = vmatpush1.bf16.msra.mxu0 %v1958
        %2001 = vmatprep.subr.bf16.mxu0 0
        %2002 = vmatpush1.bf16.msra.mxu0 0
        %2003 = vmatprep.subr.bf16.mxu0 0
        %2004 = vmatpush1.bf16.msra.mxu0 0
        %2005 = vmatprep.subr.bf16.mxu0 0
        %2006 = vmatpush1.bf16.msra.mxu0 0
        %2007 = vmatprep.subr.bf16.mxu0 0
        %2008 = vmatpush1.bf16.msra.mxu0 0
        %2009 = vmatprep.subr.bf16.mxu0 0
        %2010 = vmatpush1.bf16.msra.mxu0 0
        %2011 = vmatprep.subr.bf16.mxu0 0
        %2012 = vmatpush1.bf16.msra.mxu0 0
        %2013 = vmatprep.subr.bf16.mxu0 0
        %2014 = vmatpush1.bf16.msra.mxu0 0
        %2015 = vmatprep.subr.bf16.mxu0 0
        %2016 = vmatpush1.bf16.msra.mxu0 0
        %2017 = vmatprep.subr.bf16.mxu0 0
        %2018 = vmatpush1.bf16.msra.mxu0 0
        %2019 = vmatprep.subr.bf16.mxu0 0
        %2020 = vmatpush1.bf16.msra.mxu0 0
        %2021 = vmatprep.mubr.bf16.mxu0 0
        %2022 = vmatmul.mubr.bf16.gmra.mrb[0].mxu0 %v1966
        %v2023 = vpop.f32.mrb[0].mxu0
        %v2024 = vadd.f32 0.0, %v2023
        %v2025 = vpop.f32.mrb[0].mxu0
        %v2026 = vpop.f32.mrb[0].mxu0
        %v2027 = vadd.f32 0.0, %v2026
        %v2028 = vpop.f32.mrb[0].mxu0
        %2029 = vmatprep.mubr.bf16.mxu0 0
        %2030 = vmatmul.mubr.bf16.gmra.mrb[0].mxu0 %v1969
        %v2031 = vpop.f32.mrb[0].mxu0
        %v2032 = vadd.f32 0.0, %v2031
        %v2033 = vpop.f32.mrb[0].mxu0
        %v2034 = vpop.f32.mrb[0].mxu0
        %v2035 = vadd.f32 0.0, %v2034
        %v2036 = vpop.f32.mrb[0].mxu0
        %2037 = vmatprep.mubr.bf16.mxu0 0
        %2038 = vmatmul.mubr.bf16.gmra.mrb[0].mxu0 %v1972
        %v2039 = vpop.f32.mrb[0].mxu0
        %v2040 = vadd.f32 0.0, %v2039
        %v2041 = vpop.f32.mrb[0].mxu0
        %v2042 = vpop.f32.mrb[0].mxu0
        %v2043 = vadd.f32 0.0, %v2042
        %v2044 = vpop.f32.mrb[0].mxu0
        %2045 = vmatprep.mubr.bf16.mxu0 0
        %2046 = vmatmul.mubr.bf16.gmra.mrb[0].mxu0 %v1975
        %v2047 = vpop.f32.mrb[0].mxu0
        %v2048 = vadd.f32 0.0, %v2047
        %v2049 = vpop.f32.mrb[0].mxu0
        %v2050 = vpop.f32.mrb[0].mxu0
        %v2051 = vadd.f32 0.0, %v2050
        %v2052 = vpop.f32.mrb[0].mxu0
        %2053 = vmatprep.mubr.bf16.mxu0 0
        %2054 = vmatmul.mubr.bf16.gmra.mrb[0].mxu0 %v1978
        %v2055 = vpop.f32.mrb[0].mxu0
        %v2056 = vadd.f32 0.0, %v2055
        %v2057 = vpop.f32.mrb[0].mxu0
        %v2058 = vpop.f32.mrb[0].mxu0
        %v2059 = vadd.f32 0.0, %v2058
        %v2060 = vpop.f32.mrb[0].mxu0
        %2061 = vmatprep.mubr.bf16.mxu0 0
        %2062 = vmatmul.mubr.bf16.gmra.mrb[0].mxu0 %v1981
        %v2063 = vpop.f32.mrb[0].mxu0
        %v2064 = vadd.f32 0.0, %v2063
        %v2065 = vpop.f32.mrb[0].mxu0
        %v2066 = vpop.f32.mrb[0].mxu0
        %v2067 = vadd.f32 0.0, %v2066
        %v2068 = vpop.f32.mrb[0].mxu0
        %2069 = vmatprep.mubr.bf16.mxu0 0
        %2070 = vmatmul.mubr.bf16.gmra.mrb[0].mxu0 %v1984
        %v2071 = vpop.f32.mrb[0].mxu0
        %v2072 = vadd.f32 0.0, %v2071
        %v2073 = vpop.f32.mrb[0].mxu0
        %v2074 = vpop.f32.mrb[0].mxu0
        %v2075 = vadd.f32 0.0, %v2074
        %v2076 = vpop.f32.mrb[0].mxu0
        %2077 = vmatprep.mubr.bf16.mxu0 0
        %2078 = vmatmul.mubr.bf16.gmra.mrb[0].mxu0 %v1987
        %v2079 = vpop.f32.mrb[0].mxu0
        %v2080 = vadd.f32 0.0, %v2079
        %v2081 = vpop.f32.mrb[0].mxu0
        %v2082 = vpop.f32.mrb[0].mxu0
        %v2083 = vadd.f32 0.0, %v2082
        %v2084 = vpop.f32.mrb[0].mxu0
        %2085 = vdwg.mxu0
        %v2086 = vadd.f32 %v1846, %v2024
        %v2087 = vadd.f32 %v1849, %v2027
        %v2088 = vadd.f32 %v1854, %v2032
        %v2089 = vadd.f32 %v1857, %v2035
        %v2090 = vadd.f32 %v1862, %v2040
        %v2091 = vadd.f32 %v1865, %v2043
        %v2092 = vadd.f32 %v1870, %v2048
        %v2093 = vadd.f32 %v1873, %v2051
        %v2094 = vadd.f32 %v1878, %v2056
        %v2095 = vadd.f32 %v1881, %v2059
        %v2096 = vadd.f32 %v1886, %v2064
        %v2097 = vadd.f32 %v1889, %v2067
        %v2098 = vadd.f32 %v1894, %v2072
        %v2099 = vadd.f32 %v1897, %v2075
        %v2100 = vadd.f32 %v1902, %v2080
        %v2101 = vadd.f32 %v1905, %v2083
        %v2102 = vld [vmem:[%s7] sm:$0x1]
        %v2104 = vlaneseq
        %v2105 = vshrl.u32 %v2104, 7
        %v2106 = vsub.s32 0, %v2105
        %v2107 = vrot.slane %v2102, %v2106
        %v2109 = vadd.f32 %v2086, %v2107
        %v2110 = vadd.f32 %v2087, %v2107
        %v2111 = vadd.f32 %v2088, %v2107
        %v2112 = vadd.f32 %v2089, %v2107
        %v2113 = vadd.f32 %v2090, %v2107
        %v2114 = vadd.f32 %v2091, %v2107
        %v2115 = vadd.f32 %v2092, %v2107
        %v2116 = vadd.f32 %v2093, %v2107
        %v2117 = vadd.f32 %v2094, %v2107
        %v2118 = vadd.f32 %v2095, %v2107
        %v2119 = vadd.f32 %v2096, %v2107
        %v2120 = vadd.f32 %v2097, %v2107
        %v2121 = vadd.f32 %v2098, %v2107
        %v2122 = vadd.f32 %v2099, %v2107
        %v2123 = vadd.f32 %v2100, %v2107
        %v2124 = vadd.f32 %v2101, %v2107
        %v2125 = vld [vmem:[%s533] sm:$0x1]
        %v2127 = vlaneseq
        %v2128 = vshrl.u32 %v2127, 7
        %v2129 = vsub.s32 0, %v2128
        %v2130 = vrot.slane %v2125, %v2129
        %v2132 = vadd.f32 %v2109, %v2130
        %v2133 = vadd.f32 %v2110, %v2130
        %v2134 = vadd.f32 %v2111, %v2130
        %v2135 = vadd.f32 %v2112, %v2130
        %v2136 = vadd.f32 %v2113, %v2130
        %v2137 = vadd.f32 %v2114, %v2130
        %v2138 = vadd.f32 %v2115, %v2130
        %v2139 = vadd.f32 %v2116, %v2130
        %v2140 = vadd.f32 %v2117, %v2130
        %v2141 = vadd.f32 %v2118, %v2130
        %v2142 = vadd.f32 %v2119, %v2130
        %v2143 = vadd.f32 %v2120, %v2130
        %v2144 = vadd.f32 %v2121, %v2130
        %v2145 = vadd.f32 %v2122, %v2130
        %v2146 = vadd.f32 %v2123, %v2130
        %v2147 = vadd.f32 %v2124, %v2130
        %v2148 = vld [vmem:[%s3] sm:$0xff]
        %v2149 = vld [vmem:[%s3 + $0x8] sm:$0xff]
        %v2150 = vld [vmem:[%s3 + $0x10] sm:$0xff]
        %v2151 = vld [vmem:[%s3 + $0x18] sm:$0xff]
        %v2152 = vld [vmem:[%s3 + $0x20] sm:$0xff]
        %v2153 = vld [vmem:[%s3 + $0x28] sm:$0xff]
        %v2154 = vld [vmem:[%s3 + $0x30] sm:$0xff]
        %v2155 = vld [vmem:[%s3 + $0x38] sm:$0xff]
        %v2156 = vld [vmem:[%s3 + $0x40] sm:$0xff]
        %v2157 = vld [vmem:[%s3 + $0x48] sm:$0xff]
        %v2158 = vld [vmem:[%s3 + $0x50] sm:$0xff]
        %v2159 = vld [vmem:[%s3 + $0x58] sm:$0xff]
        %v2160 = vld [vmem:[%s3 + $0x60] sm:$0xff]
        %v2161 = vld [vmem:[%s3 + $0x68] sm:$0xff]
        %v2162 = vld [vmem:[%s3 + $0x70] sm:$0xff]
        %v2163 = vld [vmem:[%s3 + $0x78] sm:$0xff]
        %2165 = vset.pattern.permute.xlu0 0
        %2166 = vperm.xlu0 %2165, %v2148
        %v2167 = vpop.permute.xlu0 %2166
        %2170 = vset.pattern.permute.xlu0 0
        %2171 = vperm.xlu0 %2170, %v2149
        %v2172 = vpop.permute.xlu0 %2171
        %2175 = vset.pattern.permute.xlu0 0
        %2176 = vperm.xlu0 %2175, %v2150
        %v2177 = vpop.permute.xlu0 %2176
        %2180 = vset.pattern.permute.xlu0 0
        %2181 = vperm.xlu0 %2180, %v2151
        %v2182 = vpop.permute.xlu0 %2181
        %2185 = vset.pattern.permute.xlu0 0
        %2186 = vperm.xlu0 %2185, %v2152
        %v2187 = vpop.permute.xlu0 %2186
        %2190 = vset.pattern.permute.xlu0 0
        %2191 = vperm.xlu0 %2190, %v2153
        %v2192 = vpop.permute.xlu0 %2191
        %2195 = vset.pattern.permute.xlu0 0
        %2196 = vperm.xlu0 %2195, %v2154
        %v2197 = vpop.permute.xlu0 %2196
        %2200 = vset.pattern.permute.xlu0 0
        %2201 = vperm.xlu0 %2200, %v2155
        %v2202 = vpop.permute.xlu0 %2201
        %2205 = vset.pattern.permute.xlu0 0
        %2206 = vperm.xlu0 %2205, %v2156
        %v2207 = vpop.permute.xlu0 %2206
        %2210 = vset.pattern.permute.xlu0 0
        %2211 = vperm.xlu0 %2210, %v2157
        %v2212 = vpop.permute.xlu0 %2211
        %2215 = vset.pattern.permute.xlu0 0
        %2216 = vperm.xlu0 %2215, %v2158
        %v2217 = vpop.permute.xlu0 %2216
        %2220 = vset.pattern.permute.xlu0 0
        %2221 = vperm.xlu0 %2220, %v2159
        %v2222 = vpop.permute.xlu0 %2221
        %2225 = vset.pattern.permute.xlu0 0
        %2226 = vperm.xlu0 %2225, %v2160
        %v2227 = vpop.permute.xlu0 %2226
        %2230 = vset.pattern.permute.xlu0 0
        %2231 = vperm.xlu0 %2230, %v2161
        %v2232 = vpop.permute.xlu0 %2231
        %2235 = vset.pattern.permute.xlu0 0
        %2236 = vperm.xlu0 %2235, %v2162
        %v2237 = vpop.permute.xlu0 %2236
        %2240 = vset.pattern.permute.xlu0 0
        %2241 = vperm.xlu0 %2240, %v2163
        %v2242 = vpop.permute.xlu0 %2241
        %v2244 = vmul.f32 %v2132, %v2167
        %v2245 = vmul.f32 %v2133, %v2172
        %v2246 = vmul.f32 %v2134, %v2177
        %v2247 = vmul.f32 %v2135, %v2182
        %v2248 = vmul.f32 %v2136, %v2187
        %v2249 = vmul.f32 %v2137, %v2192
        %v2250 = vmul.f32 %v2138, %v2197
        %v2251 = vmul.f32 %v2139, %v2202
        %v2252 = vmul.f32 %v2140, %v2207
        %v2253 = vmul.f32 %v2141, %v2212
        %v2254 = vmul.f32 %v2142, %v2217
        %v2255 = vmul.f32 %v2143, %v2222
        %v2256 = vmul.f32 %v2144, %v2227
        %v2257 = vmul.f32 %v2145, %v2232
        %v2258 = vmul.f32 %v2146, %v2237
        %v2259 = vmul.f32 %v2147, %v2242
        %2260 = vmatprep.subr.mxu0 0.0
        %2261 = vmatpush1.msra.mxu0 %v2244
        %2262 = vmatprep.subr.mxu0 0.0
        %2263 = vmatpush1.msra.mxu0 %v2245
        %2264 = vmatprep.subr.mxu0 0.0
        %2265 = vmatpush1.msra.mxu0 %v2246
        %2266 = vmatprep.subr.mxu0 0.0
        %2267 = vmatpush1.msra.mxu0 %v2247
        %2268 = vmatprep.subr.mxu0 0.0
        %2269 = vmatpush1.msra.mxu0 %v2248
        %2270 = vmatprep.subr.mxu0 0.0
        %2271 = vmatpush1.msra.mxu0 %v2249
        %2272 = vmatprep.subr.mxu0 0.0
        %2273 = vmatpush1.msra.mxu0 %v2250
        %2274 = vmatprep.subr.mxu0 0.0
        %2275 = vmatpush1.msra.mxu0 %v2251
        %2276 = vmatprep.subr.mxu0 0.0
        %2277 = vmatpush1.msra.mxu0 %v2252
        %2278 = vmatprep.subr.mxu0 0.0
        %2279 = vmatpush1.msra.mxu0 %v2253
        %2280 = vmatprep.subr.mxu0 0.0
        %2281 = vmatpush1.msra.mxu0 %v2254
        %2282 = vmatprep.subr.mxu0 0.0
        %2283 = vmatpush1.msra.mxu0 %v2255
        %2284 = vmatprep.subr.mxu0 0.0
        %2285 = vmatpush1.msra.mxu0 %v2256
        %2286 = vmatprep.subr.mxu0 0.0
        %2287 = vmatpush1.msra.mxu0 %v2257
        %2288 = vmatprep.subr.mxu0 0.0
        %2289 = vmatpush1.msra.mxu0 %v2258
        %2290 = vmatprep.subr.mxu0 0.0
        %2291 = vmatpush1.msra.mxu0 %v2259
        %2292 = vmatprep.subr.mxu0 0.0
        %2293 = vmatpush1.msra.mxu0 0.0
        %2294 = vmatprep.subr.mxu0 0.0
        %2295 = vmatpush1.msra.mxu0 0.0
        %2296 = vmatprep.subr.mxu0 0.0
        %2297 = vmatpush1.msra.mxu0 0.0
        %2298 = vmatprep.subr.mxu0 0.0
        %2299 = vmatpush1.msra.mxu0 0.0
        %2300 = vmatprep.subr.mxu0 0.0
        %2301 = vmatpush1.msra.mxu0 0.0
        %2302 = vmatprep.subr.mxu0 0.0
        %2303 = vmatpush1.msra.mxu0 0.0
        %2304 = vmatprep.subr.mxu0 0.0
        %2305 = vmatpush1.msra.mxu0 0.0
        %2306 = vmatprep.subr.mxu0 0.0
        %2307 = vmatpush1.msra.mxu0 0.0
        %2308 = vmatprep.subr.mxu0 0.0
        %2309 = vmatpush1.msra.mxu0 0.0
        %2310 = vmatprep.subr.mxu0 0.0
        %2311 = vmatpush1.msra.mxu0 0.0
        %2312 = vmatprep.subr.mxu0 0.0
        %2313 = vmatpush1.msra.mxu0 0.0
        %2314 = vmatprep.subr.mxu0 0.0
        %2315 = vmatpush1.msra.mxu0 0.0
        %2316 = vmatprep.subr.mxu0 0.0
        %2317 = vmatpush1.msra.mxu0 0.0
        %2318 = vmatprep.subr.mxu0 0.0
        %2319 = vmatpush1.msra.mxu0 0.0
        %2320 = vmatprep.subr.mxu0 0.0
        %2321 = vmatpush1.msra.mxu0 0.0
        %2322 = vmatprep.subr.mxu0 0.0
        %2323 = vmatpush1.msra.mxu0 0.0
        %2324 = vmatprep.mubr.f32.mxu0 0.0
        %2325 = vmatmul.mubr.f32.gmra.mrb[0].mxu0 1.0
        %v2326 = vpop.f32.mrb[0].mxu0
        %v2327 = vadd.f32 0.0, %v2326
        %v2328 = vpop.f32.mrb[0].mxu0
        %2329 = vdwg.mxu0
        %v2330 = vmul.f32 %v2244, %v2244
        %v2331 = vmul.f32 %v2245, %v2245
        %v2332 = vmul.f32 %v2246, %v2246
        %v2333 = vmul.f32 %v2247, %v2247
        %v2334 = vmul.f32 %v2248, %v2248
        %v2335 = vmul.f32 %v2249, %v2249
        %v2336 = vmul.f32 %v2250, %v2250
        %v2337 = vmul.f32 %v2251, %v2251
        %v2338 = vmul.f32 %v2252, %v2252
        %v2339 = vmul.f32 %v2253, %v2253
        %v2340 = vmul.f32 %v2254, %v2254
        %v2341 = vmul.f32 %v2255, %v2255
        %v2342 = vmul.f32 %v2256, %v2256
        %v2343 = vmul.f32 %v2257, %v2257
        %v2344 = vmul.f32 %v2258, %v2258
        %v2345 = vmul.f32 %v2259, %v2259
        %2346 = vmatprep.subr.mxu0 0.0
        %2347 = vmatpush1.msra.mxu0 %v2330
        %2348 = vmatprep.subr.mxu0 0.0
        %2349 = vmatpush1.msra.mxu0 %v2331
        %2350 = vmatprep.subr.mxu0 0.0
        %2351 = vmatpush1.msra.mxu0 %v2332
        %2352 = vmatprep.subr.mxu0 0.0
        %2353 = vmatpush1.msra.mxu0 %v2333
        %2354 = vmatprep.subr.mxu0 0.0
        %2355 = vmatpush1.msra.mxu0 %v2334
        %2356 = vmatprep.subr.mxu0 0.0
        %2357 = vmatpush1.msra.mxu0 %v2335
        %2358 = vmatprep.subr.mxu0 0.0
        %2359 = vmatpush1.msra.mxu0 %v2336
        %2360 = vmatprep.subr.mxu0 0.0
        %2361 = vmatpush1.msra.mxu0 %v2337
        %2362 = vmatprep.subr.mxu0 0.0
        %2363 = vmatpush1.msra.mxu0 %v2338
        %2364 = vmatprep.subr.mxu0 0.0
        %2365 = vmatpush1.msra.mxu0 %v2339
        %2366 = vmatprep.subr.mxu0 0.0
        %2367 = vmatpush1.msra.mxu0 %v2340
        %2368 = vmatprep.subr.mxu0 0.0
        %2369 = vmatpush1.msra.mxu0 %v2341
        %2370 = vmatprep.subr.mxu0 0.0
        %2371 = vmatpush1.msra.mxu0 %v2342
        %2372 = vmatprep.subr.mxu0 0.0
        %2373 = vmatpush1.msra.mxu0 %v2343
        %2374 = vmatprep.subr.mxu0 0.0
        %2375 = vmatpush1.msra.mxu0 %v2344
        %2376 = vmatprep.subr.mxu0 0.0
        %2377 = vmatpush1.msra.mxu0 %v2345
        %2378 = vmatprep.subr.mxu0 0.0
        %2379 = vmatpush1.msra.mxu0 0.0
        %2380 = vmatprep.subr.mxu0 0.0
        %2381 = vmatpush1.msra.mxu0 0.0
        %2382 = vmatprep.subr.mxu0 0.0
        %2383 = vmatpush1.msra.mxu0 0.0
        %2384 = vmatprep.subr.mxu0 0.0
        %2385 = vmatpush1.msra.mxu0 0.0
        %2386 = vmatprep.subr.mxu0 0.0
        %2387 = vmatpush1.msra.mxu0 0.0
        %2388 = vmatprep.subr.mxu0 0.0
        %2389 = vmatpush1.msra.mxu0 0.0
        %2390 = vmatprep.subr.mxu0 0.0
        %2391 = vmatpush1.msra.mxu0 0.0
        %2392 = vmatprep.subr.mxu0 0.0
        %2393 = vmatpush1.msra.mxu0 0.0
        %2394 = vmatprep.subr.mxu0 0.0
        %2395 = vmatpush1.msra.mxu0 0.0
        %2396 = vmatprep.subr.mxu0 0.0
        %2397 = vmatpush1.msra.mxu0 0.0
        %2398 = vmatprep.subr.mxu0 0.0
        %2399 = vmatpush1.msra.mxu0 0.0
        %2400 = vmatprep.subr.mxu0 0.0
        %2401 = vmatpush1.msra.mxu0 0.0
        %2402 = vmatprep.subr.mxu0 0.0
        %2403 = vmatpush1.msra.mxu0 0.0
        %2404 = vmatprep.subr.mxu0 0.0
        %2405 = vmatpush1.msra.mxu0 0.0
        %2406 = vmatprep.subr.mxu0 0.0
        %2407 = vmatpush1.msra.mxu0 0.0
        %2408 = vmatprep.subr.mxu0 0.0
        %2409 = vmatpush1.msra.mxu0 0.0
        %2410 = vmatprep.mubr.f32.mxu0 0.0
        %2411 = vmatmul.mubr.f32.gmra.mrb[0].mxu0 1.0
        %v2412 = vpop.f32.mrb[0].mxu0
        %v2413 = vadd.f32 0.0, %v2412
        %v2414 = vpop.f32.mrb[0].mxu0
        %2415 = vdwg.mxu0
        %v2416 = vld [vmem:[%s14] sm:$0xff]
        %v2417 = vld [vmem:[%s14 + $0x8] sm:$0xff]
        %v2418 = vld [vmem:[%s14 + $0x10] sm:$0xff]
        %v2419 = vld [vmem:[%s14 + $0x18] sm:$0xff]
        %v2421 = vsel %vm555, %v2327, 0
        %2423 = vmatprep.subr.mxu0 0.0
        %2424 = vmatpush1.msra.mxu0 %v2416
        %2425 = vmatprep.subr.mxu0 0.0
        %2426 = vmatpush1.msra.mxu0 %v2417
        %2427 = vmatprep.subr.mxu0 0.0
        %2428 = vmatpush1.msra.mxu0 %v2418
        %2429 = vmatprep.subr.mxu0 0.0
        %2430 = vmatpush1.msra.mxu0 %v2419
        %2431 = vmatprep.subr.mxu0 0.0
        %2432 = vmatpush1.msra.mxu0 0.0
        %2433 = vmatprep.subr.mxu0 0.0
        %2434 = vmatpush1.msra.mxu0 0.0
        %2435 = vmatprep.subr.mxu0 0.0
        %2436 = vmatpush1.msra.mxu0 0.0
        %2437 = vmatprep.subr.mxu0 0.0
        %2438 = vmatpush1.msra.mxu0 0.0
        %2439 = vmatprep.subr.mxu0 0.0
        %2440 = vmatpush1.msra.mxu0 0.0
        %2441 = vmatprep.subr.mxu0 0.0
        %2442 = vmatpush1.msra.mxu0 0.0
        %2443 = vmatprep.subr.mxu0 0.0
        %2444 = vmatpush1.msra.mxu0 0.0
        %2445 = vmatprep.subr.mxu0 0.0
        %2446 = vmatpush1.msra.mxu0 0.0
        %2447 = vmatprep.subr.mxu0 0.0
        %2448 = vmatpush1.msra.mxu0 0.0
        %2449 = vmatprep.subr.mxu0 0.0
        %2450 = vmatpush1.msra.mxu0 0.0
        %2451 = vmatprep.subr.mxu0 0.0
        %2452 = vmatpush1.msra.mxu0 0.0
        %2453 = vmatprep.subr.mxu0 0.0
        %2454 = vmatpush1.msra.mxu0 0.0
        %2455 = vmatprep.subr.mxu0 0.0
        %2456 = vmatpush1.msra.mxu0 0.0
        %2457 = vmatprep.subr.mxu0 0.0
        %2458 = vmatpush1.msra.mxu0 0.0
        %2459 = vmatprep.subr.mxu0 0.0
        %2460 = vmatpush1.msra.mxu0 0.0
        %2461 = vmatprep.subr.mxu0 0.0
        %2462 = vmatpush1.msra.mxu0 0.0
        %2463 = vmatprep.subr.mxu0 0.0
        %2464 = vmatpush1.msra.mxu0 0.0
        %2465 = vmatprep.subr.mxu0 0.0
        %2466 = vmatpush1.msra.mxu0 0.0
        %2467 = vmatprep.subr.mxu0 0.0
        %2468 = vmatpush1.msra.mxu0 0.0
        %2469 = vmatprep.subr.mxu0 0.0
        %2470 = vmatpush1.msra.mxu0 0.0
        %2471 = vmatprep.subr.mxu0 0.0
        %2472 = vmatpush1.msra.mxu0 0.0
        %2473 = vmatprep.subr.mxu0 0.0
        %2474 = vmatpush1.msra.mxu0 0.0
        %2475 = vmatprep.subr.mxu0 0.0
        %2476 = vmatpush1.msra.mxu0 0.0
        %2477 = vmatprep.subr.mxu0 0.0
        %2478 = vmatpush1.msra.mxu0 0.0
        %2479 = vmatprep.subr.mxu0 0.0
        %2480 = vmatpush1.msra.mxu0 0.0
        %2481 = vmatprep.subr.mxu0 0.0
        %2482 = vmatpush1.msra.mxu0 0.0
        %2483 = vmatprep.subr.mxu0 0.0
        %2484 = vmatpush1.msra.mxu0 0.0
        %2485 = vmatprep.subr.mxu0 0.0
        %2486 = vmatpush1.msra.mxu0 0.0
        %2487 = vmatprep.mubr.f32.mxu0 0.0
        %2488 = vmatmul.mubr.f32.gmra.mrb[0].mxu0 %v2421
        %v2489 = vpop.f32.mrb[0].mxu0
        %v2490 = vadd.f32 0.0, %v2489
        %v2491 = vpop.f32.mrb[0].mxu0
        %2492 = vdwg.mxu0
        %v2493 = vmul.f32 %v2490, %v796
        %v2495 = vsel %vm555, %v2413, 0
        %2497 = vmatprep.subr.mxu0 0.0
        %2498 = vmatpush1.msra.mxu0 %v2416
        %2499 = vmatprep.subr.mxu0 0.0
        %2500 = vmatpush1.msra.mxu0 %v2417
        %2501 = vmatprep.subr.mxu0 0.0
        %2502 = vmatpush1.msra.mxu0 %v2418
        %2503 = vmatprep.subr.mxu0 0.0
        %2504 = vmatpush1.msra.mxu0 %v2419
        %2505 = vmatprep.subr.mxu0 0.0
        %2506 = vmatpush1.msra.mxu0 0.0
        %2507 = vmatprep.subr.mxu0 0.0
        %2508 = vmatpush1.msra.mxu0 0.0
        %2509 = vmatprep.subr.mxu0 0.0
        %2510 = vmatpush1.msra.mxu0 0.0
        %2511 = vmatprep.subr.mxu0 0.0
        %2512 = vmatpush1.msra.mxu0 0.0
        %2513 = vmatprep.subr.mxu0 0.0
        %2514 = vmatpush1.msra.mxu0 0.0
        %2515 = vmatprep.subr.mxu0 0.0
        %2516 = vmatpush1.msra.mxu0 0.0
        %2517 = vmatprep.subr.mxu0 0.0
        %2518 = vmatpush1.msra.mxu0 0.0
        %2519 = vmatprep.subr.mxu0 0.0
        %2520 = vmatpush1.msra.mxu0 0.0
        %2521 = vmatprep.subr.mxu0 0.0
        %2522 = vmatpush1.msra.mxu0 0.0
        %2523 = vmatprep.subr.mxu0 0.0
        %2524 = vmatpush1.msra.mxu0 0.0
        %2525 = vmatprep.subr.mxu0 0.0
        %2526 = vmatpush1.msra.mxu0 0.0
        %2527 = vmatprep.subr.mxu0 0.0
        %2528 = vmatpush1.msra.mxu0 0.0
        %2529 = vmatprep.subr.mxu0 0.0
        %2530 = vmatpush1.msra.mxu0 0.0
        %2531 = vmatprep.subr.mxu0 0.0
        %2532 = vmatpush1.msra.mxu0 0.0
        %2533 = vmatprep.subr.mxu0 0.0
        %2534 = vmatpush1.msra.mxu0 0.0
        %2535 = vmatprep.subr.mxu0 0.0
        %2536 = vmatpush1.msra.mxu0 0.0
        %2537 = vmatprep.subr.mxu0 0.0
        %2538 = vmatpush1.msra.mxu0 0.0
        %2539 = vmatprep.subr.mxu0 0.0
        %2540 = vmatpush1.msra.mxu0 0.0
        %2541 = vmatprep.subr.mxu0 0.0
        %2542 = vmatpush1.msra.mxu0 0.0
        %2543 = vmatprep.subr.mxu0 0.0
        %2544 = vmatpush1.msra.mxu0 0.0
        %2545 = vmatprep.subr.mxu0 0.0
        %2546 = vmatpush1.msra.mxu0 0.0
        %2547 = vmatprep.subr.mxu0 0.0
        %2548 = vmatpush1.msra.mxu0 0.0
        %2549 = vmatprep.subr.mxu0 0.0
        %2550 = vmatpush1.msra.mxu0 0.0
        %2551 = vmatprep.subr.mxu0 0.0
        %2552 = vmatpush1.msra.mxu0 0.0
        %2553 = vmatprep.subr.mxu0 0.0
        %2554 = vmatpush1.msra.mxu0 0.0
        %2555 = vmatprep.subr.mxu0 0.0
        %2556 = vmatpush1.msra.mxu0 0.0
        %2557 = vmatprep.subr.mxu0 0.0
        %2558 = vmatpush1.msra.mxu0 0.0
        %2559 = vmatprep.subr.mxu0 0.0
        %2560 = vmatpush1.msra.mxu0 0.0
        %2561 = vmatprep.mubr.f32.mxu0 0.0
        %2562 = vmatmul.mubr.f32.gmra.mrb[0].mxu0 %v2495
        %v2563 = vpop.f32.mrb[0].mxu0
        %v2564 = vadd.f32 0.0, %v2563
        %v2565 = vpop.f32.mrb[0].mxu0
        %2566 = vdwg.mxu0
        %v2567 = vmul.f32 %v2564, %v796
        %v2568 = vmul.f32 %v2493, %v2493
        %v2569 = vsub.f32 %v2567, %v2568
        %v2570 = vadd.f32 %v2569, 1e-05
        %v2571 = vrsqrt.pop %v2570
        %v2572 = vld [vmem:[%s15] sm:$0xff]
        %v2573 = vld [vmem:[%s15 + $0x8] sm:$0xff]
        %v2574 = vld [vmem:[%s15 + $0x10] sm:$0xff]
        %v2575 = vld [vmem:[%s15 + $0x18] sm:$0xff]
        %v2577 = vsel %vm555, %v2493, 0
        %2579 = vmatprep.subr.mxu0 0.0
        %2580 = vmatpush1.msra.mxu0 %v2572
        %2581 = vmatprep.subr.mxu0 0.0
        %2582 = vmatpush1.msra.mxu0 %v2573
        %2583 = vmatprep.subr.mxu0 0.0
        %2584 = vmatpush1.msra.mxu0 %v2574
        %2585 = vmatprep.subr.mxu0 0.0
        %2586 = vmatpush1.msra.mxu0 %v2575
        %2587 = vmatprep.subr.mxu0 0.0
        %2588 = vmatpush1.msra.mxu0 0.0
        %2589 = vmatprep.subr.mxu0 0.0
        %2590 = vmatpush1.msra.mxu0 0.0
        %2591 = vmatprep.subr.mxu0 0.0
        %2592 = vmatpush1.msra.mxu0 0.0
        %2593 = vmatprep.subr.mxu0 0.0
        %2594 = vmatpush1.msra.mxu0 0.0
        %2595 = vmatprep.subr.mxu0 0.0
        %2596 = vmatpush1.msra.mxu0 0.0
        %2597 = vmatprep.subr.mxu0 0.0
        %2598 = vmatpush1.msra.mxu0 0.0
        %2599 = vmatprep.subr.mxu0 0.0
        %2600 = vmatpush1.msra.mxu0 0.0
        %2601 = vmatprep.subr.mxu0 0.0
        %2602 = vmatpush1.msra.mxu0 0.0
        %2603 = vmatprep.subr.mxu0 0.0
        %2604 = vmatpush1.msra.mxu0 0.0
        %2605 = vmatprep.subr.mxu0 0.0
        %2606 = vmatpush1.msra.mxu0 0.0
        %2607 = vmatprep.subr.mxu0 0.0
        %2608 = vmatpush1.msra.mxu0 0.0
        %2609 = vmatprep.subr.mxu0 0.0
        %2610 = vmatpush1.msra.mxu0 0.0
        %2611 = vmatprep.subr.mxu0 0.0
        %2612 = vmatpush1.msra.mxu0 0.0
        %2613 = vmatprep.subr.mxu0 0.0
        %2614 = vmatpush1.msra.mxu0 0.0
        %2615 = vmatprep.subr.mxu0 0.0
        %2616 = vmatpush1.msra.mxu0 0.0
        %2617 = vmatprep.subr.mxu0 0.0
        %2618 = vmatpush1.msra.mxu0 0.0
        %2619 = vmatprep.subr.mxu0 0.0
        %2620 = vmatpush1.msra.mxu0 0.0
        %2621 = vmatprep.subr.mxu0 0.0
        %2622 = vmatpush1.msra.mxu0 0.0
        %2623 = vmatprep.subr.mxu0 0.0
        %2624 = vmatpush1.msra.mxu0 0.0
        %2625 = vmatprep.subr.mxu0 0.0
        %2626 = vmatpush1.msra.mxu0 0.0
        %2627 = vmatprep.subr.mxu0 0.0
        %2628 = vmatpush1.msra.mxu0 0.0
        %2629 = vmatprep.subr.mxu0 0.0
        %2630 = vmatpush1.msra.mxu0 0.0
        %2631 = vmatprep.subr.mxu0 0.0
        %2632 = vmatpush1.msra.mxu0 0.0
        %2633 = vmatprep.subr.mxu0 0.0
        %2634 = vmatpush1.msra.mxu0 0.0
        %2635 = vmatprep.subr.mxu0 0.0
        %2636 = vmatpush1.msra.mxu0 0.0
        %2637 = vmatprep.subr.mxu0 0.0
        %2638 = vmatpush1.msra.mxu0 0.0
        %2639 = vmatprep.subr.mxu0 0.0
        %2640 = vmatpush1.msra.mxu0 0.0
        %2641 = vmatprep.subr.mxu0 0.0
        %2642 = vmatpush1.msra.mxu0 0.0
        %2643 = vmatprep.mubr.f32.mxu0 0.0
        %2644 = vmatmul.mubr.f32.gmra.mrb[0].mxu0 %v2577
        %v2645 = vpop.f32.mrb[0].mxu0
        %v2646 = vadd.f32 0.0, %v2645
        %v2647 = vpop.f32.mrb[0].mxu0
        %2648 = vdwg.mxu0
        %v2650 = vsel %vm555, %v2571, 0
        %2652 = vmatprep.subr.mxu0 0.0
        %2653 = vmatpush1.msra.mxu0 %v2572
        %2654 = vmatprep.subr.mxu0 0.0
        %2655 = vmatpush1.msra.mxu0 %v2573
        %2656 = vmatprep.subr.mxu0 0.0
        %2657 = vmatpush1.msra.mxu0 %v2574
        %2658 = vmatprep.subr.mxu0 0.0
        %2659 = vmatpush1.msra.mxu0 %v2575
        %2660 = vmatprep.subr.mxu0 0.0
        %2661 = vmatpush1.msra.mxu0 0.0
        %2662 = vmatprep.subr.mxu0 0.0
        %2663 = vmatpush1.msra.mxu0 0.0
        %2664 = vmatprep.subr.mxu0 0.0
        %2665 = vmatpush1.msra.mxu0 0.0
        %2666 = vmatprep.subr.mxu0 0.0
        %2667 = vmatpush1.msra.mxu0 0.0
        %2668 = vmatprep.subr.mxu0 0.0
        %2669 = vmatpush1.msra.mxu0 0.0
        %2670 = vmatprep.subr.mxu0 0.0
        %2671 = vmatpush1.msra.mxu0 0.0
        %2672 = vmatprep.subr.mxu0 0.0
        %2673 = vmatpush1.msra.mxu0 0.0
        %2674 = vmatprep.subr.mxu0 0.0
        %2675 = vmatpush1.msra.mxu0 0.0
        %2676 = vmatprep.subr.mxu0 0.0
        %2677 = vmatpush1.msra.mxu0 0.0
        %2678 = vmatprep.subr.mxu0 0.0
        %2679 = vmatpush1.msra.mxu0 0.0
        %2680 = vmatprep.subr.mxu0 0.0
        %2681 = vmatpush1.msra.mxu0 0.0
        %2682 = vmatprep.subr.mxu0 0.0
        %2683 = vmatpush1.msra.mxu0 0.0
        %2684 = vmatprep.subr.mxu0 0.0
        %2685 = vmatpush1.msra.mxu0 0.0
        %2686 = vmatprep.subr.mxu0 0.0
        %2687 = vmatpush1.msra.mxu0 0.0
        %2688 = vmatprep.subr.mxu0 0.0
        %2689 = vmatpush1.msra.mxu0 0.0
        %2690 = vmatprep.subr.mxu0 0.0
        %2691 = vmatpush1.msra.mxu0 0.0
        %2692 = vmatprep.subr.mxu0 0.0
        %2693 = vmatpush1.msra.mxu0 0.0
        %2694 = vmatprep.subr.mxu0 0.0
        %2695 = vmatpush1.msra.mxu0 0.0
        %2696 = vmatprep.subr.mxu0 0.0
        %2697 = vmatpush1.msra.mxu0 0.0
        %2698 = vmatprep.subr.mxu0 0.0
        %2699 = vmatpush1.msra.mxu0 0.0
        %2700 = vmatprep.subr.mxu0 0.0
        %2701 = vmatpush1.msra.mxu0 0.0
        %2702 = vmatprep.subr.mxu0 0.0
        %2703 = vmatpush1.msra.mxu0 0.0
        %2704 = vmatprep.subr.mxu0 0.0
        %2705 = vmatpush1.msra.mxu0 0.0
        %2706 = vmatprep.subr.mxu0 0.0
        %2707 = vmatpush1.msra.mxu0 0.0
        %2708 = vmatprep.subr.mxu0 0.0
        %2709 = vmatpush1.msra.mxu0 0.0
        %2710 = vmatprep.subr.mxu0 0.0
        %2711 = vmatpush1.msra.mxu0 0.0
        %2712 = vmatprep.subr.mxu0 0.0
        %2713 = vmatpush1.msra.mxu0 0.0
        %2714 = vmatprep.subr.mxu0 0.0
        %2715 = vmatpush1.msra.mxu0 0.0
        %2716 = vmatprep.mubr.f32.mxu0 0.0
        %2717 = vmatmul.mubr.f32.gmra.mrb[0].mxu0 %v2650
        %v2718 = vpop.f32.mrb[0].mxu0
        %v2719 = vadd.f32 0.0, %v2718
        %v2720 = vpop.f32.mrb[0].mxu0
        %2721 = vdwg.mxu0
        %v2722 = vld [vmem:[%s8] sm:$0x1]
        %v2723 = vmul.f32 %v2719, %v2722
        %v2724 = vld [vmem:[%s9] sm:$0x1]
        %v2725 = vmul.f32 %v2646, %v2723
        %v2726 = vsub.f32 %v2724, %v2725
        %v2727 = vlaneseq
        %v2728 = vshrl.u32 %v2727, 7
        %v2729 = vsub.s32 0, %v2728
        %v2730 = vrot.slane %v2723, %v2729
        %v2731 = vmul.f32 %v2244, %v2730
        %v2732 = vmul.f32 %v2245, %v2730
        %v2733 = vmul.f32 %v2246, %v2730
        %v2734 = vmul.f32 %v2247, %v2730
        %v2735 = vmul.f32 %v2248, %v2730
        %v2736 = vmul.f32 %v2249, %v2730
        %v2737 = vmul.f32 %v2250, %v2730
        %v2738 = vmul.f32 %v2251, %v2730
        %v2739 = vmul.f32 %v2252, %v2730
        %v2740 = vmul.f32 %v2253, %v2730
        %v2741 = vmul.f32 %v2254, %v2730
        %v2742 = vmul.f32 %v2255, %v2730
        %v2743 = vmul.f32 %v2256, %v2730
        %v2744 = vmul.f32 %v2257, %v2730
        %v2745 = vmul.f32 %v2258, %v2730
        %v2746 = vmul.f32 %v2259, %v2730
        %v2748 = vlaneseq
        %v2749 = vshrl.u32 %v2748, 7
        %v2750 = vsub.s32 0, %v2749
        %v2751 = vrot.slane %v2726, %v2750
        %v2753 = vadd.f32 %v2731, %v2751
        %v2754 = vadd.f32 %v2732, %v2751
        %v2755 = vadd.f32 %v2733, %v2751
        %v2756 = vadd.f32 %v2734, %v2751
        %v2757 = vadd.f32 %v2735, %v2751
        %v2758 = vadd.f32 %v2736, %v2751
        %v2759 = vadd.f32 %v2737, %v2751
        %v2760 = vadd.f32 %v2738, %v2751
        %v2761 = vadd.f32 %v2739, %v2751
        %v2762 = vadd.f32 %v2740, %v2751
        %v2763 = vadd.f32 %v2741, %v2751
        %v2764 = vadd.f32 %v2742, %v2751
        %v2765 = vadd.f32 %v2743, %v2751
        %v2766 = vadd.f32 %v2744, %v2751
        %v2767 = vadd.f32 %v2745, %v2751
        %v2768 = vadd.f32 %v2746, %v2751
        %v2769 = vxor.u32 %v2753, 2147483648
        %v2770 = vxor.u32 %v2754, 2147483648
        %v2771 = vxor.u32 %v2755, 2147483648
        %v2772 = vxor.u32 %v2756, 2147483648
        %v2773 = vxor.u32 %v2757, 2147483648
        %v2774 = vxor.u32 %v2758, 2147483648
        %v2775 = vxor.u32 %v2759, 2147483648
        %v2776 = vxor.u32 %v2760, 2147483648
        %v2777 = vxor.u32 %v2761, 2147483648
        %v2778 = vxor.u32 %v2762, 2147483648
        %v2779 = vxor.u32 %v2763, 2147483648
        %v2780 = vxor.u32 %v2764, 2147483648
        %v2781 = vxor.u32 %v2765, 2147483648
        %v2782 = vxor.u32 %v2766, 2147483648
        %v2783 = vxor.u32 %v2767, 2147483648
        %v2784 = vxor.u32 %v2768, 2147483648
        %v2785 = vmul.f32 %v2769, 1.442695
        %v2786 = vpow.pop %v2785
        %v2787 = vmul.f32 %v2770, 1.442695
        %v2788 = vpow.pop %v2787
        %v2789 = vmul.f32 %v2771, 1.442695
        %v2790 = vpow.pop %v2789
        %v2791 = vmul.f32 %v2772, 1.442695
        %v2792 = vpow.pop %v2791
        %v2793 = vmul.f32 %v2773, 1.442695
        %v2794 = vpow.pop %v2793
        %v2795 = vmul.f32 %v2774, 1.442695
        %v2796 = vpow.pop %v2795
        %v2797 = vmul.f32 %v2775, 1.442695
        %v2798 = vpow.pop %v2797
        %v2799 = vmul.f32 %v2776, 1.442695
        %v2800 = vpow.pop %v2799
        %v2801 = vmul.f32 %v2777, 1.442695
        %v2802 = vpow.pop %v2801
        %v2803 = vmul.f32 %v2778, 1.442695
        %v2804 = vpow.pop %v2803
        %v2805 = vmul.f32 %v2779, 1.442695
        %v2806 = vpow.pop %v2805
        %v2807 = vmul.f32 %v2780, 1.442695
        %v2808 = vpow.pop %v2807
        %v2809 = vmul.f32 %v2781, 1.442695
        %v2810 = vpow.pop %v2809
        %v2811 = vmul.f32 %v2782, 1.442695
        %v2812 = vpow.pop %v2811
        %v2813 = vmul.f32 %v2783, 1.442695
        %v2814 = vpow.pop %v2813
        %v2815 = vmul.f32 %v2784, 1.442695
        %v2816 = vpow.pop %v2815
        %v2817 = vadd.f32 %v2786, 1.0
        %v2818 = vadd.f32 %v2788, 1.0
        %v2819 = vadd.f32 %v2790, 1.0
        %v2820 = vadd.f32 %v2792, 1.0
        %v2821 = vadd.f32 %v2794, 1.0
        %v2822 = vadd.f32 %v2796, 1.0
        %v2823 = vadd.f32 %v2798, 1.0
        %v2824 = vadd.f32 %v2800, 1.0
        %v2825 = vadd.f32 %v2802, 1.0
        %v2826 = vadd.f32 %v2804, 1.0
        %v2827 = vadd.f32 %v2806, 1.0
        %v2828 = vadd.f32 %v2808, 1.0
        %v2829 = vadd.f32 %v2810, 1.0
        %v2830 = vadd.f32 %v2812, 1.0
        %v2831 = vadd.f32 %v2814, 1.0
        %v2832 = vadd.f32 %v2816, 1.0
        %v2833 = vrcp.pop %v2817
        %v2834 = vmul.f32 1.0, %v2833
        %v2835 = vrcp.pop %v2818
        %v2836 = vmul.f32 1.0, %v2835
        %v2837 = vrcp.pop %v2819
        %v2838 = vmul.f32 1.0, %v2837
        %v2839 = vrcp.pop %v2820
        %v2840 = vmul.f32 1.0, %v2839
        %v2841 = vrcp.pop %v2821
        %v2842 = vmul.f32 1.0, %v2841
        %v2843 = vrcp.pop %v2822
        %v2844 = vmul.f32 1.0, %v2843
        %v2845 = vrcp.pop %v2823
        %v2846 = vmul.f32 1.0, %v2845
        %v2847 = vrcp.pop %v2824
        %v2848 = vmul.f32 1.0, %v2847
        %v2849 = vrcp.pop %v2825
        %v2850 = vmul.f32 1.0, %v2849
        %v2851 = vrcp.pop %v2826
        %v2852 = vmul.f32 1.0, %v2851
        %v2853 = vrcp.pop %v2827
        %v2854 = vmul.f32 1.0, %v2853
        %v2855 = vrcp.pop %v2828
        %v2856 = vmul.f32 1.0, %v2855
        %v2857 = vrcp.pop %v2829
        %v2858 = vmul.f32 1.0, %v2857
        %v2859 = vrcp.pop %v2830
        %v2860 = vmul.f32 1.0, %v2859
        %v2861 = vrcp.pop %v2831
        %v2862 = vmul.f32 1.0, %v2861
        %v2863 = vrcp.pop %v2832
        %v2864 = vmul.f32 1.0, %v2863
        %v2865 = vmul.f32 %v2753, %v2834
        %v2866 = vmul.f32 %v2754, %v2836
        %v2867 = vmul.f32 %v2755, %v2838
        %v2868 = vmul.f32 %v2756, %v2840
        %v2869 = vmul.f32 %v2757, %v2842
        %v2870 = vmul.f32 %v2758, %v2844
        %v2871 = vmul.f32 %v2759, %v2846
        %v2872 = vmul.f32 %v2760, %v2848
        %v2873 = vmul.f32 %v2761, %v2850
        %v2874 = vmul.f32 %v2762, %v2852
        %v2875 = vmul.f32 %v2763, %v2854
        %v2876 = vmul.f32 %v2764, %v2856
        %v2877 = vmul.f32 %v2765, %v2858
        %v2878 = vmul.f32 %v2766, %v2860
        %v2879 = vmul.f32 %v2767, %v2862
        %v2880 = vmul.f32 %v2768, %v2864
        %v2881 = vmul.f32 %v2167, %v2865
        %v2882 = vmul.f32 %v2172, %v2866
        %v2883 = vmul.f32 %v2177, %v2867
        %v2884 = vmul.f32 %v2182, %v2868
        %v2885 = vmul.f32 %v2187, %v2869
        %v2886 = vmul.f32 %v2192, %v2870
        %v2887 = vmul.f32 %v2197, %v2871
        %v2888 = vmul.f32 %v2202, %v2872
        %v2889 = vmul.f32 %v2207, %v2873
        %v2890 = vmul.f32 %v2212, %v2874
        %v2891 = vmul.f32 %v2217, %v2875
        %v2892 = vmul.f32 %v2222, %v2876
        %v2893 = vmul.f32 %v2227, %v2877
        %v2894 = vmul.f32 %v2232, %v2878
        %v2895 = vmul.f32 %v2237, %v2879
        %v2896 = vmul.f32 %v2242, %v2880
        %v2897 = vpack.c.bf16 %v2882, %v2881
        %v2898 = vpack.c.bf16 %v2884, %v2883
        %v2899 = vpack.c.bf16 %v2886, %v2885
        %v2900 = vpack.c.bf16 %v2888, %v2887
        %v2901 = vpack.c.bf16 %v2890, %v2889
        %v2902 = vpack.c.bf16 %v2892, %v2891
        %v2903 = vpack.c.bf16 %v2894, %v2893
        %v2904 = vpack.c.bf16 %v2896, %v2895
        %2905 = vst.msk [vmem:[#allocation3] sm:$0xff] %vm1650, 0
        %vm2906 = vcmask 778240
        %vm2907 = vsmask.f32 256
        %vm2908 = vmand %vm2906, %vm2907
        %v2909 = vld [vmem:[#allocation3 + $0x8] sm:$0x1]
        %v2910 = vsel %vm2908, 0, %v2909
        %2911 = vst [vmem:[#allocation3 + $0x8] sm:$0x1] %v2910
        %vm2912 = vcmask 785415
        %vm2913 = vsmask.f32 7966
        %vm2914 = vmand %vm2912, %vm2913
        %v2915 = vld [vmem:[#allocation3 + $0x40] sm:$0x80]
        %v2916 = vsel %vm2914, 0, %v2915
        %2917 = vst [vmem:[#allocation3 + $0x40] sm:$0x80] %v2916
        %2918 = vst.msk [vmem:[#allocation3 + $0x48] sm:$0xff] %vm1650, 0
        %v2920 = vshrl.u32 %v2897, 16
        %v2922 = vrot.slane %v2920, 7
        %v2923 = vshll.u32 %v2897, 16
        %v2925 = vor.u32 %v2922, %v2923
        %v2927 = vshrl.u32 %v2898, 16
        %v2929 = vrot.slane %v2927, 7
        %v2930 = vshll.u32 %v2898, 16
        %v2932 = vor.u32 %v2929, %v2930
        %v2933 = vsel %vm2907, %v2922, %v2932
        %v2935 = vshrl.u32 %v2899, 16
        %v2937 = vrot.slane %v2935, 7
        %v2938 = vshll.u32 %v2899, 16
        %v2940 = vor.u32 %v2937, %v2938
        %v2941 = vsel %vm2907, %v2929, %v2940
        %v2943 = vshrl.u32 %v2900, 16
        %v2945 = vrot.slane %v2943, 7
        %v2946 = vshll.u32 %v2900, 16
        %v2948 = vor.u32 %v2945, %v2946
        %v2949 = vsel %vm2907, %v2937, %v2948
        %v2951 = vshrl.u32 %v2901, 16
        %v2953 = vrot.slane %v2951, 7
        %v2954 = vshll.u32 %v2901, 16
        %v2956 = vor.u32 %v2953, %v2954
        %v2957 = vsel %vm2907, %v2945, %v2956
        %v2959 = vshrl.u32 %v2902, 16
        %v2961 = vrot.slane %v2959, 7
        %v2962 = vshll.u32 %v2902, 16
        %v2964 = vor.u32 %v2961, %v2962
        %v2965 = vsel %vm2907, %v2953, %v2964
        %v2967 = vshrl.u32 %v2903, 16
        %v2969 = vrot.slane %v2967, 7
        %v2970 = vshll.u32 %v2903, 16
        %v2972 = vor.u32 %v2969, %v2970
        %v2973 = vsel %vm2907, %v2961, %v2972
        %v2975 = vshrl.u32 %v2904, 16
        %v2977 = vrot.slane %v2975, 7
        %v2978 = vshll.u32 %v2904, 16
        %v2980 = vor.u32 %v2977, %v2978
        %v2981 = vsel %vm2907, %v2969, %v2980
        %vm2991 = vcmask 261120
        %vm2992 = vsmask.f32 7938
        %vm2993 = vmand %vm2991, %vm2992
        %v2994 = vld [vmem:[#allocation3 + $0x8] sm:$0xff]
        %v2995 = vsel %vm2993, %v2925, %v2994
        %2996 = vst [vmem:[#allocation3 + $0x8] sm:$0xff] %v2995
        %2997 = vst.msk [vmem:[#allocation3 + $0x10] sm:$0xff] %vm555, %v2933
        %2998 = vst.msk [vmem:[#allocation3 + $0x18] sm:$0xff] %vm555, %v2941
        %2999 = vst.msk [vmem:[#allocation3 + $0x20] sm:$0xff] %vm555, %v2949
        %3000 = vst.msk [vmem:[#allocation3 + $0x28] sm:$0xff] %vm555, %v2957
        %3001 = vst.msk [vmem:[#allocation3 + $0x30] sm:$0xff] %vm555, %v2965
        %3002 = vst.msk [vmem:[#allocation3 + $0x38] sm:$0xff] %vm555, %v2973
        %3003 = vst.msk [vmem:[#allocation3 + $0x40] sm:$0xff] %vm555, %v2981
        %vm3004 = vcmask 253952
        %vm3005 = vmand %vm3004, %vm2907
        %v3006 = vld [vmem:[#allocation3 + $0x48] sm:$0x1]
        %v3007 = vsel %vm3005, %v2977, %v3006
        %3008 = vst [vmem:[#allocation3 + $0x48] sm:$0x1] %v3007
        %3017 = vrot.lane.b32.xlu0 %v2897, 32
        %v3018 = vpop.permute.xlu0 %3017
        %3019 = vrot.lane.b32.xlu0 %v2898, 32
        %v3020 = vpop.permute.xlu0 %3019
        %3021 = vrot.lane.b32.xlu0 %v2899, 32
        %v3022 = vpop.permute.xlu0 %3021
        %3023 = vrot.lane.b32.xlu0 %v2900, 32
        %v3024 = vpop.permute.xlu0 %3023
        %3025 = vrot.lane.b32.xlu0 %v2901, 32
        %v3026 = vpop.permute.xlu0 %3025
        %3027 = vrot.lane.b32.xlu0 %v2902, 32
        %v3028 = vpop.permute.xlu0 %3027
        %3029 = vrot.lane.b32.xlu0 %v2903, 32
        %v3030 = vpop.permute.xlu0 %3029
        %3031 = vrot.lane.b32.xlu0 %v2904, 32
        %v3032 = vpop.permute.xlu0 %3031
        %3041 = vst.msk [vmem:[#allocation3 + $0x8] sm:$0xff] %vm1493, %v3018
        %3042 = vst.msk [vmem:[#allocation3 + $0x10] sm:$0xff] %vm1493, %v3020
        %3043 = vst.msk [vmem:[#allocation3 + $0x18] sm:$0xff] %vm1493, %v3022
        %3044 = vst.msk [vmem:[#allocation3 + $0x20] sm:$0xff] %vm1493, %v3024
        %3045 = vst.msk [vmem:[#allocation3 + $0x28] sm:$0xff] %vm1493, %v3026
        %3046 = vst.msk [vmem:[#allocation3 + $0x30] sm:$0xff] %vm1493, %v3028
        %3047 = vst.msk [vmem:[#allocation3 + $0x38] sm:$0xff] %vm1493, %v3030
        %3048 = vst.msk [vmem:[#allocation3 + $0x40] sm:$0xff] %vm1493, %v3032
        %v3049 = vrot.slane %v2923, 1
        %v3050 = vor.u32 %v2920, %v3049
        %v3051 = vrot.slane %v2930, 1
        %v3052 = vsel %vm1383, %v3050, %v3051
        %v3053 = vor.u32 %v2927, %v3051
        %v3054 = vrot.slane %v2938, 1
        %v3055 = vsel %vm1383, %v3053, %v3054
        %v3056 = vor.u32 %v2935, %v3054
        %v3057 = vrot.slane %v2946, 1
        %v3058 = vsel %vm1383, %v3056, %v3057
        %v3059 = vor.u32 %v2943, %v3057
        %v3060 = vrot.slane %v2954, 1
        %v3061 = vsel %vm1383, %v3059, %v3060
        %v3062 = vor.u32 %v2951, %v3060
        %v3063 = vrot.slane %v2962, 1
        %v3064 = vsel %vm1383, %v3062, %v3063
        %v3065 = vor.u32 %v2959, %v3063
        %v3066 = vrot.slane %v2970, 1
        %v3067 = vsel %vm1383, %v3065, %v3066
        %v3068 = vor.u32 %v2967, %v3066
        %v3069 = vrot.slane %v2978, 1
        %v3070 = vsel %vm1383, %v3068, %v3069
        %v3071 = vor.u32 %v2975, %v3069
        %3072 = vrot.lane.b32.xlu0 %v3049, 64
        %v3073 = vpop.permute.xlu0 %3072
        %3074 = vrot.lane.b32.xlu0 %v3052, 64
        %v3075 = vpop.permute.xlu0 %3074
        %3076 = vrot.lane.b32.xlu0 %v3055, 64
        %v3077 = vpop.permute.xlu0 %3076
        %3078 = vrot.lane.b32.xlu0 %v3058, 64
        %v3079 = vpop.permute.xlu0 %3078
        %3080 = vrot.lane.b32.xlu0 %v3061, 64
        %v3081 = vpop.permute.xlu0 %3080
        %3082 = vrot.lane.b32.xlu0 %v3064, 64
        %v3083 = vpop.permute.xlu0 %3082
        %3084 = vrot.lane.b32.xlu0 %v3067, 64
        %v3085 = vpop.permute.xlu0 %3084
        %3086 = vrot.lane.b32.xlu0 %v3070, 64
        %v3087 = vpop.permute.xlu0 %3086
        %3088 = vrot.lane.b32.xlu0 %v3071, 64
        %v3089 = vpop.permute.xlu0 %3088
        %vm3099 = vcmask 785927
        %vm3100 = vmand %vm3099, %vm2913
        %v3101 = vld [vmem:[#allocation3] sm:$0x80]
        %v3102 = vsel %vm3100, %v3073, %v3101
        %3103 = vst [vmem:[#allocation3] sm:$0x80] %v3102
        %3104 = vst.msk [vmem:[#allocation3 + $0x8] sm:$0xff] %vm1568, %v3075
        %3105 = vst.msk [vmem:[#allocation3 + $0x10] sm:$0xff] %vm1568, %v3077
        %3106 = vst.msk [vmem:[#allocation3 + $0x18] sm:$0xff] %vm1568, %v3079
        %3107 = vst.msk [vmem:[#allocation3 + $0x20] sm:$0xff] %vm1568, %v3081
        %3108 = vst.msk [vmem:[#allocation3 + $0x28] sm:$0xff] %vm1568, %v3083
        %3109 = vst.msk [vmem:[#allocation3 + $0x30] sm:$0xff] %vm1568, %v3085
        %3110 = vst.msk [vmem:[#allocation3 + $0x38] sm:$0xff] %vm1568, %v3087
        %vm3111 = vcmask 785920
        %vm3112 = vmand %vm3111, %vm1383
        %v3113 = vld [vmem:[#allocation3 + $0x40] sm:$0xff]
        %v3114 = vsel %vm3112, %v3089, %v3113
        %3115 = vst [vmem:[#allocation3 + $0x40] sm:$0xff] %v3114
        %v3116 = vld [vmem:[#allocation3] sm:$0xff]
        %v3117 = vld [vmem:[#allocation3 + $0x8] sm:$0xff]
        %v3118 = vld [vmem:[#allocation3 + $0x10] sm:$0xff]
        %v3119 = vld [vmem:[#allocation3 + $0x18] sm:$0xff]
        %v3120 = vld [vmem:[#allocation3 + $0x20] sm:$0xff]
        %v3121 = vld [vmem:[#allocation3 + $0x28] sm:$0xff]
        %v3122 = vld [vmem:[#allocation3 + $0x30] sm:$0xff]
        %v3123 = vld [vmem:[#allocation3 + $0x38] sm:$0xff]
        %v3124 = vld [vmem:[%s10] sm:$0xf]
        %v3125 = vld [vmem:[%s10 + $0x4] sm:$0xf]
        %v3126 = vld [vmem:[%s10 + $0x8] sm:$0xf]
        %v3127 = vld [vmem:[%s10 + $0xc] sm:$0xf]
        %v3128 = vld [vmem:[%s10 + $0x10] sm:$0xf]
        %v3129 = vld [vmem:[%s10 + $0x14] sm:$0xf]
        %v3130 = vld [vmem:[%s10 + $0x18] sm:$0xf]
        %v3131 = vld [vmem:[%s10 + $0x1c] sm:$0xf]
        %v3132 = vld [vmem:[%s10 + $0x20] sm:$0xf]
        %v3133 = vld [vmem:[%s10 + $0x24] sm:$0xf]
        %v3134 = vld [vmem:[%s10 + $0x28] sm:$0xf]
        %v3135 = vld [vmem:[%s10 + $0x2c] sm:$0xf]
        %v3136 = vld [vmem:[#allocation3 + $0x40] sm:$0xff]
        %s3137 = scalar_lea.vmem %s10, 48
        %v3138 = vld [vmem:[%s3137] sm:$0xf]
        %v3139 = vld [vmem:[%s3137 + $0x4] sm:$0xf]
        %v3140 = vld [vmem:[%s3137 + $0x8] sm:$0xf]
        %v3141 = vld [vmem:[%s3137 + $0xc] sm:$0xf]
        %v3142 = vld [vmem:[%s3137 + $0x10] sm:$0xf]
        %v3143 = vld [vmem:[%s3137 + $0x14] sm:$0xf]
        %v3144 = vld [vmem:[%s3137 + $0x18] sm:$0xf]
        %v3145 = vld [vmem:[%s3137 + $0x1c] sm:$0xf]
        %v3146 = vld [vmem:[%s3137 + $0x20] sm:$0xf]
        %v3147 = vld [vmem:[%s3137 + $0x24] sm:$0xf]
        %v3148 = vld [vmem:[%s3137 + $0x28] sm:$0xf]
        %v3149 = vld [vmem:[%s3137 + $0x2c] sm:$0xf]
        %v3162 = vunpack.c.l.b16 %v3138
        %v3163 = vunpack.c.l.b16 %v3139
        %v3164 = vunpack.c.l.b16 %v3140
        %v3165 = vunpack.c.l.b16 %v3141
        %v3166 = vunpack.c.l.b16 %v3142
        %v3167 = vunpack.c.l.b16 %v3143
        %v3168 = vunpack.c.l.b16 %v3144
        %v3169 = vunpack.c.l.b16 %v3145
        %v3170 = vunpack.c.l.b16 %v3146
        %v3171 = vunpack.c.l.b16 %v3147
        %v3172 = vunpack.c.l.b16 %v3148
        %v3173 = vunpack.c.l.b16 %v3149
        %v3174 = vpack.c.b16 %v3163, %v3162
        %v3175 = vpack.c.b16 %v3165, %v3164
        %v3176 = vpack.c.b16 %v3167, %v3166
        %v3177 = vpack.c.b16 %v3169, %v3168
        %v3178 = vpack.c.b16 %v3171, %v3170
        %v3179 = vpack.c.b16 %v3173, %v3172
        %v3187 = vsel %vm1650, %v3117, 0
        %v3190 = vsel %vm1650, %v3118, 0
        %v3193 = vsel %vm1650, %v3119, 0
        %v3196 = vsel %vm1650, %v3120, 0
        %v3199 = vsel %vm1650, %v3121, 0
        %v3202 = vsel %vm1650, %v3122, 0
        %v3205 = vsel %vm1650, %v3123, 0
        %v3208 = vsel %vm1650, %v3136, 0
        %3210 = vmatprep.subr.bf16.mxu0 0
        %3211 = vmatpush1.bf16.msra.mxu0 %v3174
        %3212 = vmatprep.subr.bf16.mxu0 0
        %3213 = vmatpush1.bf16.msra.mxu0 %v3175
        %3214 = vmatprep.subr.bf16.mxu0 0
        %3215 = vmatpush1.bf16.msra.mxu0 %v3176
        %3216 = vmatprep.subr.bf16.mxu0 0
        %3217 = vmatpush1.bf16.msra.mxu0 %v3177
        %3218 = vmatprep.subr.bf16.mxu0 0
        %3219 = vmatpush1.bf16.msra.mxu0 %v3178
        %3220 = vmatprep.subr.bf16.mxu0 0
        %3221 = vmatpush1.bf16.msra.mxu0 %v3179
        %3222 = vmatprep.subr.bf16.mxu0 0
        %3223 = vmatpush1.bf16.msra.mxu0 0
        %3224 = vmatprep.subr.bf16.mxu0 0
        %3225 = vmatpush1.bf16.msra.mxu0 0
        %3226 = vmatprep.subr.bf16.mxu0 0
        %3227 = vmatpush1.bf16.msra.mxu0 0
        %3228 = vmatprep.subr.bf16.mxu0 0
        %3229 = vmatpush1.bf16.msra.mxu0 0
        %3230 = vmatprep.subr.bf16.mxu0 0
        %3231 = vmatpush1.bf16.msra.mxu0 0
        %3232 = vmatprep.subr.bf16.mxu0 0
        %3233 = vmatpush1.bf16.msra.mxu0 0
        %3234 = vmatprep.subr.bf16.mxu0 0
        %3235 = vmatpush1.bf16.msra.mxu0 0
        %3236 = vmatprep.subr.bf16.mxu0 0
        %3237 = vmatpush1.bf16.msra.mxu0 0
        %3238 = vmatprep.subr.bf16.mxu0 0
        %3239 = vmatpush1.bf16.msra.mxu0 0
        %3240 = vmatprep.subr.bf16.mxu0 0
        %3241 = vmatpush1.bf16.msra.mxu0 0
        %3242 = vmatprep.mubr.bf16.mxu0 0
        %3243 = vmatmul.mubr.bf16.gmra.mrb[0].mxu0 %v3187
        %v3244 = vpop.f32.mrb[0].mxu0
        %v3245 = vadd.f32 0.0, %v3244
        %v3246 = vpop.f32.mrb[0].mxu0
        %v3247 = vpop.f32.mrb[0].mxu0
        %v3248 = vpop.f32.mrb[0].mxu0
        %3249 = vmatprep.mubr.bf16.mxu0 0
        %3250 = vmatmul.mubr.bf16.gmra.mrb[0].mxu0 %v3190
        %v3251 = vpop.f32.mrb[0].mxu0
        %v3252 = vadd.f32 0.0, %v3251
        %v3253 = vpop.f32.mrb[0].mxu0
        %v3254 = vpop.f32.mrb[0].mxu0
        %v3255 = vpop.f32.mrb[0].mxu0
        %3256 = vmatprep.mubr.bf16.mxu0 0
        %3257 = vmatmul.mubr.bf16.gmra.mrb[0].mxu0 %v3193
        %v3258 = vpop.f32.mrb[0].mxu0
        %v3259 = vadd.f32 0.0, %v3258
        %v3260 = vpop.f32.mrb[0].mxu0
        %v3261 = vpop.f32.mrb[0].mxu0
        %v3262 = vpop.f32.mrb[0].mxu0
        %3263 = vmatprep.mubr.bf16.mxu0 0
        %3264 = vmatmul.mubr.bf16.gmra.mrb[0].mxu0 %v3196
        %v3265 = vpop.f32.mrb[0].mxu0
        %v3266 = vadd.f32 0.0, %v3265
        %v3267 = vpop.f32.mrb[0].mxu0
        %v3268 = vpop.f32.mrb[0].mxu0
        %v3269 = vpop.f32.mrb[0].mxu0
        %3270 = vmatprep.mubr.bf16.mxu0 0
        %3271 = vmatmul.mubr.bf16.gmra.mrb[0].mxu0 %v3199
        %v3272 = vpop.f32.mrb[0].mxu0
        %v3273 = vadd.f32 0.0, %v3272
        %v3274 = vpop.f32.mrb[0].mxu0
        %v3275 = vpop.f32.mrb[0].mxu0
        %v3276 = vpop.f32.mrb[0].mxu0
        %3277 = vmatprep.mubr.bf16.mxu0 0
        %3278 = vmatmul.mubr.bf16.gmra.mrb[0].mxu0 %v3202
        %v3279 = vpop.f32.mrb[0].mxu0
        %v3280 = vadd.f32 0.0, %v3279
        %v3281 = vpop.f32.mrb[0].mxu0
        %v3282 = vpop.f32.mrb[0].mxu0
        %v3283 = vpop.f32.mrb[0].mxu0
        %3284 = vmatprep.mubr.bf16.mxu0 0
        %3285 = vmatmul.mubr.bf16.gmra.mrb[0].mxu0 %v3205
        %v3286 = vpop.f32.mrb[0].mxu0
        %v3287 = vadd.f32 0.0, %v3286
        %v3288 = vpop.f32.mrb[0].mxu0
        %v3289 = vpop.f32.mrb[0].mxu0
        %v3290 = vpop.f32.mrb[0].mxu0
        %3291 = vmatprep.mubr.bf16.mxu0 0
        %3292 = vmatmul.mubr.bf16.gmra.mrb[0].mxu0 %v3208
        %v3293 = vpop.f32.mrb[0].mxu0
        %v3294 = vadd.f32 0.0, %v3293
        %v3295 = vpop.f32.mrb[0].mxu0
        %v3296 = vpop.f32.mrb[0].mxu0
        %v3297 = vpop.f32.mrb[0].mxu0
        %3298 = vdwg.mxu0
        %v3311 = vunpack.c.l.b16 %v3124
        %v3312 = vunpack.c.l.b16 %v3125
        %v3313 = vunpack.c.l.b16 %v3126
        %v3314 = vunpack.c.l.b16 %v3127
        %v3315 = vunpack.c.l.b16 %v3128
        %v3316 = vunpack.c.l.b16 %v3129
        %v3317 = vunpack.c.l.b16 %v3130
        %v3318 = vunpack.c.l.b16 %v3131
        %v3319 = vunpack.c.l.b16 %v3132
        %v3320 = vunpack.c.l.b16 %v3133
        %v3321 = vunpack.c.l.b16 %v3134
        %v3322 = vunpack.c.l.b16 %v3135
        %v3323 = vpack.c.b16 %v3312, %v3311
        %v3324 = vpack.c.b16 %v3314, %v3313
        %v3325 = vpack.c.b16 %v3316, %v3315
        %v3326 = vpack.c.b16 %v3318, %v3317
        %v3327 = vpack.c.b16 %v3320, %v3319
        %v3328 = vpack.c.b16 %v3322, %v3321
        %v3336 = vsel %vm1650, %v3116, 0
        %3338 = vmatprep.subr.bf16.mxu0 0
        %3339 = vmatpush1.bf16.msra.mxu0 %v3323
        %3340 = vmatprep.subr.bf16.mxu0 0
        %3341 = vmatpush1.bf16.msra.mxu0 %v3324
        %3342 = vmatprep.subr.bf16.mxu0 0
        %3343 = vmatpush1.bf16.msra.mxu0 %v3325
        %3344 = vmatprep.subr.bf16.mxu0 0
        %3345 = vmatpush1.bf16.msra.mxu0 %v3326
        %3346 = vmatprep.subr.bf16.mxu0 0
        %3347 = vmatpush1.bf16.msra.mxu0 %v3327
        %3348 = vmatprep.subr.bf16.mxu0 0
        %3349 = vmatpush1.bf16.msra.mxu0 %v3328
        %3350 = vmatprep.subr.bf16.mxu0 0
        %3351 = vmatpush1.bf16.msra.mxu0 0
        %3352 = vmatprep.subr.bf16.mxu0 0
        %3353 = vmatpush1.bf16.msra.mxu0 0
        %3354 = vmatprep.subr.bf16.mxu0 0
        %3355 = vmatpush1.bf16.msra.mxu0 0
        %3356 = vmatprep.subr.bf16.mxu0 0
        %3357 = vmatpush1.bf16.msra.mxu0 0
        %3358 = vmatprep.subr.bf16.mxu0 0
        %3359 = vmatpush1.bf16.msra.mxu0 0
        %3360 = vmatprep.subr.bf16.mxu0 0
        %3361 = vmatpush1.bf16.msra.mxu0 0
        %3362 = vmatprep.subr.bf16.mxu0 0
        %3363 = vmatpush1.bf16.msra.mxu0 0
        %3364 = vmatprep.subr.bf16.mxu0 0
        %3365 = vmatpush1.bf16.msra.mxu0 0
        %3366 = vmatprep.subr.bf16.mxu0 0
        %3367 = vmatpush1.bf16.msra.mxu0 0
        %3368 = vmatprep.subr.bf16.mxu0 0
        %3369 = vmatpush1.bf16.msra.mxu0 0
        %3370 = vmatprep.mubr.bf16.mxu0 0
        %3371 = vmatmul.mubr.bf16.gmra.mrb[0].mxu0 %v3336
        %v3372 = vpop.f32.mrb[0].mxu0
        %v3373 = vadd.f32 %v3245, %v3372
        %v3374 = vpop.f32.mrb[0].mxu0
        %v3375 = vpop.f32.mrb[0].mxu0
        %v3376 = vpop.f32.mrb[0].mxu0
        %3377 = vmatprep.mubr.bf16.mxu0 0
        %3378 = vmatmul.mubr.bf16.gmra.mrb[0].mxu0 %v3187
        %v3379 = vpop.f32.mrb[0].mxu0
        %v3380 = vadd.f32 %v3252, %v3379
        %v3381 = vpop.f32.mrb[0].mxu0
        %v3382 = vpop.f32.mrb[0].mxu0
        %v3383 = vpop.f32.mrb[0].mxu0
        %3384 = vmatprep.mubr.bf16.mxu0 0
        %3385 = vmatmul.mubr.bf16.gmra.mrb[0].mxu0 %v3190
        %v3386 = vpop.f32.mrb[0].mxu0
        %v3387 = vadd.f32 %v3259, %v3386
        %v3388 = vpop.f32.mrb[0].mxu0
        %v3389 = vpop.f32.mrb[0].mxu0
        %v3390 = vpop.f32.mrb[0].mxu0
        %3391 = vmatprep.mubr.bf16.mxu0 0
        %3392 = vmatmul.mubr.bf16.gmra.mrb[0].mxu0 %v3193
        %v3393 = vpop.f32.mrb[0].mxu0
        %v3394 = vadd.f32 %v3266, %v3393
        %v3395 = vpop.f32.mrb[0].mxu0
        %v3396 = vpop.f32.mrb[0].mxu0
        %v3397 = vpop.f32.mrb[0].mxu0
        %3398 = vmatprep.mubr.bf16.mxu0 0
        %3399 = vmatmul.mubr.bf16.gmra.mrb[0].mxu0 %v3196
        %v3400 = vpop.f32.mrb[0].mxu0
        %v3401 = vadd.f32 %v3273, %v3400
        %v3402 = vpop.f32.mrb[0].mxu0
        %v3403 = vpop.f32.mrb[0].mxu0
        %v3404 = vpop.f32.mrb[0].mxu0
        %3405 = vmatprep.mubr.bf16.mxu0 0
        %3406 = vmatmul.mubr.bf16.gmra.mrb[0].mxu0 %v3199
        %v3407 = vpop.f32.mrb[0].mxu0
        %v3408 = vadd.f32 %v3280, %v3407
        %v3409 = vpop.f32.mrb[0].mxu0
        %v3410 = vpop.f32.mrb[0].mxu0
        %v3411 = vpop.f32.mrb[0].mxu0
        %3412 = vmatprep.mubr.bf16.mxu0 0
        %3413 = vmatmul.mubr.bf16.gmra.mrb[0].mxu0 %v3202
        %v3414 = vpop.f32.mrb[0].mxu0
        %v3415 = vadd.f32 %v3287, %v3414
        %v3416 = vpop.f32.mrb[0].mxu0
        %v3417 = vpop.f32.mrb[0].mxu0
        %v3418 = vpop.f32.mrb[0].mxu0
        %3419 = vmatprep.mubr.bf16.mxu0 0
        %3420 = vmatmul.mubr.bf16.gmra.mrb[0].mxu0 %v3205
        %v3421 = vpop.f32.mrb[0].mxu0
        %v3422 = vadd.f32 %v3294, %v3421
        %v3423 = vpop.f32.mrb[0].mxu0
        %v3424 = vpop.f32.mrb[0].mxu0
        %v3425 = vpop.f32.mrb[0].mxu0
        %3426 = vdwg.mxu0
        %v3427 = vld [vmem:[#allocation3 + $0x10] sm:$0xff]
        %v3428 = vld [vmem:[#allocation3 + $0x18] sm:$0xff]
        %v3429 = vld [vmem:[#allocation3 + $0x20] sm:$0xff]
        %v3430 = vld [vmem:[#allocation3 + $0x28] sm:$0xff]
        %v3431 = vld [vmem:[#allocation3 + $0x30] sm:$0xff]
        %v3432 = vld [vmem:[#allocation3 + $0x38] sm:$0xff]
        %v3433 = vld [vmem:[#allocation3 + $0x40] sm:$0xff]
        %v3434 = vld [vmem:[#allocation3 + $0x48] sm:$0xff]
        %s3435 = scalar_lea.vmem %s10, 96
        %v3436 = vld [vmem:[%s3435] sm:$0xf]
        %v3437 = vld [vmem:[%s3435 + $0x4] sm:$0xf]
        %v3438 = vld [vmem:[%s3435 + $0x8] sm:$0xf]
        %v3439 = vld [vmem:[%s3435 + $0xc] sm:$0xf]
        %v3440 = vld [vmem:[%s3435 + $0x10] sm:$0xf]
        %v3441 = vld [vmem:[%s3435 + $0x14] sm:$0xf]
        %v3442 = vld [vmem:[%s3435 + $0x18] sm:$0xf]
        %v3443 = vld [vmem:[%s3435 + $0x1c] sm:$0xf]
        %v3444 = vld [vmem:[%s3435 + $0x20] sm:$0xf]
        %v3445 = vld [vmem:[%s3435 + $0x24] sm:$0xf]
        %v3446 = vld [vmem:[%s3435 + $0x28] sm:$0xf]
        %v3447 = vld [vmem:[%s3435 + $0x2c] sm:$0xf]
        %v3460 = vunpack.c.l.b16 %v3436
        %v3461 = vunpack.c.l.b16 %v3437
        %v3462 = vunpack.c.l.b16 %v3438
        %v3463 = vunpack.c.l.b16 %v3439
        %v3464 = vunpack.c.l.b16 %v3440
        %v3465 = vunpack.c.l.b16 %v3441
        %v3466 = vunpack.c.l.b16 %v3442
        %v3467 = vunpack.c.l.b16 %v3443
        %v3468 = vunpack.c.l.b16 %v3444
        %v3469 = vunpack.c.l.b16 %v3445
        %v3470 = vunpack.c.l.b16 %v3446
        %v3471 = vunpack.c.l.b16 %v3447
        %v3472 = vpack.c.b16 %v3461, %v3460
        %v3473 = vpack.c.b16 %v3463, %v3462
        %v3474 = vpack.c.b16 %v3465, %v3464
        %v3475 = vpack.c.b16 %v3467, %v3466
        %v3476 = vpack.c.b16 %v3469, %v3468
        %v3477 = vpack.c.b16 %v3471, %v3470
        %v3485 = vsel %vm1650, %v3427, 0
        %v3488 = vsel %vm1650, %v3428, 0
        %v3491 = vsel %vm1650, %v3429, 0
        %v3494 = vsel %vm1650, %v3430, 0
        %v3497 = vsel %vm1650, %v3431, 0
        %v3500 = vsel %vm1650, %v3432, 0
        %v3503 = vsel %vm1650, %v3433, 0
        %v3506 = vsel %vm1650, %v3434, 0
        %3508 = vmatprep.subr.bf16.mxu0 0
        %3509 = vmatpush1.bf16.msra.mxu0 %v3472
        %3510 = vmatprep.subr.bf16.mxu0 0
        %3511 = vmatpush1.bf16.msra.mxu0 %v3473
        %3512 = vmatprep.subr.bf16.mxu0 0
        %3513 = vmatpush1.bf16.msra.mxu0 %v3474
        %3514 = vmatprep.subr.bf16.mxu0 0
        %3515 = vmatpush1.bf16.msra.mxu0 %v3475
        %3516 = vmatprep.subr.bf16.mxu0 0
        %3517 = vmatpush1.bf16.msra.mxu0 %v3476
        %3518 = vmatprep.subr.bf16.mxu0 0
        %3519 = vmatpush1.bf16.msra.mxu0 %v3477
        %3520 = vmatprep.subr.bf16.mxu0 0
        %3521 = vmatpush1.bf16.msra.mxu0 0
        %3522 = vmatprep.subr.bf16.mxu0 0
        %3523 = vmatpush1.bf16.msra.mxu0 0
        %3524 = vmatprep.subr.bf16.mxu0 0
        %3525 = vmatpush1.bf16.msra.mxu0 0
        %3526 = vmatprep.subr.bf16.mxu0 0
        %3527 = vmatpush1.bf16.msra.mxu0 0
        %3528 = vmatprep.subr.bf16.mxu0 0
        %3529 = vmatpush1.bf16.msra.mxu0 0
        %3530 = vmatprep.subr.bf16.mxu0 0
        %3531 = vmatpush1.bf16.msra.mxu0 0
        %3532 = vmatprep.subr.bf16.mxu0 0
        %3533 = vmatpush1.bf16.msra.mxu0 0
        %3534 = vmatprep.subr.bf16.mxu0 0
        %3535 = vmatpush1.bf16.msra.mxu0 0
        %3536 = vmatprep.subr.bf16.mxu0 0
        %3537 = vmatpush1.bf16.msra.mxu0 0
        %3538 = vmatprep.subr.bf16.mxu0 0
        %3539 = vmatpush1.bf16.msra.mxu0 0
        %3540 = vmatprep.mubr.bf16.mxu0 0
        %3541 = vmatmul.mubr.bf16.gmra.mrb[0].mxu0 %v3485
        %v3542 = vpop.f32.mrb[0].mxu0
        %v3543 = vadd.f32 0.0, %v3542
        %v3544 = vpop.f32.mrb[0].mxu0
        %v3545 = vpop.f32.mrb[0].mxu0
        %v3546 = vpop.f32.mrb[0].mxu0
        %3547 = vmatprep.mubr.bf16.mxu0 0
        %3548 = vmatmul.mubr.bf16.gmra.mrb[0].mxu0 %v3488
        %v3549 = vpop.f32.mrb[0].mxu0
        %v3550 = vadd.f32 0.0, %v3549
        %v3551 = vpop.f32.mrb[0].mxu0
        %v3552 = vpop.f32.mrb[0].mxu0
        %v3553 = vpop.f32.mrb[0].mxu0
        %3554 = vmatprep.mubr.bf16.mxu0 0
        %3555 = vmatmul.mubr.bf16.gmra.mrb[0].mxu0 %v3491
        %v3556 = vpop.f32.mrb[0].mxu0
        %v3557 = vadd.f32 0.0, %v3556
        %v3558 = vpop.f32.mrb[0].mxu0
        %v3559 = vpop.f32.mrb[0].mxu0
        %v3560 = vpop.f32.mrb[0].mxu0
        %3561 = vmatprep.mubr.bf16.mxu0 0
        %3562 = vmatmul.mubr.bf16.gmra.mrb[0].mxu0 %v3494
        %v3563 = vpop.f32.mrb[0].mxu0
        %v3564 = vadd.f32 0.0, %v3563
        %v3565 = vpop.f32.mrb[0].mxu0
        %v3566 = vpop.f32.mrb[0].mxu0
        %v3567 = vpop.f32.mrb[0].mxu0
        %3568 = vmatprep.mubr.bf16.mxu0 0
        %3569 = vmatmul.mubr.bf16.gmra.mrb[0].mxu0 %v3497
        %v3570 = vpop.f32.mrb[0].mxu0
        %v3571 = vadd.f32 0.0, %v3570
        %v3572 = vpop.f32.mrb[0].mxu0
        %v3573 = vpop.f32.mrb[0].mxu0
        %v3574 = vpop.f32.mrb[0].mxu0
        %3575 = vmatprep.mubr.bf16.mxu0 0
        %3576 = vmatmul.mubr.bf16.gmra.mrb[0].mxu0 %v3500
        %v3577 = vpop.f32.mrb[0].mxu0
        %v3578 = vadd.f32 0.0, %v3577
        %v3579 = vpop.f32.mrb[0].mxu0
        %v3580 = vpop.f32.mrb[0].mxu0
        %v3581 = vpop.f32.mrb[0].mxu0
        %3582 = vmatprep.mubr.bf16.mxu0 0
        %3583 = vmatmul.mubr.bf16.gmra.mrb[0].mxu0 %v3503
        %v3584 = vpop.f32.mrb[0].mxu0
        %v3585 = vadd.f32 0.0, %v3584
        %v3586 = vpop.f32.mrb[0].mxu0
        %v3587 = vpop.f32.mrb[0].mxu0
        %v3588 = vpop.f32.mrb[0].mxu0
        %3589 = vmatprep.mubr.bf16.mxu0 0
        %3590 = vmatmul.mubr.bf16.gmra.mrb[0].mxu0 %v3506
        %v3591 = vpop.f32.mrb[0].mxu0
        %v3592 = vadd.f32 0.0, %v3591
        %v3593 = vpop.f32.mrb[0].mxu0
        %v3594 = vpop.f32.mrb[0].mxu0
        %v3595 = vpop.f32.mrb[0].mxu0
        %3596 = vdwg.mxu0
        %v3597 = vadd.f32 %v3373, %v3543
        %v3598 = vadd.f32 %v3380, %v3550
        %v3599 = vadd.f32 %v3387, %v3557
        %v3600 = vadd.f32 %v3394, %v3564
        %v3601 = vadd.f32 %v3401, %v3571
        %v3602 = vadd.f32 %v3408, %v3578
        %v3603 = vadd.f32 %v3415, %v3585
        %v3604 = vadd.f32 %v3422, %v3592
        %v3605 = vld [vmem:[%s530 + $0x11] sm:$0xff]
        %v3606 = vld [vmem:[%s530 + $0x21] sm:$0xff]
        %v3607 = vld [vmem:[%s530 + $0x31] sm:$0xff]
        %v3608 = vld [vmem:[%s530 + $0x41] sm:$0xff]
        %v3609 = vld [vmem:[%s530 + $0x51] sm:$0xff]
        %v3610 = vld [vmem:[%s530 + $0x61] sm:$0xff]
        %v3611 = vld [vmem:[%s530 + $0x71] sm:$0xff]
        %v3612 = vld [vmem:[%s530 + $0x81] sm:$0xff]
        %v3613 = vadd.f32 %v3605, %v3597
        %v3614 = vadd.f32 %v3606, %v3598
        %v3615 = vadd.f32 %v3607, %v3599
        %v3616 = vadd.f32 %v3608, %v3600
        %v3617 = vadd.f32 %v3609, %v3601
        %v3618 = vadd.f32 %v3610, %v3602
        %v3619 = vadd.f32 %v3611, %v3603
        %v3620 = vadd.f32 %v3612, %v3604
        %v3621 = vld [vmem:[%s11] sm:$0x1]
        %v3623 = vlaneseq
        %v3624 = vshrl.u32 %v3623, 7
        %v3625 = vsub.s32 0, %v3624
        %v3626 = vrot.slane %v3621, %v3625
        %v3628 = vadd.f32 %v3613, %v3626
        %v3629 = vadd.f32 %v3614, %v3626
        %v3630 = vadd.f32 %v3615, %v3626
        %v3631 = vadd.f32 %v3616, %v3626
        %v3632 = vadd.f32 %v3617, %v3626
        %v3633 = vadd.f32 %v3618, %v3626
        %v3634 = vadd.f32 %v3619, %v3626
        %v3635 = vadd.f32 %v3620, %v3626
        %3636 = vst.msk [vmem:[%s525] sm:$0xff] %vm555, %v3628
        %3637 = vst.msk [vmem:[%s525 + $0x8] sm:$0xff] %vm555, %v3629
        %3638 = vst.msk [vmem:[%s525 + $0x10] sm:$0xff] %vm555, %v3630
        %3639 = vst.msk [vmem:[%s525 + $0x18] sm:$0xff] %vm555, %v3631
        %3640 = vst.msk [vmem:[%s525 + $0x20] sm:$0xff] %vm555, %v3632
        %3641 = vst.msk [vmem:[%s525 + $0x28] sm:$0xff] %vm555, %v3633
        %3642 = vst.msk [vmem:[%s525 + $0x30] sm:$0xff] %vm555, %v3634
        %3643 = vst.msk [vmem:[%s525 + $0x38] sm:$0xff] %vm555, %v3635
        %s3644 = sand.u32 %s384, 1
        %s3645 = scalar_lea.sflag [#allocation5], %s3644
        %s3646 = sand.u32 %s384, 1
        %s3647 = smul.addr %s3646, 64
        %s3648 = scalar_lea.vmem [#allocation4], %s3647
        // Predicated region
        $region85: #{resblock_forward_nhwc.1} parent=83 // pred_check
          %p3649 = pneg %p394
        $region86: #{resblock_forward_nhwc.1} parent=83 // pred_check_branch
          %3651 = sbr.rel (%p3649) target = $region88
        $region87: #{resblock_forward_nhwc.1} parent=83 // pred_region
          %s3653 = ssub.s32 1024, 1024
          %3654 = vsyncadd %s3645, %s3653
          %s3655 = smul.addr %s30, 8
          %s3656 = smul.addr %s3655, 128
          %s3657 = scalar_lea.hbm %s16, %s3656
          %s3658 = sshll.u32 %s3648, 4
          %s3659 = int_to_ptr.vmem [resolvable:$true] %s3658
          %3664 = dma.vmem_to_hbm [thread:$0]  %s3659, 1024, %s3657, %s3645, 128, 128, 8
        $region88: #{resblock_forward_nhwc.1} parent=83 // pred_fallthru
          _
      $region84: #{resblock_forward_nhwc.1} parent=5 // pred_fallthru
        _
      %p3665 = scmp.le.s32.totalorder 2, %s25
      // Predicated region
      $region89: #{resblock_forward_nhwc.1} parent=5 // pred_check
        %p3666 = pneg %p3665
      $region90: #{resblock_forward_nhwc.1} parent=5 // pred_check_branch
        %3668 = sbr.rel (%p3666) target = $region92
      $region91: #{resblock_forward_nhwc.1} parent=5 // pred_region
        %s3669 = ssub.s32 %s25, 2
        // Predicated region
        $region93: #{resblock_forward_nhwc.1} parent=91 // pred_check
          %p3670 = pneg %p400
        $region94: #{resblock_forward_nhwc.1} parent=91 // pred_check_branch
          %3672 = sbr.rel (%p3670) target = $region96
        $region95: #{resblock_forward_nhwc.1} parent=91 // pred_region
          %s3673 = sand.u32 %s385, 1
          %s3674 = scalar_lea.sflag [#allocation5], %s3673
          %s3675 = sand.u32 %s385, 1
          %s3676 = smul.addr %s3675, 64
          %s3677 = scalar_lea.vmem [#allocation4], %s3676
          %3678 = dma.done %s3674, 1024
        $region96: #{resblock_forward_nhwc.1} parent=91 // pred_fallthru
          _
      $region92: #{resblock_forward_nhwc.1} parent=5 // pred_fallthru
        _
    $region6: #{resblock_forward_nhwc.1} parent=1 // loop_footer
      %s29 = sadd.s32 1, %s25
    $region7: #{resblock_forward_nhwc.1} parent=1 // loop_footer_branch
      %24 = sbr.rel target = $region3
    $region8: #{resblock_forward_nhwc.1} parent=1 // loop_exit
      _
    %3679 = vsyncpa [#allocation5], 1
    %s3680 = scalar_lea.sflag [#allocation5], 1
    %3681 = vsyncpa %s3680, 1

</llo_original>
